<compile_context>
chip_gen: v7x
topology: tpu7x:2x2x1
jax: 0.10.0
libtpu: 0.0.40
codegen_flags: <defaults>
</compile_context>

<pallas_src>
import functools

import jax
import jax.numpy as jnp
from jax import lax
from jax.experimental import pallas as pl
from jax.experimental.pallas import tpu as pltpu


# ----------------------------- shared math ---------------------------------
def _gru_gates(gi, gh, h, hidden):
    """PyTorch nn.GRU cell given precomputed gi = x@W_ih+b_ih, gh = h@W_hh+b_hh."""
    i_r, i_z, i_n = gi[:, :hidden], gi[:, hidden:2 * hidden], gi[:, 2 * hidden:]
    h_r, h_z, h_n = gh[:, :hidden], gh[:, hidden:2 * hidden], gh[:, 2 * hidden:]
    r = jax.nn.sigmoid(i_r + h_r)
    z = jax.nn.sigmoid(i_z + h_z)
    n = jnp.tanh(i_n + r * h_n)
    return (1.0 - z) * n + z * h


def _gru_step(x, h, w_ih, w_hh, b_ih, b_hh, hidden):
    gi = jnp.dot(x, w_ih, preferred_element_type=jnp.float32) + b_ih
    gh = jnp.dot(h, w_hh, preferred_element_type=jnp.float32) + b_hh
    return _gru_gates(gi, gh, h, hidden)


# --------------------------- kernel-side helpers -----------------------------
def _softmax_rows(x):
    """Softmax over the feature (lane) axis; the divide runs on the EUP."""
    x = x - jnp.max(x, axis=1, keepdims=True)
    e = jnp.exp(x)
    s = jnp.sum(e, axis=1, keepdims=True)
    r = pl.reciprocal(s, approx=True)
    r = r * (2.0 - s * r)          # one Newton step -> full f32 accuracy
    return e * r


# ------------------------------- kernel ------------------------------------
def san_kernel(x1_ref, ask_kw_ref, ans_kw_ref,
               w_ih1_ref, w_hh1_ref, b_ih1_ref, b_hh1_ref,
               w_aw_ref, b_aw_ref, w_wm_ref,
               w_as_ref, b_as_ref, w_sm_ref,
               w_ih2_ref, w_hh2_ref, b_ih2_ref, b_hh2_ref,
               w_fn_ref, b_fn_ref,
               out_ref,
               ask_h_ref, ans_h_ref,
               *, B, S, E, H):
    BB = 2 * B       # fused ask+answer batch for GRU-1
    SB = S * B

    # ---- GRU-1: input projections for all timesteps in one batched matmul ----
    x1 = x1_ref[...]                                                    # (S*2B, E)
    gi1 = jnp.dot(x1, w_ih1_ref[...],
                  preferred_element_type=jnp.float32) + b_ih1_ref[...]  # (S*2B, 3H)
    w_hh1 = w_hh1_ref[...]
    b_hh1 = b_hh1_ref[...]

    # Fused ask/answer recurrence: only h@W_hh on the serial chain, fully unrolled.
    h1 = jnp.zeros((BB, H), jnp.float32)
    for t in range(S):
        gh = jnp.dot(h1, w_hh1, preferred_element_type=jnp.float32) + b_hh1
        h1 = _gru_gates(gi1[t * BB:(t + 1) * BB], gh, h1, H)
        ask_h_ref[pl.ds(t * B, B), :] = h1[:B]
        ans_h_ref[pl.ds(t * B, B), :] = h1[B:]

    ask_h = ask_h_ref[...]                                              # (S*B, H)
    ans_h = ans_h_ref[...]                                              # (S*B, H)
    ask_kw = ask_kw_ref[...]                                            # (S*B, E)
    ans_kw = ans_kw_ref[...]                                            # (S*B, E)

    # ---- attention, vectorized over all S timesteps at once ----
    # Row i = t*B + b.  msum[i, j] = 1 iff rows i and j share the same batch b,
    # so msum @ x yields Sum_t x[t, b] already broadcast over every timestep in
    # one small MXU op (the hoisted time-reduction: the score does not depend on
    # the summed timestep).
    ri = lax.broadcasted_iota(jnp.int32, (SB, SB), 0)
    ci = lax.broadcasted_iota(jnp.int32, (SB, SB), 1)
    msum = jnp.where((ri % B) == (ci % B), 1.0, 0.0).astype(jnp.float32)
    kw_sum = jnp.dot(msum, ask_kw, preferred_element_type=jnp.float32)  # (S*B, E)
    h_sum = jnp.dot(msum, ask_h, preferred_element_type=jnp.float32)    # (S*B, H)

    # word attention
    lin_w = jnp.dot(ask_kw, w_aw_ref[...],
                    preferred_element_type=jnp.float32) + b_aw_ref[...]
    wt_w = jnp.sum(lin_w * ans_kw, axis=1, keepdims=True)               # (S*B, 1)
    score_w = _softmax_rows(jnp.tanh(wt_w) * w_wm_ref[...])             # (S*B, E)
    ctx_w = kw_sum * score_w * ans_kw                                   # (S*B, E)

    # sequence attention (same structure on the GRU-1 hidden states)
    lin_s = jnp.dot(ask_h, w_as_ref[...],
                    preferred_element_type=jnp.float32) + b_as_ref[...]
    wt_s = jnp.sum(lin_s * ans_h, axis=1, keepdims=True)
    score_s = _softmax_rows(jnp.tanh(wt_s) * w_sm_ref[...])             # (S*B, H)
    ctx_s = h_sum * score_s * ans_h                                     # (S*B, H)

    v = jnp.concatenate([ctx_w, ctx_s], axis=-1)                        # (S*B, E+H)

    # ---- GRU-2: batched input projection, unrolled recurrence, keep final h ----
    gi2 = jnp.dot(v, w_ih2_ref[...],
                  preferred_element_type=jnp.float32) + b_ih2_ref[...]  # (S*B, 3H)
    w_hh2 = w_hh2_ref[...]
    b_hh2 = b_hh2_ref[...]
    h2 = jnp.zeros((B, H), jnp.float32)
    for t in range(S):
        gh = jnp.dot(h2, w_hh2, preferred_element_type=jnp.float32) + b_hh2
        h2 = _gru_gates(gi2[t * B:(t + 1) * B], gh, h2, H)

    # ---- final linear + softmax (dropout == identity in eval mode) ----
    # TODO(synk): train-mode dropout (inverted mask) not implemented; eval semantics only.
    logits = jnp.dot(h2, w_fn_ref[...],
                     preferred_element_type=jnp.float32) + b_fn_ref[...]
    out_ref[...] = _softmax_rows(logits)


# ------------------------------- wrapper ------------------------------------
def san_forward(params, ask, answer, ask_kw, answer_kw, H):
    emb = params["embed"]
    B, S = ask.shape
    E = emb.shape[1]
    O = params["w_fn"].shape[1]

    def embed_tm(tok):  # (B,S) int -> (S,B,E) time-major f32
        return jnp.transpose(jnp.take(emb, tok, axis=0), (1, 0, 2)).astype(jnp.float32)

    # Stack ask/answer on the batch axis so one fused GRU-1 recurrence handles
    # both, and flatten (S, batch) -> rows so all in-kernel matmuls are plain 2-D
    # (row index = t*B + b).
    x1 = jnp.concatenate([embed_tm(ask), embed_tm(answer)], axis=1)     # (S, 2B, E)
    x1_f = x1.reshape(S * 2 * B, E)
    ask_kw_f = embed_tm(ask_kw).reshape(S * B, E)
    ans_kw_f = embed_tm(answer_kw).reshape(S * B, E)

    inputs = (x1_f, ask_kw_f, ans_kw_f,
              params["w_ih1"], params["w_hh1"], params["b_ih1"], params["b_hh1"],
              params["w_aw"], params["b_aw"], params["w_wm"],
              params["w_as"], params["b_as"], params["w_sm"],
              params["w_ih2"], params["w_hh2"], params["b_ih2"], params["b_hh2"],
              params["w_fn"], params["b_fn"])

    # Explicit VMEM budget sized to the resident footprint (with headroom),
    # capped well below the smallest physical VMEM (v7x: 64 MiB).
    footprint = sum(int(a.size) * a.dtype.itemsize for a in inputs)
    footprint += 2 * S * B * H * 4 + B * O * 4            # scratch + output
    vmem_limit = int(min(max(8 * footprint, 16 << 20), 48 << 20))

    kernel = functools.partial(san_kernel, B=B, S=S, E=E, H=H)
    return pl.pallas_call(
        kernel,
        out_shape=jax.ShapeDtypeStruct((B, O), jnp.float32),
        in_specs=[pl.BlockSpec(memory_space=pltpu.MemorySpace.VMEM)] * len(inputs),
        out_specs=pl.BlockSpec(memory_space=pltpu.MemorySpace.VMEM),
        scratch_shapes=[pltpu.VMEM((S * B, H), jnp.float32),   # ask GRU-1 hiddens (flat)
                        pltpu.VMEM((S * B, H), jnp.float32)],  # answer GRU-1 hiddens (flat)
        compiler_params=pltpu.CompilerParams(vmem_limit_bytes=vmem_limit),
    )(*inputs)


# ---------------------------- pure-JAX reference ----------------------------
def san_reference(params, ask, answer, ask_kw, answer_kw, H):
    emb = params["embed"]
    B, S = ask.shape
    ask_e = jnp.take(emb, ask, axis=0)
    ans_e = jnp.take(emb, answer, axis=0)
    ask_ke = jnp.take(emb, ask_kw, axis=0)
    ans_ke = jnp.take(emb, answer_kw, axis=0)

    def run_gru(x, w_ih, w_hh, b_ih, b_hh):
        def step(h, xt):
            h_new = _gru_step(xt, h, w_ih, w_hh, b_ih, b_hh, H)
            return h_new, h_new
        hT, hs = lax.scan(step, jnp.zeros((B, H), jnp.float32),
                          jnp.transpose(x, (1, 0, 2)))
        return jnp.transpose(hs, (1, 0, 2)), hT

    ask_out, _ = run_gru(ask_e, params["w_ih1"], params["w_hh1"],
                         params["b_ih1"], params["b_hh1"])
    ans_out, _ = run_gru(ans_e, params["w_ih1"], params["w_hh1"],
                         params["b_ih1"], params["b_hh1"])

    vs = []
    for t in range(S):
        u_w, r_w = ask_ke[:, t, :], ans_ke[:, t, :]
        u_s, r_s = ask_out[:, t, :], ans_out[:, t, :]
        lin_w = u_w @ params["w_aw"] + params["b_aw"]
        wt_w = jnp.sum(lin_w * r_w, axis=1, keepdims=True)
        sc_w = jax.nn.softmax(jnp.tanh(wt_w) * params["w_wm"], axis=1)
        ctx_w = jnp.sum(ask_ke * sc_w[:, None, :], axis=1) * r_w
        lin_s = u_s @ params["w_as"] + params["b_as"]
        wt_s = jnp.sum(lin_s * r_s, axis=1, keepdims=True)
        sc_s = jax.nn.softmax(jnp.tanh(wt_s) * params["w_sm"], axis=1)
        ctx_s = jnp.sum(ask_out * sc_s[:, None, :], axis=1) * r_s
        vs.append(jnp.concatenate([ctx_w, ctx_s], axis=-1)[:, None, :])
    v = jnp.concatenate(vs, axis=1)

    _, h2 = run_gru(v, params["w_ih2"], params["w_hh2"],
                    params["b_ih2"], params["b_hh2"])
    logits = h2 @ params["w_fn"] + params["b_fn"]
    return jax.nn.softmax(logits, axis=1)


# ------------------------------- params init --------------------------------
def init_params(key, V, E, H, O):
    ks = jax.random.split(key, 17)

    def u(k, shape, fan_in):
        bound = 1.0 / (fan_in ** 0.5)
        return jax.random.uniform(k, shape, jnp.float32, -bound, bound)

    return {
        "embed": jax.random.normal(ks[0], (V, E), jnp.float32),
        # GRU-1 (weights stored pre-transposed: (in, 3H))
        "w_ih1": u(ks[1], (E, 3 * H), H), "w_hh1": u(ks[2], (H, 3 * H), H),
        "b_ih1": u(ks[3], (1, 3 * H), H), "b_hh1": u(ks[4], (1, 3 * H), H),
        # word attention
        "w_aw": u(ks[5], (E, E), E), "b_aw": u(ks[6], (1, E), E),
        "w_wm": u(ks[7], (1, E), 1),
        # sequence attention
        "w_as": u(ks[8], (H, H), H), "b_as": u(ks[9], (1, H), H),
        "w_sm": u(ks[10], (1, H), 1),
        # GRU-2
        "w_ih2": u(ks[11], (E + H, 3 * H), H), "w_hh2": u(ks[12], (H, 3 * H), H),
        "b_ih2": u(ks[13], (1, 3 * H), H), "b_hh2": u(ks[14], (1, 3 * H), H),
        # final classifier
        "w_fn": u(ks[15], (H, O), H), "b_fn": u(ks[16], (1, O), H),
    }


# --------------------------------- main --------------------------------------
if __name__ == "__main__":
    B, S, E, H, V, O = 2, 8, 32, 32, 50, 2
    key = jax.random.PRNGKey(0)
    pkey, k1, k2, k3, k4 = jax.random.split(key, 5)
    params = init_params(pkey, V, E, H, O)

    ask = jax.random.randint(k1, (B, S), 0, V, dtype=jnp.int32)
    answer = jax.random.randint(k2, (B, S), 0, V, dtype=jnp.int32)
    ask_keyword = jax.random.randint(k3, (B, S), 0, V, dtype=jnp.int32)
    answer_keyword = jax.random.randint(k4, (B, S), 0, V, dtype=jnp.int32)

    out = san_forward(params, ask, answer, ask_keyword, answer_keyword, H)
    out = jax.block_until_ready(out)

    ref = san_reference(params, ask, answer, ask_keyword, answer_keyword, H)
    assert out.shape == (B, O)
    assert jnp.allclose(jnp.sum(out, axis=1), 1.0, atol=1e-5)
    assert jnp.allclose(out, ref, atol=1e-4, rtol=1e-4)

    print("KERNEL_OK")
</pallas_src>

<mosaic_0001>
module attributes {stable_mosaic.version = 11 : i64} {
  func.func @san_kernel(%arg0: memref<32x32xf32, #tpu.memory_space<vmem>>, %arg1: memref<16x32xf32, #tpu.memory_space<vmem>>, %arg2: memref<16x32xf32, #tpu.memory_space<vmem>>, %arg3: memref<32x96xf32, #tpu.memory_space<vmem>>, %arg4: memref<32x96xf32, #tpu.memory_space<vmem>>, %arg5: memref<1x96xf32, #tpu.memory_space<vmem>>, %arg6: memref<1x96xf32, #tpu.memory_space<vmem>>, %arg7: memref<32x32xf32, #tpu.memory_space<vmem>>, %arg8: memref<1x32xf32, #tpu.memory_space<vmem>>, %arg9: memref<1x32xf32, #tpu.memory_space<vmem>>, %arg10: memref<32x32xf32, #tpu.memory_space<vmem>>, %arg11: memref<1x32xf32, #tpu.memory_space<vmem>>, %arg12: memref<1x32xf32, #tpu.memory_space<vmem>>, %arg13: memref<64x96xf32, #tpu.memory_space<vmem>>, %arg14: memref<32x96xf32, #tpu.memory_space<vmem>>, %arg15: memref<1x96xf32, #tpu.memory_space<vmem>>, %arg16: memref<1x96xf32, #tpu.memory_space<vmem>>, %arg17: memref<32x2xf32, #tpu.memory_space<vmem>>, %arg18: memref<1x2xf32, #tpu.memory_space<vmem>>, %arg19: memref<2x2xf32, #tpu.memory_space<vmem>>, %arg20: memref<16x32xf32, #tpu.memory_space<vmem>>, %arg21: memref<16x32xf32, #tpu.memory_space<vmem>>) attributes {dimension_semantics = [], scalar_prefetch = 0 : i64, scratch_operands = 2 : i64, tpu.core_type = #tpu.core_type<tc>} {
    %c0 = arith.constant 0 : index
    %c0_0 = arith.constant 0 : index
    %0 = vector.load %arg0[%c0, %c0_0] : memref<32x32xf32, #tpu.memory_space<vmem>>, vector<32x32xf32>
    %c0_1 = arith.constant 0 : index
    %c0_2 = arith.constant 0 : index
    %1 = vector.load %arg3[%c0_1, %c0_2] : memref<32x96xf32, #tpu.memory_space<vmem>>, vector<32x96xf32>
    %cst = arith.constant dense<0.000000e+00> : vector<32x96xf32>
    %2 = tpu.matmul %0, %1, %cst {dimension_numbers = #tpu.dot_dimension_numbers<[1], [0], [0], [1], [0, 0, 1, 1], [], []>} : vector<32x32xf32>, vector<32x96xf32>, vector<32x96xf32> -> vector<32x96xf32>
    %c0_3 = arith.constant 0 : index
    %c0_4 = arith.constant 0 : index
    %3 = vector.load %arg5[%c0_3, %c0_4] : memref<1x96xf32, #tpu.memory_space<vmem>>, vector<1x96xf32>
    %4 = vector.broadcast %3 : vector<1x96xf32> to vector<32x96xf32>
    %5 = arith.addf %2, %4 : vector<32x96xf32>
    %c0_5 = arith.constant 0 : index
    %c0_6 = arith.constant 0 : index
    %6 = vector.load %arg4[%c0_5, %c0_6] : memref<32x96xf32, #tpu.memory_space<vmem>>, vector<32x96xf32>
    %c0_7 = arith.constant 0 : index
    %c0_8 = arith.constant 0 : index
    %7 = vector.load %arg6[%c0_7, %c0_8] : memref<1x96xf32, #tpu.memory_space<vmem>>, vector<1x96xf32>
    %cst_9 = arith.constant 0.000000e+00 : f32
    %8 = vector.broadcast %cst_9 : f32 to vector<4x32xf32>
    %cst_10 = arith.constant dense<0.000000e+00> : vector<4x96xf32>
    %9 = tpu.matmul %8, %6, %cst_10 {dimension_numbers = #tpu.dot_dimension_numbers<[1], [0], [0], [1], [0, 0, 1, 1], [], []>} : vector<4x32xf32>, vector<32x96xf32>, vector<4x96xf32> -> vector<4x96xf32>
    %10 = vector.broadcast %7 : vector<1x96xf32> to vector<4x96xf32>
    %11 = arith.addf %9, %10 : vector<4x96xf32>
    %12 = vector.extract_strided_slice %5 {offsets = [0, 0], sizes = [4, 96], strides = [1, 1]} : vector<32x96xf32> to vector<4x96xf32>
    %13 = vector.extract_strided_slice %12 {offsets = [0, 0], sizes = [4, 32], strides = [1, 1]} : vector<4x96xf32> to vector<4x32xf32>
    %14 = vector.extract_strided_slice %12 {offsets = [0, 32], sizes = [4, 32], strides = [1, 1]} : vector<4x96xf32> to vector<4x32xf32>
    %15 = vector.extract_strided_slice %12 {offsets = [0, 64], sizes = [4, 32], strides = [1, 1]} : vector<4x96xf32> to vector<4x32xf32>
    %16 = vector.extract_strided_slice %11 {offsets = [0, 0], sizes = [4, 32], strides = [1, 1]} : vector<4x96xf32> to vector<4x32xf32>
    %17 = vector.extract_strided_slice %11 {offsets = [0, 32], sizes = [4, 32], strides = [1, 1]} : vector<4x96xf32> to vector<4x32xf32>
    %18 = vector.extract_strided_slice %11 {offsets = [0, 64], sizes = [4, 32], strides = [1, 1]} : vector<4x96xf32> to vector<4x32xf32>
    %19 = arith.addf %13, %16 : vector<4x32xf32>
    %20 = arith.negf %19 : vector<4x32xf32>
    %21 = math.exp %20 : vector<4x32xf32>
    %cst_11 = arith.constant 1.000000e+00 : f32
    %22 = vector.broadcast %cst_11 : f32 to vector<4x32xf32>
    %23 = arith.addf %22, %21 : vector<4x32xf32>
    %24 = arith.divf %22, %23 : vector<4x32xf32>
    %25 = arith.addf %14, %17 : vector<4x32xf32>
    %26 = arith.negf %25 : vector<4x32xf32>
    %27 = math.exp %26 : vector<4x32xf32>
    %cst_12 = arith.constant 1.000000e+00 : f32
    %28 = vector.broadcast %cst_12 : f32 to vector<4x32xf32>
    %29 = arith.addf %28, %27 : vector<4x32xf32>
    %30 = arith.divf %28, %29 : vector<4x32xf32>
    %31 = arith.mulf %24, %18 : vector<4x32xf32>
    %32 = arith.addf %15, %31 : vector<4x32xf32>
    %33 = math.tanh %32 : vector<4x32xf32>
    %cst_13 = arith.constant 1.000000e+00 : f32
    %34 = vector.broadcast %cst_13 : f32 to vector<4x32xf32>
    %35 = arith.subf %34, %30 : vector<4x32xf32>
    %36 = arith.mulf %35, %33 : vector<4x32xf32>
    %37 = arith.mulf %30, %8 : vector<4x32xf32>
    %38 = arith.addf %36, %37 : vector<4x32xf32>
    %39 = vector.extract_strided_slice %38 {offsets = [0, 0], sizes = [2, 32], strides = [1, 1]} : vector<4x32xf32> to vector<2x32xf32>
    %c0_14 = arith.constant 0 : index
    %c0_15 = arith.constant 0 : index
    %40 = vector.load %arg20[%c0_14, %c0_15] : memref<16x32xf32, #tpu.memory_space<vmem>>, vector<2x32xf32>
    tpu.vector_store %arg20[%c0_14, %c0_15], %39 {strides = array<i32>} : memref<16x32xf32, #tpu.memory_space<vmem>>, vector<2x32xf32>,
    %41 = vector.extract_strided_slice %38 {offsets = [2, 0], sizes = [2, 32], strides = [1, 1]} : vector<4x32xf32> to vector<2x32xf32>
    %c0_16 = arith.constant 0 : index
    %c0_17 = arith.constant 0 : index
    %42 = vector.load %arg21[%c0_16, %c0_17] : memref<16x32xf32, #tpu.memory_space<vmem>>, vector<2x32xf32>
    tpu.vector_store %arg21[%c0_16, %c0_17], %41 {strides = array<i32>} : memref<16x32xf32, #tpu.memory_space<vmem>>, vector<2x32xf32>,
    %cst_18 = arith.constant dense<0.000000e+00> : vector<4x96xf32>
    %43 = tpu.matmul %38, %6, %cst_18 {dimension_numbers = #tpu.dot_dimension_numbers<[1], [0], [0], [1], [0, 0, 1, 1], [], []>} : vector<4x32xf32>, vector<32x96xf32>, vector<4x96xf32> -> vector<4x96xf32>
    %44 = vector.broadcast %7 : vector<1x96xf32> to vector<4x96xf32>
    %45 = arith.addf %43, %44 : vector<4x96xf32>
    %46 = vector.extract_strided_slice %5 {offsets = [4, 0], sizes = [4, 96], strides = [1, 1]} : vector<32x96xf32> to vector<4x96xf32>
    %47 = vector.extract_strided_slice %46 {offsets = [0, 0], sizes = [4, 32], strides = [1, 1]} : vector<4x96xf32> to vector<4x32xf32>
    %48 = vector.extract_strided_slice %46 {offsets = [0, 32], sizes = [4, 32], strides = [1, 1]} : vector<4x96xf32> to vector<4x32xf32>
    %49 = vector.extract_strided_slice %46 {offsets = [0, 64], sizes = [4, 32], strides = [1, 1]} : vector<4x96xf32> to vector<4x32xf32>
    %50 = vector.extract_strided_slice %45 {offsets = [0, 0], sizes = [4, 32], strides = [1, 1]} : vector<4x96xf32> to vector<4x32xf32>
    %51 = vector.extract_strided_slice %45 {offsets = [0, 32], sizes = [4, 32], strides = [1, 1]} : vector<4x96xf32> to vector<4x32xf32>
    %52 = vector.extract_strided_slice %45 {offsets = [0, 64], sizes = [4, 32], strides = [1, 1]} : vector<4x96xf32> to vector<4x32xf32>
    %53 = arith.addf %47, %50 : vector<4x32xf32>
    %54 = arith.negf %53 : vector<4x32xf32>
    %55 = math.exp %54 : vector<4x32xf32>
    %cst_19 = arith.constant 1.000000e+00 : f32
    %56 = vector.broadcast %cst_19 : f32 to vector<4x32xf32>
    %57 = arith.addf %56, %55 : vector<4x32xf32>
    %58 = arith.divf %56, %57 : vector<4x32xf32>
    %59 = arith.addf %48, %51 : vector<4x32xf32>
    %60 = arith.negf %59 : vector<4x32xf32>
    %61 = math.exp %60 : vector<4x32xf32>
    %cst_20 = arith.constant 1.000000e+00 : f32
    %62 = vector.broadcast %cst_20 : f32 to vector<4x32xf32>
    %63 = arith.addf %62, %61 : vector<4x32xf32>
    %64 = arith.divf %62, %63 : vector<4x32xf32>
    %65 = arith.mulf %58, %52 : vector<4x32xf32>
    %66 = arith.addf %49, %65 : vector<4x32xf32>
    %67 = math.tanh %66 : vector<4x32xf32>
    %cst_21 = arith.constant 1.000000e+00 : f32
    %68 = vector.broadcast %cst_21 : f32 to vector<4x32xf32>
    %69 = arith.subf %68, %64 : vector<4x32xf32>
    %70 = arith.mulf %69, %67 : vector<4x32xf32>
    %71 = arith.mulf %64, %38 : vector<4x32xf32>
    %72 = arith.addf %70, %71 : vector<4x32xf32>
    %73 = vector.extract_strided_slice %72 {offsets = [0, 0], sizes = [2, 32], strides = [1, 1]} : vector<4x32xf32> to vector<2x32xf32>
    %c2 = arith.constant 2 : index
    %c0_22 = arith.constant 0 : index
    %74 = vector.load %arg20[%c2, %c0_22] : memref<16x32xf32, #tpu.memory_space<vmem>>, vector<2x32xf32>
    tpu.vector_store %arg20[%c2, %c0_22], %73 {strides = array<i32>} : memref<16x32xf32, #tpu.memory_space<vmem>>, vector<2x32xf32>,
    %75 = vector.extract_strided_slice %72 {offsets = [2, 0], sizes = [2, 32], strides = [1, 1]} : vector<4x32xf32> to vector<2x32xf32>
    %c2_23 = arith.constant 2 : index
    %c0_24 = arith.constant 0 : index
    %76 = vector.load %arg21[%c2_23, %c0_24] : memref<16x32xf32, #tpu.memory_space<vmem>>, vector<2x32xf32>
    tpu.vector_store %arg21[%c2_23, %c0_24], %75 {strides = array<i32>} : memref<16x32xf32, #tpu.memory_space<vmem>>, vector<2x32xf32>,
    %cst_25 = arith.constant dense<0.000000e+00> : vector<4x96xf32>
    %77 = tpu.matmul %72, %6, %cst_25 {dimension_numbers = #tpu.dot_dimension_numbers<[1], [0], [0], [1], [0, 0, 1, 1], [], []>} : vector<4x32xf32>, vector<32x96xf32>, vector<4x96xf32> -> vector<4x96xf32>
    %78 = vector.broadcast %7 : vector<1x96xf32> to vector<4x96xf32>
    %79 = arith.addf %77, %78 : vector<4x96xf32>
    %80 = vector.extract_strided_slice %5 {offsets = [8, 0], sizes = [4, 96], strides = [1, 1]} : vector<32x96xf32> to vector<4x96xf32>
    %81 = vector.extract_strided_slice %80 {offsets = [0, 0], sizes = [4, 32], strides = [1, 1]} : vector<4x96xf32> to vector<4x32xf32>
    %82 = vector.extract_strided_slice %80 {offsets = [0, 32], sizes = [4, 32], strides = [1, 1]} : vector<4x96xf32> to vector<4x32xf32>
    %83 = vector.extract_strided_slice %80 {offsets = [0, 64], sizes = [4, 32], strides = [1, 1]} : vector<4x96xf32> to vector<4x32xf32>
    %84 = vector.extract_strided_slice %79 {offsets = [0, 0], sizes = [4, 32], strides = [1, 1]} : vector<4x96xf32> to vector<4x32xf32>
    %85 = vector.extract_strided_slice %79 {offsets = [0, 32], sizes = [4, 32], strides = [1, 1]} : vector<4x96xf32> to vector<4x32xf32>
    %86 = vector.extract_strided_slice %79 {offsets = [0, 64], sizes = [4, 32], strides = [1, 1]} : vector<4x96xf32> to vector<4x32xf32>
    %87 = arith.addf %81, %84 : vector<4x32xf32>
    %88 = arith.negf %87 : vector<4x32xf32>
    %89 = math.exp %88 : vector<4x32xf32>
    %cst_26 = arith.constant 1.000000e+00 : f32
    %90 = vector.broadcast %cst_26 : f32 to vector<4x32xf32>
    %91 = arith.addf %90, %89 : vector<4x32xf32>
    %92 = arith.divf %90, %91 : vector<4x32xf32>
    %93 = arith.addf %82, %85 : vector<4x32xf32>
    %94 = arith.negf %93 : vector<4x32xf32>
    %95 = math.exp %94 : vector<4x32xf32>
    %cst_27 = arith.constant 1.000000e+00 : f32
    %96 = vector.broadcast %cst_27 : f32 to vector<4x32xf32>
    %97 = arith.addf %96, %95 : vector<4x32xf32>
    %98 = arith.divf %96, %97 : vector<4x32xf32>
    %99 = arith.mulf %92, %86 : vector<4x32xf32>
    %100 = arith.addf %83, %99 : vector<4x32xf32>
    %101 = math.tanh %100 : vector<4x32xf32>
    %cst_28 = arith.constant 1.000000e+00 : f32
    %102 = vector.broadcast %cst_28 : f32 to vector<4x32xf32>
    %103 = arith.subf %102, %98 : vector<4x32xf32>
    %104 = arith.mulf %103, %101 : vector<4x32xf32>
    %105 = arith.mulf %98, %72 : vector<4x32xf32>
    %106 = arith.addf %104, %105 : vector<4x32xf32>
    %107 = vector.extract_strided_slice %106 {offsets = [0, 0], sizes = [2, 32], strides = [1, 1]} : vector<4x32xf32> to vector<2x32xf32>
    %c4 = arith.constant 4 : index
    %c0_29 = arith.constant 0 : index
    %108 = vector.load %arg20[%c4, %c0_29] : memref<16x32xf32, #tpu.memory_space<vmem>>, vector<2x32xf32>
    tpu.vector_store %arg20[%c4, %c0_29], %107 {strides = array<i32>} : memref<16x32xf32, #tpu.memory_space<vmem>>, vector<2x32xf32>,
    %109 = vector.extract_strided_slice %106 {offsets = [2, 0], sizes = [2, 32], strides = [1, 1]} : vector<4x32xf32> to vector<2x32xf32>
    %c4_30 = arith.constant 4 : index
    %c0_31 = arith.constant 0 : index
    %110 = vector.load %arg21[%c4_30, %c0_31] : memref<16x32xf32, #tpu.memory_space<vmem>>, vector<2x32xf32>
    tpu.vector_store %arg21[%c4_30, %c0_31], %109 {strides = array<i32>} : memref<16x32xf32, #tpu.memory_space<vmem>>, vector<2x32xf32>,
    %cst_32 = arith.constant dense<0.000000e+00> : vector<4x96xf32>
    %111 = tpu.matmul %106, %6, %cst_32 {dimension_numbers = #tpu.dot_dimension_numbers<[1], [0], [0], [1], [0, 0, 1, 1], [], []>} : vector<4x32xf32>, vector<32x96xf32>, vector<4x96xf32> -> vector<4x96xf32>
    %112 = vector.broadcast %7 : vector<1x96xf32> to vector<4x96xf32>
    %113 = arith.addf %111, %112 : vector<4x96xf32>
    %114 = vector.extract_strided_slice %5 {offsets = [12, 0], sizes = [4, 96], strides = [1, 1]} : vector<32x96xf32> to vector<4x96xf32>
    %115 = vector.extract_strided_slice %114 {offsets = [0, 0], sizes = [4, 32], strides = [1, 1]} : vector<4x96xf32> to vector<4x32xf32>
    %116 = vector.extract_strided_slice %114 {offsets = [0, 32], sizes = [4, 32], strides = [1, 1]} : vector<4x96xf32> to vector<4x32xf32>
    %117 = vector.extract_strided_slice %114 {offsets = [0, 64], sizes = [4, 32], strides = [1, 1]} : vector<4x96xf32> to vector<4x32xf32>
    %118 = vector.extract_strided_slice %113 {offsets = [0, 0], sizes = [4, 32], strides = [1, 1]} : vector<4x96xf32> to vector<4x32xf32>
    %119 = vector.extract_strided_slice %113 {offsets = [0, 32], sizes = [4, 32], strides = [1, 1]} : vector<4x96xf32> to vector<4x32xf32>
    %120 = vector.extract_strided_slice %113 {offsets = [0, 64], sizes = [4, 32], strides = [1, 1]} : vector<4x96xf32> to vector<4x32xf32>
    %121 = arith.addf %115, %118 : vector<4x32xf32>
    %122 = arith.negf %121 : vector<4x32xf32>
    %123 = math.exp %122 : vector<4x32xf32>
    %cst_33 = arith.constant 1.000000e+00 : f32
    %124 = vector.broadcast %cst_33 : f32 to vector<4x32xf32>
    %125 = arith.addf %124, %123 : vector<4x32xf32>
    %126 = arith.divf %124, %125 : vector<4x32xf32>
    %127 = arith.addf %116, %119 : vector<4x32xf32>
    %128 = arith.negf %127 : vector<4x32xf32>
    %129 = math.exp %128 : vector<4x32xf32>
    %cst_34 = arith.constant 1.000000e+00 : f32
    %130 = vector.broadcast %cst_34 : f32 to vector<4x32xf32>
    %131 = arith.addf %130, %129 : vector<4x32xf32>
    %132 = arith.divf %130, %131 : vector<4x32xf32>
    %133 = arith.mulf %126, %120 : vector<4x32xf32>
    %134 = arith.addf %117, %133 : vector<4x32xf32>
    %135 = math.tanh %134 : vector<4x32xf32>
    %cst_35 = arith.constant 1.000000e+00 : f32
    %136 = vector.broadcast %cst_35 : f32 to vector<4x32xf32>
    %137 = arith.subf %136, %132 : vector<4x32xf32>
    %138 = arith.mulf %137, %135 : vector<4x32xf32>
    %139 = arith.mulf %132, %106 : vector<4x32xf32>
    %140 = arith.addf %138, %139 : vector<4x32xf32>
    %141 = vector.extract_strided_slice %140 {offsets = [0, 0], sizes = [2, 32], strides = [1, 1]} : vector<4x32xf32> to vector<2x32xf32>
    %c6 = arith.constant 6 : index
    %c0_36 = arith.constant 0 : index
    %142 = vector.load %arg20[%c6, %c0_36] : memref<16x32xf32, #tpu.memory_space<vmem>>, vector<2x32xf32>
    tpu.vector_store %arg20[%c6, %c0_36], %141 {strides = array<i32>} : memref<16x32xf32, #tpu.memory_space<vmem>>, vector<2x32xf32>,
    %143 = vector.extract_strided_slice %140 {offsets = [2, 0], sizes = [2, 32], strides = [1, 1]} : vector<4x32xf32> to vector<2x32xf32>
    %c6_37 = arith.constant 6 : index
    %c0_38 = arith.constant 0 : index
    %144 = vector.load %arg21[%c6_37, %c0_38] : memref<16x32xf32, #tpu.memory_space<vmem>>, vector<2x32xf32>
    tpu.vector_store %arg21[%c6_37, %c0_38], %143 {strides = array<i32>} : memref<16x32xf32, #tpu.memory_space<vmem>>, vector<2x32xf32>,
    %cst_39 = arith.constant dense<0.000000e+00> : vector<4x96xf32>
    %145 = tpu.matmul %140, %6, %cst_39 {dimension_numbers = #tpu.dot_dimension_numbers<[1], [0], [0], [1], [0, 0, 1, 1], [], []>} : vector<4x32xf32>, vector<32x96xf32>, vector<4x96xf32> -> vector<4x96xf32>
    %146 = vector.broadcast %7 : vector<1x96xf32> to vector<4x96xf32>
    %147 = arith.addf %145, %146 : vector<4x96xf32>
    %148 = vector.extract_strided_slice %5 {offsets = [16, 0], sizes = [4, 96], strides = [1, 1]} : vector<32x96xf32> to vector<4x96xf32>
    %149 = vector.extract_strided_slice %148 {offsets = [0, 0], sizes = [4, 32], strides = [1, 1]} : vector<4x96xf32> to vector<4x32xf32>
    %150 = vector.extract_strided_slice %148 {offsets = [0, 32], sizes = [4, 32], strides = [1, 1]} : vector<4x96xf32> to vector<4x32xf32>
    %151 = vector.extract_strided_slice %148 {offsets = [0, 64], sizes = [4, 32], strides = [1, 1]} : vector<4x96xf32> to vector<4x32xf32>
    %152 = vector.extract_strided_slice %147 {offsets = [0, 0], sizes = [4, 32], strides = [1, 1]} : vector<4x96xf32> to vector<4x32xf32>
    %153 = vector.extract_strided_slice %147 {offsets = [0, 32], sizes = [4, 32], strides = [1, 1]} : vector<4x96xf32> to vector<4x32xf32>
    %154 = vector.extract_strided_slice %147 {offsets = [0, 64], sizes = [4, 32], strides = [1, 1]} : vector<4x96xf32> to vector<4x32xf32>
    %155 = arith.addf %149, %152 : vector<4x32xf32>
    %156 = arith.negf %155 : vector<4x32xf32>
    %157 = math.exp %156 : vector<4x32xf32>
    %cst_40 = arith.constant 1.000000e+00 : f32
    %158 = vector.broadcast %cst_40 : f32 to vector<4x32xf32>
    %159 = arith.addf %158, %157 : vector<4x32xf32>
    %160 = arith.divf %158, %159 : vector<4x32xf32>
    %161 = arith.addf %150, %153 : vector<4x32xf32>
    %162 = arith.negf %161 : vector<4x32xf32>
    %163 = math.exp %162 : vector<4x32xf32>
    %cst_41 = arith.constant 1.000000e+00 : f32
    %164 = vector.broadcast %cst_41 : f32 to vector<4x32xf32>
    %165 = arith.addf %164, %163 : vector<4x32xf32>
    %166 = arith.divf %164, %165 : vector<4x32xf32>
    %167 = arith.mulf %160, %154 : vector<4x32xf32>
    %168 = arith.addf %151, %167 : vector<4x32xf32>
    %169 = math.tanh %168 : vector<4x32xf32>
    %cst_42 = arith.constant 1.000000e+00 : f32
    %170 = vector.broadcast %cst_42 : f32 to vector<4x32xf32>
    %171 = arith.subf %170, %166 : vector<4x32xf32>
    %172 = arith.mulf %171, %169 : vector<4x32xf32>
    %173 = arith.mulf %166, %140 : vector<4x32xf32>
    %174 = arith.addf %172, %173 : vector<4x32xf32>
    %175 = vector.extract_strided_slice %174 {offsets = [0, 0], sizes = [2, 32], strides = [1, 1]} : vector<4x32xf32> to vector<2x32xf32>
    %c8 = arith.constant 8 : index
    %c0_43 = arith.constant 0 : index
    %176 = vector.load %arg20[%c8, %c0_43] : memref<16x32xf32, #tpu.memory_space<vmem>>, vector<2x32xf32>
    tpu.vector_store %arg20[%c8, %c0_43], %175 {strides = array<i32>} : memref<16x32xf32, #tpu.memory_space<vmem>>, vector<2x32xf32>,
    %177 = vector.extract_strided_slice %174 {offsets = [2, 0], sizes = [2, 32], strides = [1, 1]} : vector<4x32xf32> to vector<2x32xf32>
    %c8_44 = arith.constant 8 : index
    %c0_45 = arith.constant 0 : index
    %178 = vector.load %arg21[%c8_44, %c0_45] : memref<16x32xf32, #tpu.memory_space<vmem>>, vector<2x32xf32>
    tpu.vector_store %arg21[%c8_44, %c0_45], %177 {strides = array<i32>} : memref<16x32xf32, #tpu.memory_space<vmem>>, vector<2x32xf32>,
    %cst_46 = arith.constant dense<0.000000e+00> : vector<4x96xf32>
    %179 = tpu.matmul %174, %6, %cst_46 {dimension_numbers = #tpu.dot_dimension_numbers<[1], [0], [0], [1], [0, 0, 1, 1], [], []>} : vector<4x32xf32>, vector<32x96xf32>, vector<4x96xf32> -> vector<4x96xf32>
    %180 = vector.broadcast %7 : vector<1x96xf32> to vector<4x96xf32>
    %181 = arith.addf %179, %180 : vector<4x96xf32>
    %182 = vector.extract_strided_slice %5 {offsets = [20, 0], sizes = [4, 96], strides = [1, 1]} : vector<32x96xf32> to vector<4x96xf32>
    %183 = vector.extract_strided_slice %182 {offsets = [0, 0], sizes = [4, 32], strides = [1, 1]} : vector<4x96xf32> to vector<4x32xf32>
    %184 = vector.extract_strided_slice %182 {offsets = [0, 32], sizes = [4, 32], strides = [1, 1]} : vector<4x96xf32> to vector<4x32xf32>
    %185 = vector.extract_strided_slice %182 {offsets = [0, 64], sizes = [4, 32], strides = [1, 1]} : vector<4x96xf32> to vector<4x32xf32>
    %186 = vector.extract_strided_slice %181 {offsets = [0, 0], sizes = [4, 32], strides = [1, 1]} : vector<4x96xf32> to vector<4x32xf32>
    %187 = vector.extract_strided_slice %181 {offsets = [0, 32], sizes = [4, 32], strides = [1, 1]} : vector<4x96xf32> to vector<4x32xf32>
    %188 = vector.extract_strided_slice %181 {offsets = [0, 64], sizes = [4, 32], strides = [1, 1]} : vector<4x96xf32> to vector<4x32xf32>
    %189 = arith.addf %183, %186 : vector<4x32xf32>
    %190 = arith.negf %189 : vector<4x32xf32>
    %191 = math.exp %190 : vector<4x32xf32>
    %cst_47 = arith.constant 1.000000e+00 : f32
    %192 = vector.broadcast %cst_47 : f32 to vector<4x32xf32>
    %193 = arith.addf %192, %191 : vector<4x32xf32>
    %194 = arith.divf %192, %193 : vector<4x32xf32>
    %195 = arith.addf %184, %187 : vector<4x32xf32>
    %196 = arith.negf %195 : vector<4x32xf32>
    %197 = math.exp %196 : vector<4x32xf32>
    %cst_48 = arith.constant 1.000000e+00 : f32
    %198 = vector.broadcast %cst_48 : f32 to vector<4x32xf32>
    %199 = arith.addf %198, %197 : vector<4x32xf32>
    %200 = arith.divf %198, %199 : vector<4x32xf32>
    %201 = arith.mulf %194, %188 : vector<4x32xf32>
    %202 = arith.addf %185, %201 : vector<4x32xf32>
    %203 = math.tanh %202 : vector<4x32xf32>
    %cst_49 = arith.constant 1.000000e+00 : f32
    %204 = vector.broadcast %cst_49 : f32 to vector<4x32xf32>
    %205 = arith.subf %204, %200 : vector<4x32xf32>
    %206 = arith.mulf %205, %203 : vector<4x32xf32>
    %207 = arith.mulf %200, %174 : vector<4x32xf32>
    %208 = arith.addf %206, %207 : vector<4x32xf32>
    %209 = vector.extract_strided_slice %208 {offsets = [0, 0], sizes = [2, 32], strides = [1, 1]} : vector<4x32xf32> to vector<2x32xf32>
    %c10 = arith.constant 10 : index
    %c0_50 = arith.constant 0 : index
    %210 = vector.load %arg20[%c10, %c0_50] : memref<16x32xf32, #tpu.memory_space<vmem>>, vector<2x32xf32>
    tpu.vector_store %arg20[%c10, %c0_50], %209 {strides = array<i32>} : memref<16x32xf32, #tpu.memory_space<vmem>>, vector<2x32xf32>,
    %211 = vector.extract_strided_slice %208 {offsets = [2, 0], sizes = [2, 32], strides = [1, 1]} : vector<4x32xf32> to vector<2x32xf32>
    %c10_51 = arith.constant 10 : index
    %c0_52 = arith.constant 0 : index
    %212 = vector.load %arg21[%c10_51, %c0_52] : memref<16x32xf32, #tpu.memory_space<vmem>>, vector<2x32xf32>
    tpu.vector_store %arg21[%c10_51, %c0_52], %211 {strides = array<i32>} : memref<16x32xf32, #tpu.memory_space<vmem>>, vector<2x32xf32>,
    %cst_53 = arith.constant dense<0.000000e+00> : vector<4x96xf32>
    %213 = tpu.matmul %208, %6, %cst_53 {dimension_numbers = #tpu.dot_dimension_numbers<[1], [0], [0], [1], [0, 0, 1, 1], [], []>} : vector<4x32xf32>, vector<32x96xf32>, vector<4x96xf32> -> vector<4x96xf32>
    %214 = vector.broadcast %7 : vector<1x96xf32> to vector<4x96xf32>
    %215 = arith.addf %213, %214 : vector<4x96xf32>
    %216 = vector.extract_strided_slice %5 {offsets = [24, 0], sizes = [4, 96], strides = [1, 1]} : vector<32x96xf32> to vector<4x96xf32>
    %217 = vector.extract_strided_slice %216 {offsets = [0, 0], sizes = [4, 32], strides = [1, 1]} : vector<4x96xf32> to vector<4x32xf32>
    %218 = vector.extract_strided_slice %216 {offsets = [0, 32], sizes = [4, 32], strides = [1, 1]} : vector<4x96xf32> to vector<4x32xf32>
    %219 = vector.extract_strided_slice %216 {offsets = [0, 64], sizes = [4, 32], strides = [1, 1]} : vector<4x96xf32> to vector<4x32xf32>
    %220 = vector.extract_strided_slice %215 {offsets = [0, 0], sizes = [4, 32], strides = [1, 1]} : vector<4x96xf32> to vector<4x32xf32>
    %221 = vector.extract_strided_slice %215 {offsets = [0, 32], sizes = [4, 32], strides = [1, 1]} : vector<4x96xf32> to vector<4x32xf32>
    %222 = vector.extract_strided_slice %215 {offsets = [0, 64], sizes = [4, 32], strides = [1, 1]} : vector<4x96xf32> to vector<4x32xf32>
    %223 = arith.addf %217, %220 : vector<4x32xf32>
    %224 = arith.negf %223 : vector<4x32xf32>
    %225 = math.exp %224 : vector<4x32xf32>
    %cst_54 = arith.constant 1.000000e+00 : f32
    %226 = vector.broadcast %cst_54 : f32 to vector<4x32xf32>
    %227 = arith.addf %226, %225 : vector<4x32xf32>
    %228 = arith.divf %226, %227 : vector<4x32xf32>
    %229 = arith.addf %218, %221 : vector<4x32xf32>
    %230 = arith.negf %229 : vector<4x32xf32>
    %231 = math.exp %230 : vector<4x32xf32>
    %cst_55 = arith.constant 1.000000e+00 : f32
    %232 = vector.broadcast %cst_55 : f32 to vector<4x32xf32>
    %233 = arith.addf %232, %231 : vector<4x32xf32>
    %234 = arith.divf %232, %233 : vector<4x32xf32>
    %235 = arith.mulf %228, %222 : vector<4x32xf32>
    %236 = arith.addf %219, %235 : vector<4x32xf32>
    %237 = math.tanh %236 : vector<4x32xf32>
    %cst_56 = arith.constant 1.000000e+00 : f32
    %238 = vector.broadcast %cst_56 : f32 to vector<4x32xf32>
    %239 = arith.subf %238, %234 : vector<4x32xf32>
    %240 = arith.mulf %239, %237 : vector<4x32xf32>
    %241 = arith.mulf %234, %208 : vector<4x32xf32>
    %242 = arith.addf %240, %241 : vector<4x32xf32>
    %243 = vector.extract_strided_slice %242 {offsets = [0, 0], sizes = [2, 32], strides = [1, 1]} : vector<4x32xf32> to vector<2x32xf32>
    %c12 = arith.constant 12 : index
    %c0_57 = arith.constant 0 : index
    %244 = vector.load %arg20[%c12, %c0_57] : memref<16x32xf32, #tpu.memory_space<vmem>>, vector<2x32xf32>
    tpu.vector_store %arg20[%c12, %c0_57], %243 {strides = array<i32>} : memref<16x32xf32, #tpu.memory_space<vmem>>, vector<2x32xf32>,
    %245 = vector.extract_strided_slice %242 {offsets = [2, 0], sizes = [2, 32], strides = [1, 1]} : vector<4x32xf32> to vector<2x32xf32>
    %c12_58 = arith.constant 12 : index
    %c0_59 = arith.constant 0 : index
    %246 = vector.load %arg21[%c12_58, %c0_59] : memref<16x32xf32, #tpu.memory_space<vmem>>, vector<2x32xf32>
    tpu.vector_store %arg21[%c12_58, %c0_59], %245 {strides = array<i32>} : memref<16x32xf32, #tpu.memory_space<vmem>>, vector<2x32xf32>,
    %cst_60 = arith.constant dense<0.000000e+00> : vector<4x96xf32>
    %247 = tpu.matmul %242, %6, %cst_60 {dimension_numbers = #tpu.dot_dimension_numbers<[1], [0], [0], [1], [0, 0, 1, 1], [], []>} : vector<4x32xf32>, vector<32x96xf32>, vector<4x96xf32> -> vector<4x96xf32>
    %248 = vector.broadcast %7 : vector<1x96xf32> to vector<4x96xf32>
    %249 = arith.addf %247, %248 : vector<4x96xf32>
    %250 = vector.extract_strided_slice %5 {offsets = [28, 0], sizes = [4, 96], strides = [1, 1]} : vector<32x96xf32> to vector<4x96xf32>
    %251 = vector.extract_strided_slice %250 {offsets = [0, 0], sizes = [4, 32], strides = [1, 1]} : vector<4x96xf32> to vector<4x32xf32>
    %252 = vector.extract_strided_slice %250 {offsets = [0, 32], sizes = [4, 32], strides = [1, 1]} : vector<4x96xf32> to vector<4x32xf32>
    %253 = vector.extract_strided_slice %250 {offsets = [0, 64], sizes = [4, 32], strides = [1, 1]} : vector<4x96xf32> to vector<4x32xf32>
    %254 = vector.extract_strided_slice %249 {offsets = [0, 0], sizes = [4, 32], strides = [1, 1]} : vector<4x96xf32> to vector<4x32xf32>
    %255 = vector.extract_strided_slice %249 {offsets = [0, 32], sizes = [4, 32], strides = [1, 1]} : vector<4x96xf32> to vector<4x32xf32>
    %256 = vector.extract_strided_slice %249 {offsets = [0, 64], sizes = [4, 32], strides = [1, 1]} : vector<4x96xf32> to vector<4x32xf32>
    %257 = arith.addf %251, %254 : vector<4x32xf32>
    %258 = arith.negf %257 : vector<4x32xf32>
    %259 = math.exp %258 : vector<4x32xf32>
    %cst_61 = arith.constant 1.000000e+00 : f32
    %260 = vector.broadcast %cst_61 : f32 to vector<4x32xf32>
    %261 = arith.addf %260, %259 : vector<4x32xf32>
    %262 = arith.divf %260, %261 : vector<4x32xf32>
    %263 = arith.addf %252, %255 : vector<4x32xf32>
    %264 = arith.negf %263 : vector<4x32xf32>
    %265 = math.exp %264 : vector<4x32xf32>
    %cst_62 = arith.constant 1.000000e+00 : f32
    %266 = vector.broadcast %cst_62 : f32 to vector<4x32xf32>
    %267 = arith.addf %266, %265 : vector<4x32xf32>
    %268 = arith.divf %266, %267 : vector<4x32xf32>
    %269 = arith.mulf %262, %256 : vector<4x32xf32>
    %270 = arith.addf %253, %269 : vector<4x32xf32>
    %271 = math.tanh %270 : vector<4x32xf32>
    %cst_63 = arith.constant 1.000000e+00 : f32
    %272 = vector.broadcast %cst_63 : f32 to vector<4x32xf32>
    %273 = arith.subf %272, %268 : vector<4x32xf32>
    %274 = arith.mulf %273, %271 : vector<4x32xf32>
    %275 = arith.mulf %268, %242 : vector<4x32xf32>
    %276 = arith.addf %274, %275 : vector<4x32xf32>
    %277 = vector.extract_strided_slice %276 {offsets = [0, 0], sizes = [2, 32], strides = [1, 1]} : vector<4x32xf32> to vector<2x32xf32>
    %c14 = arith.constant 14 : index
    %c0_64 = arith.constant 0 : index
    %278 = vector.load %arg20[%c14, %c0_64] : memref<16x32xf32, #tpu.memory_space<vmem>>, vector<2x32xf32>
    tpu.vector_store %arg20[%c14, %c0_64], %277 {strides = array<i32>} : memref<16x32xf32, #tpu.memory_space<vmem>>, vector<2x32xf32>,
    %279 = vector.extract_strided_slice %276 {offsets = [2, 0], sizes = [2, 32], strides = [1, 1]} : vector<4x32xf32> to vector<2x32xf32>
    %c14_65 = arith.constant 14 : index
    %c0_66 = arith.constant 0 : index
    %280 = vector.load %arg21[%c14_65, %c0_66] : memref<16x32xf32, #tpu.memory_space<vmem>>, vector<2x32xf32>
    tpu.vector_store %arg21[%c14_65, %c0_66], %279 {strides = array<i32>} : memref<16x32xf32, #tpu.memory_space<vmem>>, vector<2x32xf32>,
    %c0_67 = arith.constant 0 : index
    %c0_68 = arith.constant 0 : index
    %281 = vector.load %arg20[%c0_67, %c0_68] : memref<16x32xf32, #tpu.memory_space<vmem>>, vector<16x32xf32>
    %c0_69 = arith.constant 0 : index
    %c0_70 = arith.constant 0 : index
    %282 = vector.load %arg21[%c0_69, %c0_70] : memref<16x32xf32, #tpu.memory_space<vmem>>, vector<16x32xf32>
    %c0_71 = arith.constant 0 : index
    %c0_72 = arith.constant 0 : index
    %283 = vector.load %arg1[%c0_71, %c0_72] : memref<16x32xf32, #tpu.memory_space<vmem>>, vector<16x32xf32>
    %c0_73 = arith.constant 0 : index
    %c0_74 = arith.constant 0 : index
    %284 = vector.load %arg2[%c0_73, %c0_74] : memref<16x32xf32, #tpu.memory_space<vmem>>, vector<16x32xf32>
    %285 = tpu.iota {dimensions = array<i32: 0>} : vector<16x16xi32>
    %286 = tpu.iota {dimensions = array<i32: 1>} : vector<16x16xi32>
    %c2_i32 = arith.constant 2 : i32
    %c0_i32 = arith.constant 0 : i32
    %287 = arith.cmpi eq, %c2_i32, %c0_i32 : i32
    %c1_i32 = arith.constant 1 : i32
    %288 = arith.select %287, %c1_i32, %c2_i32 : i32
    %289 = vector.broadcast %288 : i32 to vector<16x16xi32>
    %290 = arith.remsi %285, %289 : vector<16x16xi32>
    %c0_i32_75 = arith.constant 0 : i32
    %291 = vector.broadcast %c0_i32_75 : i32 to vector<16x16xi32>
    %292 = arith.cmpi ne, %290, %291 : vector<16x16xi32>
    %c0_i32_76 = arith.constant 0 : i32
    %293 = vector.broadcast %c0_i32_76 : i32 to vector<16x16xi32>
    %294 = arith.cmpi slt, %290, %293 : vector<16x16xi32>
    %c0_i32_77 = arith.constant 0 : i32
    %295 = arith.cmpi slt, %288, %c0_i32_77 : i32
    %296 = vector.broadcast %295 : i1 to vector<16x16xi1>
    %297 = vector.broadcast %296 : vector<16x16xi1> to vector<16x16xi1>
    %298 = arith.xori %294, %297 : vector<16x16xi1>
    %299 = arith.andi %298, %292 : vector<16x16xi1>
    %300 = vector.broadcast %288 : i32 to vector<16x16xi32>
    %301 = arith.addi %290, %300 : vector<16x16xi32>
    %302 = arith.select %299, %301, %290 : vector<16x16xi1>, vector<16x16xi32>
    %c2_i32_78 = arith.constant 2 : i32
    %c0_i32_79 = arith.constant 0 : i32
    %303 = arith.cmpi eq, %c2_i32_78, %c0_i32_79 : i32
    %c1_i32_80 = arith.constant 1 : i32
    %304 = arith.select %303, %c1_i32_80, %c2_i32_78 : i32
    %305 = vector.broadcast %304 : i32 to vector<16x16xi32>
    %306 = arith.remsi %286, %305 : vector<16x16xi32>
    %c0_i32_81 = arith.constant 0 : i32
    %307 = vector.broadcast %c0_i32_81 : i32 to vector<16x16xi32>
    %308 = arith.cmpi ne, %306, %307 : vector<16x16xi32>
    %c0_i32_82 = arith.constant 0 : i32
    %309 = vector.broadcast %c0_i32_82 : i32 to vector<16x16xi32>
    %310 = arith.cmpi slt, %306, %309 : vector<16x16xi32>
    %c0_i32_83 = arith.constant 0 : i32
    %311 = arith.cmpi slt, %304, %c0_i32_83 : i32
    %312 = vector.broadcast %311 : i1 to vector<16x16xi1>
    %313 = vector.broadcast %312 : vector<16x16xi1> to vector<16x16xi1>
    %314 = arith.xori %310, %313 : vector<16x16xi1>
    %315 = arith.andi %314, %308 : vector<16x16xi1>
    %316 = vector.broadcast %304 : i32 to vector<16x16xi32>
    %317 = arith.addi %306, %316 : vector<16x16xi32>
    %318 = arith.select %315, %317, %306 : vector<16x16xi1>, vector<16x16xi32>
    %319 = arith.cmpi eq, %302, %318 : vector<16x16xi32>
    %cst_84 = arith.constant 1.000000e+00 : f32
    %cst_85 = arith.constant 0.000000e+00 : f32
    %320 = vector.broadcast %cst_84 : f32 to vector<16x16xf32>
    %321 = vector.broadcast %cst_85 : f32 to vector<16x16xf32>
    %322 = arith.select %319, %320, %321 : vector<16x16xi1>, vector<16x16xf32>
    %cst_86 = arith.constant dense<0.000000e+00> : vector<16x32xf32>
    %323 = tpu.matmul %322, %283, %cst_86 {dimension_numbers = #tpu.dot_dimension_numbers<[1], [0], [0], [1], [0, 0, 1, 1], [], []>} : vector<16x16xf32>, vector<16x32xf32>, vector<16x32xf32> -> vector<16x32xf32>
    %cst_87 = arith.constant dense<0.000000e+00> : vector<16x32xf32>
    %324 = tpu.matmul %322, %281, %cst_87 {dimension_numbers = #tpu.dot_dimension_numbers<[1], [0], [0], [1], [0, 0, 1, 1], [], []>} : vector<16x16xf32>, vector<16x32xf32>, vector<16x32xf32> -> vector<16x32xf32>
    %c0_88 = arith.constant 0 : index
    %c0_89 = arith.constant 0 : index
    %325 = vector.load %arg7[%c0_88, %c0_89] : memref<32x32xf32, #tpu.memory_space<vmem>>, vector<32x32xf32>
    %cst_90 = arith.constant dense<0.000000e+00> : vector<16x32xf32>
    %326 = tpu.matmul %283, %325, %cst_90 {dimension_numbers = #tpu.dot_dimension_numbers<[1], [0], [0], [1], [0, 0, 1, 1], [], []>} : vector<16x32xf32>, vector<32x32xf32>, vector<16x32xf32> -> vector<16x32xf32>
    %c0_91 = arith.constant 0 : index
    %c0_92 = arith.constant 0 : index
    %327 = vector.load %arg8[%c0_91, %c0_92] : memref<1x32xf32, #tpu.memory_space<vmem>>, vector<1x32xf32>
    %328 = vector.broadcast %327 : vector<1x32xf32> to vector<16x32xf32>
    %329 = arith.addf %326, %328 : vector<16x32xf32>
    %330 = arith.mulf %329, %284 : vector<16x32xf32>
    %cst_93 = arith.constant dense<0.000000e+00> : vector<16xf32>
    %331 = vector.multi_reduction <add>, %330, %cst_93 [1] : vector<16x32xf32> to vector<16xf32>
    %332 = vector.shape_cast %331 : vector<16xf32> to vector<16x1xf32>
    %333 = math.tanh %332 : vector<16x1xf32>
    %c0_94 = arith.constant 0 : index
    %c0_95 = arith.constant 0 : index
    %334 = vector.load %arg9[%c0_94, %c0_95] : memref<1x32xf32, #tpu.memory_space<vmem>>, vector<1x32xf32>
    %335 = vector.broadcast %333 : vector<16x1xf32> to vector<16x32xf32>
    %336 = vector.broadcast %334 : vector<1x32xf32> to vector<16x32xf32>
    %337 = arith.mulf %335, %336 : vector<16x32xf32>
    %cst_96 = arith.constant dense<0xFF800000> : vector<16xf32>
    %338 = vector.multi_reduction <maximumf>, %337, %cst_96 [1] : vector<16x32xf32> to vector<16xf32>
    %339 = vector.shape_cast %338 : vector<16xf32> to vector<16x1xf32>
    %340 = vector.broadcast %339 : vector<16x1xf32> to vector<16x32xf32>
    %341 = arith.subf %337, %340 : vector<16x32xf32>
    %342 = math.exp %341 : vector<16x32xf32>
    %cst_97 = arith.constant dense<0.000000e+00> : vector<16xf32>
    %343 = vector.multi_reduction <add>, %342, %cst_97 [1] : vector<16x32xf32> to vector<16xf32>
    %344 = vector.shape_cast %343 : vector<16xf32> to vector<16x1xf32>
    %345 = tpu.reciprocal %344 {approx = true} : vector<16x1xf32> -> vector<16x1xf32>
    %346 = arith.mulf %344, %345 : vector<16x1xf32>
    %cst_98 = arith.constant 2.000000e+00 : f32
    %347 = vector.broadcast %cst_98 : f32 to vector<16x1xf32>
    %348 = arith.subf %347, %346 : vector<16x1xf32>
    %349 = arith.mulf %345, %348 : vector<16x1xf32>
    %350 = vector.broadcast %349 : vector<16x1xf32> to vector<16x32xf32>
    %351 = arith.mulf %342, %350 : vector<16x32xf32>
    %352 = arith.mulf %323, %351 : vector<16x32xf32>
    %353 = arith.mulf %352, %284 : vector<16x32xf32>
    %c0_99 = arith.constant 0 : index
    %c0_100 = arith.constant 0 : index
    %354 = vector.load %arg10[%c0_99, %c0_100] : memref<32x32xf32, #tpu.memory_space<vmem>>, vector<32x32xf32>
    %cst_101 = arith.constant dense<0.000000e+00> : vector<16x32xf32>
    %355 = tpu.matmul %281, %354, %cst_101 {dimension_numbers = #tpu.dot_dimension_numbers<[1], [0], [0], [1], [0, 0, 1, 1], [], []>} : vector<16x32xf32>, vector<32x32xf32>, vector<16x32xf32> -> vector<16x32xf32>
    %c0_102 = arith.constant 0 : index
    %c0_103 = arith.constant 0 : index
    %356 = vector.load %arg11[%c0_102, %c0_103] : memref<1x32xf32, #tpu.memory_space<vmem>>, vector<1x32xf32>
    %357 = vector.broadcast %356 : vector<1x32xf32> to vector<16x32xf32>
    %358 = arith.addf %355, %357 : vector<16x32xf32>
    %359 = arith.mulf %358, %282 : vector<16x32xf32>
    %cst_104 = arith.constant dense<0.000000e+00> : vector<16xf32>
    %360 = vector.multi_reduction <add>, %359, %cst_104 [1] : vector<16x32xf32> to vector<16xf32>
    %361 = vector.shape_cast %360 : vector<16xf32> to vector<16x1xf32>
    %362 = math.tanh %361 : vector<16x1xf32>
    %c0_105 = arith.constant 0 : index
    %c0_106 = arith.constant 0 : index
    %363 = vector.load %arg12[%c0_105, %c0_106] : memref<1x32xf32, #tpu.memory_space<vmem>>, vector<1x32xf32>
    %364 = vector.broadcast %362 : vector<16x1xf32> to vector<16x32xf32>
    %365 = vector.broadcast %363 : vector<1x32xf32> to vector<16x32xf32>
    %366 = arith.mulf %364, %365 : vector<16x32xf32>
    %cst_107 = arith.constant dense<0xFF800000> : vector<16xf32>
    %367 = vector.multi_reduction <maximumf>, %366, %cst_107 [1] : vector<16x32xf32> to vector<16xf32>
    %368 = vector.shape_cast %367 : vector<16xf32> to vector<16x1xf32>
    %369 = vector.broadcast %368 : vector<16x1xf32> to vector<16x32xf32>
    %370 = arith.subf %366, %369 : vector<16x32xf32>
    %371 = math.exp %370 : vector<16x32xf32>
    %cst_108 = arith.constant dense<0.000000e+00> : vector<16xf32>
    %372 = vector.multi_reduction <add>, %371, %cst_108 [1] : vector<16x32xf32> to vector<16xf32>
    %373 = vector.shape_cast %372 : vector<16xf32> to vector<16x1xf32>
    %374 = tpu.reciprocal %373 {approx = true} : vector<16x1xf32> -> vector<16x1xf32>
    %375 = arith.mulf %373, %374 : vector<16x1xf32>
    %cst_109 = arith.constant 2.000000e+00 : f32
    %376 = vector.broadcast %cst_109 : f32 to vector<16x1xf32>
    %377 = arith.subf %376, %375 : vector<16x1xf32>
    %378 = arith.mulf %374, %377 : vector<16x1xf32>
    %379 = vector.broadcast %378 : vector<16x1xf32> to vector<16x32xf32>
    %380 = arith.mulf %371, %379 : vector<16x32xf32>
    %381 = arith.mulf %324, %380 : vector<16x32xf32>
    %382 = arith.mulf %381, %282 : vector<16x32xf32>
    %383 = tpu.concatenate %353, %382 in 1 : vector<16x32xf32>, vector<16x32xf32> -> vector<16x64xf32>
    %c0_110 = arith.constant 0 : index
    %c0_111 = arith.constant 0 : index
    %384 = vector.load %arg13[%c0_110, %c0_111] : memref<64x96xf32, #tpu.memory_space<vmem>>, vector<64x96xf32>
    %cst_112 = arith.constant dense<0.000000e+00> : vector<16x96xf32>
    %385 = tpu.matmul %383, %384, %cst_112 {dimension_numbers = #tpu.dot_dimension_numbers<[1], [0], [0], [1], [0, 0, 1, 1], [], []>} : vector<16x64xf32>, vector<64x96xf32>, vector<16x96xf32> -> vector<16x96xf32>
    %c0_113 = arith.constant 0 : index
    %c0_114 = arith.constant 0 : index
    %386 = vector.load %arg15[%c0_113, %c0_114] : memref<1x96xf32, #tpu.memory_space<vmem>>, vector<1x96xf32>
    %387 = vector.broadcast %386 : vector<1x96xf32> to vector<16x96xf32>
    %388 = arith.addf %385, %387 : vector<16x96xf32>
    %c0_115 = arith.constant 0 : index
    %c0_116 = arith.constant 0 : index
    %389 = vector.load %arg14[%c0_115, %c0_116] : memref<32x96xf32, #tpu.memory_space<vmem>>, vector<32x96xf32>
    %c0_117 = arith.constant 0 : index
    %c0_118 = arith.constant 0 : index
    %390 = vector.load %arg16[%c0_117, %c0_118] : memref<1x96xf32, #tpu.memory_space<vmem>>, vector<1x96xf32>
    %cst_119 = arith.constant 0.000000e+00 : f32
    %391 = vector.broadcast %cst_119 : f32 to vector<2x32xf32>
    %cst_120 = arith.constant dense<0.000000e+00> : vector<2x96xf32>
    %392 = tpu.matmul %391, %389, %cst_120 {dimension_numbers = #tpu.dot_dimension_numbers<[1], [0], [0], [1], [0, 0, 1, 1], [], []>} : vector<2x32xf32>, vector<32x96xf32>, vector<2x96xf32> -> vector<2x96xf32>
    %393 = vector.broadcast %390 : vector<1x96xf32> to vector<2x96xf32>
    %394 = arith.addf %392, %393 : vector<2x96xf32>
    %395 = vector.extract_strided_slice %388 {offsets = [0, 0], sizes = [2, 96], strides = [1, 1]} : vector<16x96xf32> to vector<2x96xf32>
    %396 = vector.extract_strided_slice %395 {offsets = [0, 0], sizes = [2, 32], strides = [1, 1]} : vector<2x96xf32> to vector<2x32xf32>
    %397 = vector.extract_strided_slice %395 {offsets = [0, 32], sizes = [2, 32], strides = [1, 1]} : vector<2x96xf32> to vector<2x32xf32>
    %398 = vector.extract_strided_slice %395 {offsets = [0, 64], sizes = [2, 32], strides = [1, 1]} : vector<2x96xf32> to vector<2x32xf32>
    %399 = vector.extract_strided_slice %394 {offsets = [0, 0], sizes = [2, 32], strides = [1, 1]} : vector<2x96xf32> to vector<2x32xf32>
    %400 = vector.extract_strided_slice %394 {offsets = [0, 32], sizes = [2, 32], strides = [1, 1]} : vector<2x96xf32> to vector<2x32xf32>
    %401 = vector.extract_strided_slice %394 {offsets = [0, 64], sizes = [2, 32], strides = [1, 1]} : vector<2x96xf32> to vector<2x32xf32>
    %402 = arith.addf %396, %399 : vector<2x32xf32>
    %403 = arith.negf %402 : vector<2x32xf32>
    %404 = math.exp %403 : vector<2x32xf32>
    %cst_121 = arith.constant 1.000000e+00 : f32
    %405 = vector.broadcast %cst_121 : f32 to vector<2x32xf32>
    %406 = arith.addf %405, %404 : vector<2x32xf32>
    %407 = arith.divf %405, %406 : vector<2x32xf32>
    %408 = arith.addf %397, %400 : vector<2x32xf32>
    %409 = arith.negf %408 : vector<2x32xf32>
    %410 = math.exp %409 : vector<2x32xf32>
    %cst_122 = arith.constant 1.000000e+00 : f32
    %411 = vector.broadcast %cst_122 : f32 to vector<2x32xf32>
    %412 = arith.addf %411, %410 : vector<2x32xf32>
    %413 = arith.divf %411, %412 : vector<2x32xf32>
    %414 = arith.mulf %407, %401 : vector<2x32xf32>
    %415 = arith.addf %398, %414 : vector<2x32xf32>
    %416 = math.tanh %415 : vector<2x32xf32>
    %cst_123 = arith.constant 1.000000e+00 : f32
    %417 = vector.broadcast %cst_123 : f32 to vector<2x32xf32>
    %418 = arith.subf %417, %413 : vector<2x32xf32>
    %419 = arith.mulf %418, %416 : vector<2x32xf32>
    %420 = arith.mulf %413, %391 : vector<2x32xf32>
    %421 = arith.addf %419, %420 : vector<2x32xf32>
    %cst_124 = arith.constant dense<0.000000e+00> : vector<2x96xf32>
    %422 = tpu.matmul %421, %389, %cst_124 {dimension_numbers = #tpu.dot_dimension_numbers<[1], [0], [0], [1], [0, 0, 1, 1], [], []>} : vector<2x32xf32>, vector<32x96xf32>, vector<2x96xf32> -> vector<2x96xf32>
    %423 = vector.broadcast %390 : vector<1x96xf32> to vector<2x96xf32>
    %424 = arith.addf %422, %423 : vector<2x96xf32>
    %425 = vector.extract_strided_slice %388 {offsets = [2, 0], sizes = [2, 96], strides = [1, 1]} : vector<16x96xf32> to vector<2x96xf32>
    %426 = vector.extract_strided_slice %425 {offsets = [0, 0], sizes = [2, 32], strides = [1, 1]} : vector<2x96xf32> to vector<2x32xf32>
    %427 = vector.extract_strided_slice %425 {offsets = [0, 32], sizes = [2, 32], strides = [1, 1]} : vector<2x96xf32> to vector<2x32xf32>
    %428 = vector.extract_strided_slice %425 {offsets = [0, 64], sizes = [2, 32], strides = [1, 1]} : vector<2x96xf32> to vector<2x32xf32>
    %429 = vector.extract_strided_slice %424 {offsets = [0, 0], sizes = [2, 32], strides = [1, 1]} : vector<2x96xf32> to vector<2x32xf32>
    %430 = vector.extract_strided_slice %424 {offsets = [0, 32], sizes = [2, 32], strides = [1, 1]} : vector<2x96xf32> to vector<2x32xf32>
    %431 = vector.extract_strided_slice %424 {offsets = [0, 64], sizes = [2, 32], strides = [1, 1]} : vector<2x96xf32> to vector<2x32xf32>
    %432 = arith.addf %426, %429 : vector<2x32xf32>
    %433 = arith.negf %432 : vector<2x32xf32>
    %434 = math.exp %433 : vector<2x32xf32>
    %cst_125 = arith.constant 1.000000e+00 : f32
    %435 = vector.broadcast %cst_125 : f32 to vector<2x32xf32>
    %436 = arith.addf %435, %434 : vector<2x32xf32>
    %437 = arith.divf %435, %436 : vector<2x32xf32>
    %438 = arith.addf %427, %430 : vector<2x32xf32>
    %439 = arith.negf %438 : vector<2x32xf32>
    %440 = math.exp %439 : vector<2x32xf32>
    %cst_126 = arith.constant 1.000000e+00 : f32
    %441 = vector.broadcast %cst_126 : f32 to vector<2x32xf32>
    %442 = arith.addf %441, %440 : vector<2x32xf32>
    %443 = arith.divf %441, %442 : vector<2x32xf32>
    %444 = arith.mulf %437, %431 : vector<2x32xf32>
    %445 = arith.addf %428, %444 : vector<2x32xf32>
    %446 = math.tanh %445 : vector<2x32xf32>
    %cst_127 = arith.constant 1.000000e+00 : f32
    %447 = vector.broadcast %cst_127 : f32 to vector<2x32xf32>
    %448 = arith.subf %447, %443 : vector<2x32xf32>
    %449 = arith.mulf %448, %446 : vector<2x32xf32>
    %450 = arith.mulf %443, %421 : vector<2x32xf32>
    %451 = arith.addf %449, %450 : vector<2x32xf32>
    %cst_128 = arith.constant dense<0.000000e+00> : vector<2x96xf32>
    %452 = tpu.matmul %451, %389, %cst_128 {dimension_numbers = #tpu.dot_dimension_numbers<[1], [0], [0], [1], [0, 0, 1, 1], [], []>} : vector<2x32xf32>, vector<32x96xf32>, vector<2x96xf32> -> vector<2x96xf32>
    %453 = vector.broadcast %390 : vector<1x96xf32> to vector<2x96xf32>
    %454 = arith.addf %452, %453 : vector<2x96xf32>
    %455 = vector.extract_strided_slice %388 {offsets = [4, 0], sizes = [2, 96], strides = [1, 1]} : vector<16x96xf32> to vector<2x96xf32>
    %456 = vector.extract_strided_slice %455 {offsets = [0, 0], sizes = [2, 32], strides = [1, 1]} : vector<2x96xf32> to vector<2x32xf32>
    %457 = vector.extract_strided_slice %455 {offsets = [0, 32], sizes = [2, 32], strides = [1, 1]} : vector<2x96xf32> to vector<2x32xf32>
    %458 = vector.extract_strided_slice %455 {offsets = [0, 64], sizes = [2, 32], strides = [1, 1]} : vector<2x96xf32> to vector<2x32xf32>
    %459 = vector.extract_strided_slice %454 {offsets = [0, 0], sizes = [2, 32], strides = [1, 1]} : vector<2x96xf32> to vector<2x32xf32>
    %460 = vector.extract_strided_slice %454 {offsets = [0, 32], sizes = [2, 32], strides = [1, 1]} : vector<2x96xf32> to vector<2x32xf32>
    %461 = vector.extract_strided_slice %454 {offsets = [0, 64], sizes = [2, 32], strides = [1, 1]} : vector<2x96xf32> to vector<2x32xf32>
    %462 = arith.addf %456, %459 : vector<2x32xf32>
    %463 = arith.negf %462 : vector<2x32xf32>
    %464 = math.exp %463 : vector<2x32xf32>
    %cst_129 = arith.constant 1.000000e+00 : f32
    %465 = vector.broadcast %cst_129 : f32 to vector<2x32xf32>
    %466 = arith.addf %465, %464 : vector<2x32xf32>
    %467 = arith.divf %465, %466 : vector<2x32xf32>
    %468 = arith.addf %457, %460 : vector<2x32xf32>
    %469 = arith.negf %468 : vector<2x32xf32>
    %470 = math.exp %469 : vector<2x32xf32>
    %cst_130 = arith.constant 1.000000e+00 : f32
    %471 = vector.broadcast %cst_130 : f32 to vector<2x32xf32>
    %472 = arith.addf %471, %470 : vector<2x32xf32>
    %473 = arith.divf %471, %472 : vector<2x32xf32>
    %474 = arith.mulf %467, %461 : vector<2x32xf32>
    %475 = arith.addf %458, %474 : vector<2x32xf32>
    %476 = math.tanh %475 : vector<2x32xf32>
    %cst_131 = arith.constant 1.000000e+00 : f32
    %477 = vector.broadcast %cst_131 : f32 to vector<2x32xf32>
    %478 = arith.subf %477, %473 : vector<2x32xf32>
    %479 = arith.mulf %478, %476 : vector<2x32xf32>
    %480 = arith.mulf %473, %451 : vector<2x32xf32>
    %481 = arith.addf %479, %480 : vector<2x32xf32>
    %cst_132 = arith.constant dense<0.000000e+00> : vector<2x96xf32>
    %482 = tpu.matmul %481, %389, %cst_132 {dimension_numbers = #tpu.dot_dimension_numbers<[1], [0], [0], [1], [0, 0, 1, 1], [], []>} : vector<2x32xf32>, vector<32x96xf32>, vector<2x96xf32> -> vector<2x96xf32>
    %483 = vector.broadcast %390 : vector<1x96xf32> to vector<2x96xf32>
    %484 = arith.addf %482, %483 : vector<2x96xf32>
    %485 = vector.extract_strided_slice %388 {offsets = [6, 0], sizes = [2, 96], strides = [1, 1]} : vector<16x96xf32> to vector<2x96xf32>
    %486 = vector.extract_strided_slice %485 {offsets = [0, 0], sizes = [2, 32], strides = [1, 1]} : vector<2x96xf32> to vector<2x32xf32>
    %487 = vector.extract_strided_slice %485 {offsets = [0, 32], sizes = [2, 32], strides = [1, 1]} : vector<2x96xf32> to vector<2x32xf32>
    %488 = vector.extract_strided_slice %485 {offsets = [0, 64], sizes = [2, 32], strides = [1, 1]} : vector<2x96xf32> to vector<2x32xf32>
    %489 = vector.extract_strided_slice %484 {offsets = [0, 0], sizes = [2, 32], strides = [1, 1]} : vector<2x96xf32> to vector<2x32xf32>
    %490 = vector.extract_strided_slice %484 {offsets = [0, 32], sizes = [2, 32], strides = [1, 1]} : vector<2x96xf32> to vector<2x32xf32>
    %491 = vector.extract_strided_slice %484 {offsets = [0, 64], sizes = [2, 32], strides = [1, 1]} : vector<2x96xf32> to vector<2x32xf32>
    %492 = arith.addf %486, %489 : vector<2x32xf32>
    %493 = arith.negf %492 : vector<2x32xf32>
    %494 = math.exp %493 : vector<2x32xf32>
    %cst_133 = arith.constant 1.000000e+00 : f32
    %495 = vector.broadcast %cst_133 : f32 to vector<2x32xf32>
    %496 = arith.addf %495, %494 : vector<2x32xf32>
    %497 = arith.divf %495, %496 : vector<2x32xf32>
    %498 = arith.addf %487, %490 : vector<2x32xf32>
    %499 = arith.negf %498 : vector<2x32xf32>
    %500 = math.exp %499 : vector<2x32xf32>
    %cst_134 = arith.constant 1.000000e+00 : f32
    %501 = vector.broadcast %cst_134 : f32 to vector<2x32xf32>
    %502 = arith.addf %501, %500 : vector<2x32xf32>
    %503 = arith.divf %501, %502 : vector<2x32xf32>
    %504 = arith.mulf %497, %491 : vector<2x32xf32>
    %505 = arith.addf %488, %504 : vector<2x32xf32>
    %506 = math.tanh %505 : vector<2x32xf32>
    %cst_135 = arith.constant 1.000000e+00 : f32
    %507 = vector.broadcast %cst_135 : f32 to vector<2x32xf32>
    %508 = arith.subf %507, %503 : vector<2x32xf32>
    %509 = arith.mulf %508, %506 : vector<2x32xf32>
    %510 = arith.mulf %503, %481 : vector<2x32xf32>
    %511 = arith.addf %509, %510 : vector<2x32xf32>
    %cst_136 = arith.constant dense<0.000000e+00> : vector<2x96xf32>
    %512 = tpu.matmul %511, %389, %cst_136 {dimension_numbers = #tpu.dot_dimension_numbers<[1], [0], [0], [1], [0, 0, 1, 1], [], []>} : vector<2x32xf32>, vector<32x96xf32>, vector<2x96xf32> -> vector<2x96xf32>
    %513 = vector.broadcast %390 : vector<1x96xf32> to vector<2x96xf32>
    %514 = arith.addf %512, %513 : vector<2x96xf32>
    %515 = vector.extract_strided_slice %388 {offsets = [8, 0], sizes = [2, 96], strides = [1, 1]} : vector<16x96xf32> to vector<2x96xf32>
    %516 = vector.extract_strided_slice %515 {offsets = [0, 0], sizes = [2, 32], strides = [1, 1]} : vector<2x96xf32> to vector<2x32xf32>
    %517 = vector.extract_strided_slice %515 {offsets = [0, 32], sizes = [2, 32], strides = [1, 1]} : vector<2x96xf32> to vector<2x32xf32>
    %518 = vector.extract_strided_slice %515 {offsets = [0, 64], sizes = [2, 32], strides = [1, 1]} : vector<2x96xf32> to vector<2x32xf32>
    %519 = vector.extract_strided_slice %514 {offsets = [0, 0], sizes = [2, 32], strides = [1, 1]} : vector<2x96xf32> to vector<2x32xf32>
    %520 = vector.extract_strided_slice %514 {offsets = [0, 32], sizes = [2, 32], strides = [1, 1]} : vector<2x96xf32> to vector<2x32xf32>
    %521 = vector.extract_strided_slice %514 {offsets = [0, 64], sizes = [2, 32], strides = [1, 1]} : vector<2x96xf32> to vector<2x32xf32>
    %522 = arith.addf %516, %519 : vector<2x32xf32>
    %523 = arith.negf %522 : vector<2x32xf32>
    %524 = math.exp %523 : vector<2x32xf32>
    %cst_137 = arith.constant 1.000000e+00 : f32
    %525 = vector.broadcast %cst_137 : f32 to vector<2x32xf32>
    %526 = arith.addf %525, %524 : vector<2x32xf32>
    %527 = arith.divf %525, %526 : vector<2x32xf32>
    %528 = arith.addf %517, %520 : vector<2x32xf32>
    %529 = arith.negf %528 : vector<2x32xf32>
    %530 = math.exp %529 : vector<2x32xf32>
    %cst_138 = arith.constant 1.000000e+00 : f32
    %531 = vector.broadcast %cst_138 : f32 to vector<2x32xf32>
    %532 = arith.addf %531, %530 : vector<2x32xf32>
    %533 = arith.divf %531, %532 : vector<2x32xf32>
    %534 = arith.mulf %527, %521 : vector<2x32xf32>
    %535 = arith.addf %518, %534 : vector<2x32xf32>
    %536 = math.tanh %535 : vector<2x32xf32>
    %cst_139 = arith.constant 1.000000e+00 : f32
    %537 = vector.broadcast %cst_139 : f32 to vector<2x32xf32>
    %538 = arith.subf %537, %533 : vector<2x32xf32>
    %539 = arith.mulf %538, %536 : vector<2x32xf32>
    %540 = arith.mulf %533, %511 : vector<2x32xf32>
    %541 = arith.addf %539, %540 : vector<2x32xf32>
    %cst_140 = arith.constant dense<0.000000e+00> : vector<2x96xf32>
    %542 = tpu.matmul %541, %389, %cst_140 {dimension_numbers = #tpu.dot_dimension_numbers<[1], [0], [0], [1], [0, 0, 1, 1], [], []>} : vector<2x32xf32>, vector<32x96xf32>, vector<2x96xf32> -> vector<2x96xf32>
    %543 = vector.broadcast %390 : vector<1x96xf32> to vector<2x96xf32>
    %544 = arith.addf %542, %543 : vector<2x96xf32>
    %545 = vector.extract_strided_slice %388 {offsets = [10, 0], sizes = [2, 96], strides = [1, 1]} : vector<16x96xf32> to vector<2x96xf32>
    %546 = vector.extract_strided_slice %545 {offsets = [0, 0], sizes = [2, 32], strides = [1, 1]} : vector<2x96xf32> to vector<2x32xf32>
    %547 = vector.extract_strided_slice %545 {offsets = [0, 32], sizes = [2, 32], strides = [1, 1]} : vector<2x96xf32> to vector<2x32xf32>
    %548 = vector.extract_strided_slice %545 {offsets = [0, 64], sizes = [2, 32], strides = [1, 1]} : vector<2x96xf32> to vector<2x32xf32>
    %549 = vector.extract_strided_slice %544 {offsets = [0, 0], sizes = [2, 32], strides = [1, 1]} : vector<2x96xf32> to vector<2x32xf32>
    %550 = vector.extract_strided_slice %544 {offsets = [0, 32], sizes = [2, 32], strides = [1, 1]} : vector<2x96xf32> to vector<2x32xf32>
    %551 = vector.extract_strided_slice %544 {offsets = [0, 64], sizes = [2, 32], strides = [1, 1]} : vector<2x96xf32> to vector<2x32xf32>
    %552 = arith.addf %546, %549 : vector<2x32xf32>
    %553 = arith.negf %552 : vector<2x32xf32>
    %554 = math.exp %553 : vector<2x32xf32>
    %cst_141 = arith.constant 1.000000e+00 : f32
    %555 = vector.broadcast %cst_141 : f32 to vector<2x32xf32>
    %556 = arith.addf %555, %554 : vector<2x32xf32>
    %557 = arith.divf %555, %556 : vector<2x32xf32>
    %558 = arith.addf %547, %550 : vector<2x32xf32>
    %559 = arith.negf %558 : vector<2x32xf32>
    %560 = math.exp %559 : vector<2x32xf32>
    %cst_142 = arith.constant 1.000000e+00 : f32
    %561 = vector.broadcast %cst_142 : f32 to vector<2x32xf32>
    %562 = arith.addf %561, %560 : vector<2x32xf32>
    %563 = arith.divf %561, %562 : vector<2x32xf32>
    %564 = arith.mulf %557, %551 : vector<2x32xf32>
    %565 = arith.addf %548, %564 : vector<2x32xf32>
    %566 = math.tanh %565 : vector<2x32xf32>
    %cst_143 = arith.constant 1.000000e+00 : f32
    %567 = vector.broadcast %cst_143 : f32 to vector<2x32xf32>
    %568 = arith.subf %567, %563 : vector<2x32xf32>
    %569 = arith.mulf %568, %566 : vector<2x32xf32>
    %570 = arith.mulf %563, %541 : vector<2x32xf32>
    %571 = arith.addf %569, %570 : vector<2x32xf32>
    %cst_144 = arith.constant dense<0.000000e+00> : vector<2x96xf32>
    %572 = tpu.matmul %571, %389, %cst_144 {dimension_numbers = #tpu.dot_dimension_numbers<[1], [0], [0], [1], [0, 0, 1, 1], [], []>} : vector<2x32xf32>, vector<32x96xf32>, vector<2x96xf32> -> vector<2x96xf32>
    %573 = vector.broadcast %390 : vector<1x96xf32> to vector<2x96xf32>
    %574 = arith.addf %572, %573 : vector<2x96xf32>
    %575 = vector.extract_strided_slice %388 {offsets = [12, 0], sizes = [2, 96], strides = [1, 1]} : vector<16x96xf32> to vector<2x96xf32>
    %576 = vector.extract_strided_slice %575 {offsets = [0, 0], sizes = [2, 32], strides = [1, 1]} : vector<2x96xf32> to vector<2x32xf32>
    %577 = vector.extract_strided_slice %575 {offsets = [0, 32], sizes = [2, 32], strides = [1, 1]} : vector<2x96xf32> to vector<2x32xf32>
    %578 = vector.extract_strided_slice %575 {offsets = [0, 64], sizes = [2, 32], strides = [1, 1]} : vector<2x96xf32> to vector<2x32xf32>
    %579 = vector.extract_strided_slice %574 {offsets = [0, 0], sizes = [2, 32], strides = [1, 1]} : vector<2x96xf32> to vector<2x32xf32>
    %580 = vector.extract_strided_slice %574 {offsets = [0, 32], sizes = [2, 32], strides = [1, 1]} : vector<2x96xf32> to vector<2x32xf32>
    %581 = vector.extract_strided_slice %574 {offsets = [0, 64], sizes = [2, 32], strides = [1, 1]} : vector<2x96xf32> to vector<2x32xf32>
    %582 = arith.addf %576, %579 : vector<2x32xf32>
    %583 = arith.negf %582 : vector<2x32xf32>
    %584 = math.exp %583 : vector<2x32xf32>
    %cst_145 = arith.constant 1.000000e+00 : f32
    %585 = vector.broadcast %cst_145 : f32 to vector<2x32xf32>
    %586 = arith.addf %585, %584 : vector<2x32xf32>
    %587 = arith.divf %585, %586 : vector<2x32xf32>
    %588 = arith.addf %577, %580 : vector<2x32xf32>
    %589 = arith.negf %588 : vector<2x32xf32>
    %590 = math.exp %589 : vector<2x32xf32>
    %cst_146 = arith.constant 1.000000e+00 : f32
    %591 = vector.broadcast %cst_146 : f32 to vector<2x32xf32>
    %592 = arith.addf %591, %590 : vector<2x32xf32>
    %593 = arith.divf %591, %592 : vector<2x32xf32>
    %594 = arith.mulf %587, %581 : vector<2x32xf32>
    %595 = arith.addf %578, %594 : vector<2x32xf32>
    %596 = math.tanh %595 : vector<2x32xf32>
    %cst_147 = arith.constant 1.000000e+00 : f32
    %597 = vector.broadcast %cst_147 : f32 to vector<2x32xf32>
    %598 = arith.subf %597, %593 : vector<2x32xf32>
    %599 = arith.mulf %598, %596 : vector<2x32xf32>
    %600 = arith.mulf %593, %571 : vector<2x32xf32>
    %601 = arith.addf %599, %600 : vector<2x32xf32>
    %cst_148 = arith.constant dense<0.000000e+00> : vector<2x96xf32>
    %602 = tpu.matmul %601, %389, %cst_148 {dimension_numbers = #tpu.dot_dimension_numbers<[1], [0], [0], [1], [0, 0, 1, 1], [], []>} : vector<2x32xf32>, vector<32x96xf32>, vector<2x96xf32> -> vector<2x96xf32>
    %603 = vector.broadcast %390 : vector<1x96xf32> to vector<2x96xf32>
    %604 = arith.addf %602, %603 : vector<2x96xf32>
    %605 = vector.extract_strided_slice %388 {offsets = [14, 0], sizes = [2, 96], strides = [1, 1]} : vector<16x96xf32> to vector<2x96xf32>
    %606 = vector.extract_strided_slice %605 {offsets = [0, 0], sizes = [2, 32], strides = [1, 1]} : vector<2x96xf32> to vector<2x32xf32>
    %607 = vector.extract_strided_slice %605 {offsets = [0, 32], sizes = [2, 32], strides = [1, 1]} : vector<2x96xf32> to vector<2x32xf32>
    %608 = vector.extract_strided_slice %605 {offsets = [0, 64], sizes = [2, 32], strides = [1, 1]} : vector<2x96xf32> to vector<2x32xf32>
    %609 = vector.extract_strided_slice %604 {offsets = [0, 0], sizes = [2, 32], strides = [1, 1]} : vector<2x96xf32> to vector<2x32xf32>
    %610 = vector.extract_strided_slice %604 {offsets = [0, 32], sizes = [2, 32], strides = [1, 1]} : vector<2x96xf32> to vector<2x32xf32>
    %611 = vector.extract_strided_slice %604 {offsets = [0, 64], sizes = [2, 32], strides = [1, 1]} : vector<2x96xf32> to vector<2x32xf32>
    %612 = arith.addf %606, %609 : vector<2x32xf32>
    %613 = arith.negf %612 : vector<2x32xf32>
    %614 = math.exp %613 : vector<2x32xf32>
    %cst_149 = arith.constant 1.000000e+00 : f32
    %615 = vector.broadcast %cst_149 : f32 to vector<2x32xf32>
    %616 = arith.addf %615, %614 : vector<2x32xf32>
    %617 = arith.divf %615, %616 : vector<2x32xf32>
    %618 = arith.addf %607, %610 : vector<2x32xf32>
    %619 = arith.negf %618 : vector<2x32xf32>
    %620 = math.exp %619 : vector<2x32xf32>
    %cst_150 = arith.constant 1.000000e+00 : f32
    %621 = vector.broadcast %cst_150 : f32 to vector<2x32xf32>
    %622 = arith.addf %621, %620 : vector<2x32xf32>
    %623 = arith.divf %621, %622 : vector<2x32xf32>
    %624 = arith.mulf %617, %611 : vector<2x32xf32>
    %625 = arith.addf %608, %624 : vector<2x32xf32>
    %626 = math.tanh %625 : vector<2x32xf32>
    %cst_151 = arith.constant 1.000000e+00 : f32
    %627 = vector.broadcast %cst_151 : f32 to vector<2x32xf32>
    %628 = arith.subf %627, %623 : vector<2x32xf32>
    %629 = arith.mulf %628, %626 : vector<2x32xf32>
    %630 = arith.mulf %623, %601 : vector<2x32xf32>
    %631 = arith.addf %629, %630 : vector<2x32xf32>
    %c0_152 = arith.constant 0 : index
    %c0_153 = arith.constant 0 : index
    %632 = vector.load %arg17[%c0_152, %c0_153] : memref<32x2xf32, #tpu.memory_space<vmem>>, vector<32x2xf32>
    %cst_154 = arith.constant dense<0.000000e+00> : vector<2x2xf32>
    %633 = tpu.matmul %631, %632, %cst_154 {dimension_numbers = #tpu.dot_dimension_numbers<[1], [0], [0], [1], [0, 0, 1, 1], [], []>} : vector<2x32xf32>, vector<32x2xf32>, vector<2x2xf32> -> vector<2x2xf32>
    %c0_155 = arith.constant 0 : index
    %c0_156 = arith.constant 0 : index
    %634 = vector.load %arg18[%c0_155, %c0_156] : memref<1x2xf32, #tpu.memory_space<vmem>>, vector<1x2xf32>
    %635 = vector.broadcast %634 : vector<1x2xf32> to vector<2x2xf32>
    %636 = arith.addf %633, %635 : vector<2x2xf32>
    %cst_157 = arith.constant dense<0xFF800000> : vector<2xf32>
    %637 = vector.multi_reduction <maximumf>, %636, %cst_157 [1] : vector<2x2xf32> to vector<2xf32>
    %638 = vector.shape_cast %637 : vector<2xf32> to vector<2x1xf32>
    %639 = vector.broadcast %638 : vector<2x1xf32> to vector<2x2xf32>
    %640 = arith.subf %636, %639 : vector<2x2xf32>
    %641 = math.exp %640 : vector<2x2xf32>
    %cst_158 = arith.constant dense<0.000000e+00> : vector<2xf32>
    %642 = vector.multi_reduction <add>, %641, %cst_158 [1] : vector<2x2xf32> to vector<2xf32>
    %643 = vector.shape_cast %642 : vector<2xf32> to vector<2x1xf32>
    %644 = tpu.reciprocal %643 {approx = true} : vector<2x1xf32> -> vector<2x1xf32>
    %645 = arith.mulf %643, %644 : vector<2x1xf32>
    %cst_159 = arith.constant 2.000000e+00 : f32
    %646 = vector.broadcast %cst_159 : f32 to vector<2x1xf32>
    %647 = arith.subf %646, %645 : vector<2x1xf32>
    %648 = arith.mulf %644, %647 : vector<2x1xf32>
    %649 = vector.broadcast %648 : vector<2x1xf32> to vector<2x2xf32>
    %650 = arith.mulf %641, %649 : vector<2x2xf32>
    %c0_160 = arith.constant 0 : index
    %c0_161 = arith.constant 0 : index
    %651 = vector.load %arg19[%c0_160, %c0_161] : memref<2x2xf32, #tpu.memory_space<vmem>>, vector<2x2xf32>
    tpu.vector_store %arg19[%c0_160, %c0_161], %650 {strides = array<i32>} : memref<2x2xf32, #tpu.memory_space<vmem>>, vector<2x2xf32>,
    return
  }
}

</mosaic_0001>

<llo_original>
// kernel: tpu_custom_call.1
$region0: #{tpu_custom_call.1}
  #allocation0 [shape = 'u32[]', space=smem, size = 0x4, offset = 0x4, fixed_abs, tag = 'smem constant byte address 0x4 - core index']
  #allocation1 [shape = 'u32[144,128]{1,0:T(1,128)}', space=vmem, size = 0x12000, scoped, tag = 'internal scratch']
  #allocation2 [shape = 'f32[16,32]{1,0:T(8,128)}', space=vmem, size = 0x2000, scoped, tag = 'scratch operand']
  #allocation3 [shape = 'f32[16,32]{1,0:T(8,128)}', space=vmem, size = 0x2000, scoped, tag = 'scratch operand']
  %s0 = inlined_call_operand.hbm [shape: f32[32,32], index: 0, kind: input, shape index: {}]
  %s1 = inlined_call_operand.vmem [shape: f32[16,32], index: 1, kind: input, shape index: {}]
  %s2 = inlined_call_operand.hbm [shape: f32[16,32], index: 2, kind: input, shape index: {}]
  %s3 = inlined_call_operand.hbm [shape: f32[32,96], index: 3, kind: input, shape index: {}]
  %s4 = inlined_call_operand.hbm [shape: f32[32,96], index: 4, kind: input, shape index: {}]
  %s5 = inlined_call_operand.vmem [shape: f32[1,96], index: 5, kind: input, shape index: {}]
  %s6 = inlined_call_operand.vmem [shape: f32[1,96], index: 6, kind: input, shape index: {}]
  %s7 = inlined_call_operand.hbm [shape: f32[32,32], index: 7, kind: input, shape index: {}]
  %s8 = inlined_call_operand.vmem [shape: f32[1,32], index: 8, kind: input, shape index: {}]
  %s9 = inlined_call_operand.hbm [shape: f32[1,32], index: 9, kind: input, shape index: {}]
  %s10 = inlined_call_operand.hbm [shape: f32[32,32], index: 10, kind: input, shape index: {}]
  %s11 = inlined_call_operand.hbm [shape: f32[1,32], index: 11, kind: input, shape index: {}]
  %s12 = inlined_call_operand.hbm [shape: f32[1,32], index: 12, kind: input, shape index: {}]
  %s13 = inlined_call_operand.vmem [shape: f32[64,96], index: 13, kind: input, shape index: {}]
  %s14 = inlined_call_operand.hbm [shape: f32[32,96], index: 14, kind: input, shape index: {}]
  %s15 = inlined_call_operand.vmem [shape: f32[1,96], index: 15, kind: input, shape index: {}]
  %s16 = inlined_call_operand.vmem [shape: f32[1,96], index: 16, kind: input, shape index: {}]
  %s17 = inlined_call_operand.vmem [shape: f32[32,2], index: 17, kind: input, shape index: {}]
  %s18 = inlined_call_operand.vmem [shape: f32[1,2], index: 18, kind: input, shape index: {}]
  %s19 = inlined_call_operand.hbm [shape: f32[2,2], index: 19, kind: output, shape index: {}]
  %s20 = sld [smem:[#allocation0]]
  $region126: #{tpu_custom_call.1} parent=0
    _
  %s22 = ssub.s32 1, %s20
  %s23 = scalar_select 0, %s22, %s20
  $region1: #{tpu_custom_call.1} parent=0
    #allocation4 [shape = 'u8[16384]{0}', space=vmem, size = 0x4000, scoped, tag = 'input window, operand 0, single buffered']
    #allocation5 [shape = 's32[1]{0}', space=sflag, size = 0x4, scoped, tag = 'scoped memory for tpu_custom_call.1']
    #allocation6 [shape = 's32[1]{0}', space=sflag, size = 0x4, scoped, tag = 'scoped memory for tpu_custom_call.1']
    #allocation7 [shape = 'u8[8192]{0}', space=vmem, size = 0x2000, scoped, tag = 'input window, operand 2, single buffered']
    #allocation8 [shape = 's32[1]{0}', space=sflag, size = 0x4, scoped, tag = 'scoped memory for tpu_custom_call.1']
    #allocation9 [shape = 'u8[16384]{0}', space=vmem, size = 0x4000, scoped, tag = 'input window, operand 3, single buffered']
    #allocation10 [shape = 'u8[16384]{0}', space=vmem, size = 0x4000, scoped, tag = 'input window, operand 4, single buffered']
    #allocation11 [shape = 's32[1]{0}', space=sflag, size = 0x4, scoped, tag = 'scoped memory for tpu_custom_call.1']
    #allocation12 [shape = 'u8[16384]{0}', space=vmem, size = 0x4000, scoped, tag = 'input window, operand 7, single buffered']
    #allocation13 [shape = 'u8[512]{0}', space=vmem, size = 0x400, scoped, tag = 'input window, operand 9, single buffered']
    #allocation14 [shape = 's32[1]{0}', space=sflag, size = 0x4, scoped, tag = 'scoped memory for tpu_custom_call.1']
    #allocation15 [shape = 'u8[16384]{0}', space=vmem, size = 0x4000, scoped, tag = 'input window, operand 10, single buffered']
    #allocation16 [shape = 'u8[512]{0}', space=vmem, size = 0x400, scoped, tag = 'input window, operand 11, single buffered']
    #allocation17 [shape = 's32[1]{0}', space=sflag, size = 0x4, scoped, tag = 'scoped memory for tpu_custom_call.1']
    #allocation18 [shape = 'u8[512]{0}', space=vmem, size = 0x400, scoped, tag = 'input window, operand 12, single buffered']
    #allocation19 [shape = 'u8[16384]{0}', space=vmem, size = 0x4000, scoped, tag = 'input window, operand 14, single buffered']
    #allocation20 [shape = 's32[1]{0}', space=sflag, size = 0x4, scoped, tag = 'scoped memory for tpu_custom_call.1']
    #allocation21 [shape = 'u8[1024]{0}', space=vmem, size = 0x400, scoped, tag = 'output window, operand 0, single buffered']
    %24 = vsyncpa [#allocation5], 0
    %25 = vsyncpa [#allocation8], 0
    %26 = vsyncpa [#allocation11], 0
    %27 = vsyncpa [#allocation14], 0
    %28 = vsyncpa [#allocation17], 0
    %29 = vsyncpa [#allocation20], 0
    %30 = vsyncpa [#allocation6], 0
    // Predicated region
    $region2: #{tpu_custom_call.1} parent=1 // pred_check
      _
    $region3: #{tpu_custom_call.1} parent=1 // pred_check_branch
      %32 = sbr.rel (0) target = $region5
    $region4: #{tpu_custom_call.1} parent=1 // pred_region
      %s34 = ssub.s32 512, 512
      %35 = vsyncadd [#allocation5], %s34
      %s36 = sshll.u32 [#allocation4], 4
      %s37 = int_to_ptr.vmem [resolvable:$true] %s36
      %42 = dma.hbm_to_vmem [thread:$0]  %s0, 512, %s37, [#allocation5], 128, 128, 8
    $region5: #{tpu_custom_call.1} parent=1 // pred_fallthru
      _
    // Predicated region
    $region6: #{tpu_custom_call.1} parent=1 // pred_check
      _
    $region7: #{tpu_custom_call.1} parent=1 // pred_check_branch
      %44 = sbr.rel (0) target = $region9
    $region8: #{tpu_custom_call.1} parent=1 // pred_region
      _
    $region9: #{tpu_custom_call.1} parent=1 // pred_fallthru
      _
    // Predicated region
    $region10: #{tpu_custom_call.1} parent=1 // pred_check
      _
    $region11: #{tpu_custom_call.1} parent=1 // pred_check_branch
      %46 = sbr.rel (0) target = $region13
    $region12: #{tpu_custom_call.1} parent=1 // pred_region
      %s48 = ssub.s32 256, 256
      %49 = vsyncadd [#allocation8], %s48
      %s50 = sshll.u32 [#allocation7], 4
      %s51 = int_to_ptr.vmem [resolvable:$true] %s50
      %56 = dma.hbm_to_vmem [thread:$0]  %s2, 256, %s51, [#allocation8], 128, 128, 8
    $region13: #{tpu_custom_call.1} parent=1 // pred_fallthru
      _
    // Predicated region
    $region14: #{tpu_custom_call.1} parent=1 // pred_check
      _
    $region15: #{tpu_custom_call.1} parent=1 // pred_check_branch
      %58 = sbr.rel (0) target = $region17
    $region16: #{tpu_custom_call.1} parent=1 // pred_region
      %s60 = ssub.s32 512, 512
      %61 = vsyncadd [#allocation8], %s60
      %s62 = sshll.u32 [#allocation9], 4
      %s63 = int_to_ptr.vmem [resolvable:$true] %s62
      %68 = dma.hbm_to_vmem [thread:$0]  %s3, 512, %s63, [#allocation8], 128, 128, 8
    $region17: #{tpu_custom_call.1} parent=1 // pred_fallthru
      _
    // Predicated region
    $region18: #{tpu_custom_call.1} parent=1 // pred_check
      _
    $region19: #{tpu_custom_call.1} parent=1 // pred_check_branch
      %70 = sbr.rel (0) target = $region21
    $region20: #{tpu_custom_call.1} parent=1 // pred_region
      %s72 = ssub.s32 512, 512
      %73 = vsyncadd [#allocation11], %s72
      %s74 = sshll.u32 [#allocation10], 4
      %s75 = int_to_ptr.vmem [resolvable:$true] %s74
      %80 = dma.hbm_to_vmem [thread:$0]  %s4, 512, %s75, [#allocation11], 128, 128, 8
    $region21: #{tpu_custom_call.1} parent=1 // pred_fallthru
      _
    // Predicated region
    $region22: #{tpu_custom_call.1} parent=1 // pred_check
      _
    $region23: #{tpu_custom_call.1} parent=1 // pred_check_branch
      %82 = sbr.rel (0) target = $region25
    $region24: #{tpu_custom_call.1} parent=1 // pred_region
      _
    $region25: #{tpu_custom_call.1} parent=1 // pred_fallthru
      _
    // Predicated region
    $region26: #{tpu_custom_call.1} parent=1 // pred_check
      _
    $region27: #{tpu_custom_call.1} parent=1 // pred_check_branch
      %84 = sbr.rel (0) target = $region29
    $region28: #{tpu_custom_call.1} parent=1 // pred_region
      _
    $region29: #{tpu_custom_call.1} parent=1 // pred_fallthru
      _
    // Predicated region
    $region30: #{tpu_custom_call.1} parent=1 // pred_check
      _
    $region31: #{tpu_custom_call.1} parent=1 // pred_check_branch
      %86 = sbr.rel (0) target = $region33
    $region32: #{tpu_custom_call.1} parent=1 // pred_region
      %s88 = ssub.s32 512, 512
      %89 = vsyncadd [#allocation11], %s88
      %s90 = sshll.u32 [#allocation12], 4
      %s91 = int_to_ptr.vmem [resolvable:$true] %s90
      %96 = dma.hbm_to_vmem [thread:$0]  %s7, 512, %s91, [#allocation11], 128, 128, 8
    $region33: #{tpu_custom_call.1} parent=1 // pred_fallthru
      _
    // Predicated region
    $region34: #{tpu_custom_call.1} parent=1 // pred_check
      _
    $region35: #{tpu_custom_call.1} parent=1 // pred_check_branch
      %98 = sbr.rel (0) target = $region37
    $region36: #{tpu_custom_call.1} parent=1 // pred_region
      _
    $region37: #{tpu_custom_call.1} parent=1 // pred_fallthru
      _
    // Predicated region
    $region38: #{tpu_custom_call.1} parent=1 // pred_check
      _
    $region39: #{tpu_custom_call.1} parent=1 // pred_check_branch
      %100 = sbr.rel (0) target = $region41
    $region40: #{tpu_custom_call.1} parent=1 // pred_region
      %s102 = ssub.s32 16, 16
      %103 = vsyncadd [#allocation14], %s102
      %s105 = sshll.u32 [#allocation13], 4
      %s106 = int_to_ptr.vmem [resolvable:$true] %s105
      %108 = dma.hbm_to_vmem [thread:$0]  %s9, 16, %s106, [#allocation14]
    $region41: #{tpu_custom_call.1} parent=1 // pred_fallthru
      _
    // Predicated region
    $region42: #{tpu_custom_call.1} parent=1 // pred_check
      _
    $region43: #{tpu_custom_call.1} parent=1 // pred_check_branch
      %110 = sbr.rel (0) target = $region45
    $region44: #{tpu_custom_call.1} parent=1 // pred_region
      %s112 = ssub.s32 512, 512
      %113 = vsyncadd [#allocation14], %s112
      %s114 = sshll.u32 [#allocation15], 4
      %s115 = int_to_ptr.vmem [resolvable:$true] %s114
      %120 = dma.hbm_to_vmem [thread:$0]  %s10, 512, %s115, [#allocation14], 128, 128, 8
    $region45: #{tpu_custom_call.1} parent=1 // pred_fallthru
      _
    // Predicated region
    $region46: #{tpu_custom_call.1} parent=1 // pred_check
      _
    $region47: #{tpu_custom_call.1} parent=1 // pred_check_branch
      %122 = sbr.rel (0) target = $region49
    $region48: #{tpu_custom_call.1} parent=1 // pred_region
      %s124 = ssub.s32 16, 16
      %125 = vsyncadd [#allocation17], %s124
      %s127 = sshll.u32 [#allocation16], 4
      %s128 = int_to_ptr.vmem [resolvable:$true] %s127
      %130 = dma.hbm_to_vmem [thread:$0]  %s11, 16, %s128, [#allocation17]
    $region49: #{tpu_custom_call.1} parent=1 // pred_fallthru
      _
    // Predicated region
    $region50: #{tpu_custom_call.1} parent=1 // pred_check
      _
    $region51: #{tpu_custom_call.1} parent=1 // pred_check_branch
      %132 = sbr.rel (0) target = $region53
    $region52: #{tpu_custom_call.1} parent=1 // pred_region
      %s134 = ssub.s32 16, 16
      %135 = vsyncadd [#allocation17], %s134
      %s137 = sshll.u32 [#allocation18], 4
      %s138 = int_to_ptr.vmem [resolvable:$true] %s137
      %140 = dma.hbm_to_vmem [thread:$0]  %s12, 16, %s138, [#allocation17]
    $region53: #{tpu_custom_call.1} parent=1 // pred_fallthru
      _
    // Predicated region
    $region54: #{tpu_custom_call.1} parent=1 // pred_check
      _
    $region55: #{tpu_custom_call.1} parent=1 // pred_check_branch
      %142 = sbr.rel (0) target = $region57
    $region56: #{tpu_custom_call.1} parent=1 // pred_region
      _
    $region57: #{tpu_custom_call.1} parent=1 // pred_fallthru
      _
    // Predicated region
    $region58: #{tpu_custom_call.1} parent=1 // pred_check
      _
    $region59: #{tpu_custom_call.1} parent=1 // pred_check_branch
      %144 = sbr.rel (0) target = $region61
    $region60: #{tpu_custom_call.1} parent=1 // pred_region
      %s146 = ssub.s32 512, 512
      %147 = vsyncadd [#allocation20], %s146
      %s148 = sshll.u32 [#allocation19], 4
      %s149 = int_to_ptr.vmem [resolvable:$true] %s148
      %154 = dma.hbm_to_vmem [thread:$0]  %s14, 512, %s149, [#allocation20], 128, 128, 8
    $region61: #{tpu_custom_call.1} parent=1 // pred_fallthru
      _
    // Predicated region
    $region62: #{tpu_custom_call.1} parent=1 // pred_check
      _
    $region63: #{tpu_custom_call.1} parent=1 // pred_check_branch
      %156 = sbr.rel (0) target = $region65
    $region64: #{tpu_custom_call.1} parent=1 // pred_region
      _
    $region65: #{tpu_custom_call.1} parent=1 // pred_fallthru
      _
    // Predicated region
    $region66: #{tpu_custom_call.1} parent=1 // pred_check
      _
    $region67: #{tpu_custom_call.1} parent=1 // pred_check_branch
      %158 = sbr.rel (0) target = $region69
    $region68: #{tpu_custom_call.1} parent=1 // pred_region
      _
    $region69: #{tpu_custom_call.1} parent=1 // pred_fallthru
      _
    // Predicated region
    $region70: #{tpu_custom_call.1} parent=1 // pred_check
      _
    $region71: #{tpu_custom_call.1} parent=1 // pred_check_branch
      %160 = sbr.rel (0) target = $region73
    $region72: #{tpu_custom_call.1} parent=1 // pred_region
      _
    $region73: #{tpu_custom_call.1} parent=1 // pred_fallthru
      _
    // Predicated region
    $region74: #{tpu_custom_call.1} parent=1 // pred_check
      _
    $region75: #{tpu_custom_call.1} parent=1 // pred_check_branch
      %162 = sbr.rel (0) target = $region77
    $region76: #{tpu_custom_call.1} parent=1 // pred_region
      _
    $region77: #{tpu_custom_call.1} parent=1 // pred_fallthru
      _
    // Predicated region
    $region78: #{tpu_custom_call.1} parent=1 // pred_check
      _
    $region79: #{tpu_custom_call.1} parent=1 // pred_check_branch
      %164 = sbr.rel (0) target = $region81
    $region80: #{tpu_custom_call.1} parent=1 // pred_region
      %165 = dma.done [#allocation5], 512
    $region81: #{tpu_custom_call.1} parent=1 // pred_fallthru
      _
    // Predicated region
    $region82: #{tpu_custom_call.1} parent=1 // pred_check
      _
    $region83: #{tpu_custom_call.1} parent=1 // pred_check_branch
      %167 = sbr.rel (0) target = $region85
    $region84: #{tpu_custom_call.1} parent=1 // pred_region
      %168 = dma.done [#allocation8], 256
    $region85: #{tpu_custom_call.1} parent=1 // pred_fallthru
      _
    // Predicated region
    $region86: #{tpu_custom_call.1} parent=1 // pred_check
      _
    $region87: #{tpu_custom_call.1} parent=1 // pred_check_branch
      %170 = sbr.rel (0) target = $region89
    $region88: #{tpu_custom_call.1} parent=1 // pred_region
      %171 = dma.done [#allocation8], 512
    $region89: #{tpu_custom_call.1} parent=1 // pred_fallthru
      _
    // Predicated region
    $region90: #{tpu_custom_call.1} parent=1 // pred_check
      _
    $region91: #{tpu_custom_call.1} parent=1 // pred_check_branch
      %173 = sbr.rel (0) target = $region93
    $region92: #{tpu_custom_call.1} parent=1 // pred_region
      %174 = dma.done [#allocation11], 512
    $region93: #{tpu_custom_call.1} parent=1 // pred_fallthru
      _
    // Predicated region
    $region94: #{tpu_custom_call.1} parent=1 // pred_check
      _
    $region95: #{tpu_custom_call.1} parent=1 // pred_check_branch
      %176 = sbr.rel (0) target = $region97
    $region96: #{tpu_custom_call.1} parent=1 // pred_region
      %177 = dma.done [#allocation11], 512
    $region97: #{tpu_custom_call.1} parent=1 // pred_fallthru
      _
    // Predicated region
    $region98: #{tpu_custom_call.1} parent=1 // pred_check
      _
    $region99: #{tpu_custom_call.1} parent=1 // pred_check_branch
      %179 = sbr.rel (0) target = $region101
    $region100: #{tpu_custom_call.1} parent=1 // pred_region
      %180 = dma.done [#allocation14], 16
    $region101: #{tpu_custom_call.1} parent=1 // pred_fallthru
      _
    // Predicated region
    $region102: #{tpu_custom_call.1} parent=1 // pred_check
      _
    $region103: #{tpu_custom_call.1} parent=1 // pred_check_branch
      %182 = sbr.rel (0) target = $region105
    $region104: #{tpu_custom_call.1} parent=1 // pred_region
      %183 = dma.done [#allocation14], 512
    $region105: #{tpu_custom_call.1} parent=1 // pred_fallthru
      _
    // Predicated region
    $region106: #{tpu_custom_call.1} parent=1 // pred_check
      _
    $region107: #{tpu_custom_call.1} parent=1 // pred_check_branch
      %185 = sbr.rel (0) target = $region109
    $region108: #{tpu_custom_call.1} parent=1 // pred_region
      %186 = dma.done [#allocation17], 16
    $region109: #{tpu_custom_call.1} parent=1 // pred_fallthru
      _
    // Predicated region
    $region110: #{tpu_custom_call.1} parent=1 // pred_check
      _
    $region111: #{tpu_custom_call.1} parent=1 // pred_check_branch
      %188 = sbr.rel (0) target = $region113
    $region112: #{tpu_custom_call.1} parent=1 // pred_region
      %189 = dma.done [#allocation17], 16
    $region113: #{tpu_custom_call.1} parent=1 // pred_fallthru
      _
    // Predicated region
    $region114: #{tpu_custom_call.1} parent=1 // pred_check
      _
    $region115: #{tpu_custom_call.1} parent=1 // pred_check_branch
      %191 = sbr.rel (0) target = $region117
    $region116: #{tpu_custom_call.1} parent=1 // pred_region
      %192 = dma.done [#allocation20], 512
    $region117: #{tpu_custom_call.1} parent=1 // pred_fallthru
      _
    %v193 = vld [vmem:[#allocation4] sm:$0xff]
    %v194 = vld [vmem:[#allocation4 + $0x8] sm:$0xff]
    %v195 = vld [vmem:[#allocation4 + $0x10] sm:$0xff]
    %v196 = vld [vmem:[#allocation4 + $0x18] sm:$0xff]
    %v197 = vld [vmem:[#allocation9] sm:$0xff]
    %v198 = vld [vmem:[#allocation9 + $0x8] sm:$0xff]
    %v199 = vld [vmem:[#allocation9 + $0x10] sm:$0xff]
    %v200 = vld [vmem:[#allocation9 + $0x18] sm:$0xff]
    %v201 = vld [vmem:[%s5] sm:$0x1]
    %v203 = vlaneseq
    %v204 = vshrl.u32 %v203, 7
    %v205 = vsub.s32 0, %v204
    %v206 = vrot.slane %v201, %v205
    %vm208 = vcmask 261120
    %v210 = vsel %vm208, %v193, 0
    %v213 = vsel %vm208, %v194, 0
    %v216 = vsel %vm208, %v195, 0
    %v219 = vsel %vm208, %v196, 0
    %221 = vmatprep.subr.mxu0 0.0
    %222 = vmatpush1.msra.mxu0 %v197
    %223 = vmatprep.subr.mxu0 0.0
    %224 = vmatpush1.msra.mxu0 %v198
    %225 = vmatprep.subr.mxu0 0.0
    %226 = vmatpush1.msra.mxu0 %v199
    %227 = vmatprep.subr.mxu0 0.0
    %228 = vmatpush1.msra.mxu0 %v200
    %229 = vmatprep.subr.mxu0 0.0
    %230 = vmatpush1.msra.mxu0 0.0
    %231 = vmatprep.subr.mxu0 0.0
    %232 = vmatpush1.msra.mxu0 0.0
    %233 = vmatprep.subr.mxu0 0.0
    %234 = vmatpush1.msra.mxu0 0.0
    %235 = vmatprep.subr.mxu0 0.0
    %236 = vmatpush1.msra.mxu0 0.0
    %237 = vmatprep.subr.mxu0 0.0
    %238 = vmatpush1.msra.mxu0 0.0
    %239 = vmatprep.subr.mxu0 0.0
    %240 = vmatpush1.msra.mxu0 0.0
    %241 = vmatprep.subr.mxu0 0.0
    %242 = vmatpush1.msra.mxu0 0.0
    %243 = vmatprep.subr.mxu0 0.0
    %244 = vmatpush1.msra.mxu0 0.0
    %245 = vmatprep.subr.mxu0 0.0
    %246 = vmatpush1.msra.mxu0 0.0
    %247 = vmatprep.subr.mxu0 0.0
    %248 = vmatpush1.msra.mxu0 0.0
    %249 = vmatprep.subr.mxu0 0.0
    %250 = vmatpush1.msra.mxu0 0.0
    %251 = vmatprep.subr.mxu0 0.0
    %252 = vmatpush1.msra.mxu0 0.0
    %253 = vmatprep.subr.mxu0 0.0
    %254 = vmatpush1.msra.mxu0 0.0
    %255 = vmatprep.subr.mxu0 0.0
    %256 = vmatpush1.msra.mxu0 0.0
    %257 = vmatprep.subr.mxu0 0.0
    %258 = vmatpush1.msra.mxu0 0.0
    %259 = vmatprep.subr.mxu0 0.0
    %260 = vmatpush1.msra.mxu0 0.0
    %261 = vmatprep.subr.mxu0 0.0
    %262 = vmatpush1.msra.mxu0 0.0
    %263 = vmatprep.subr.mxu0 0.0
    %264 = vmatpush1.msra.mxu0 0.0
    %265 = vmatprep.subr.mxu0 0.0
    %266 = vmatpush1.msra.mxu0 0.0
    %267 = vmatprep.subr.mxu0 0.0
    %268 = vmatpush1.msra.mxu0 0.0
    %269 = vmatprep.subr.mxu0 0.0
    %270 = vmatpush1.msra.mxu0 0.0
    %271 = vmatprep.subr.mxu0 0.0
    %272 = vmatpush1.msra.mxu0 0.0
    %273 = vmatprep.subr.mxu0 0.0
    %274 = vmatpush1.msra.mxu0 0.0
    %275 = vmatprep.subr.mxu0 0.0
    %276 = vmatpush1.msra.mxu0 0.0
    %277 = vmatprep.subr.mxu0 0.0
    %278 = vmatpush1.msra.mxu0 0.0
    %279 = vmatprep.subr.mxu0 0.0
    %280 = vmatpush1.msra.mxu0 0.0
    %281 = vmatprep.subr.mxu0 0.0
    %282 = vmatpush1.msra.mxu0 0.0
    %283 = vmatprep.subr.mxu0 0.0
    %284 = vmatpush1.msra.mxu0 0.0
    %285 = vmatprep.mubr.f32.mxu0 0.0
    %286 = vmatmul.mubr.f32.gmra.mrb[0].mxu0 %v210
    %v287 = vpop.f32.mrb[0].mxu0
    %v288 = vadd.f32 %v206, %v287
    %v289 = vpop.f32.mrb[0].mxu0
    %290 = vmatprep.mubr.f32.mxu0 0.0
    %291 = vmatmul.mubr.f32.gmra.mrb[0].mxu0 %v213
    %v292 = vpop.f32.mrb[0].mxu0
    %v293 = vadd.f32 %v206, %v292
    %v294 = vpop.f32.mrb[0].mxu0
    %295 = vmatprep.mubr.f32.mxu0 0.0
    %296 = vmatmul.mubr.f32.gmra.mrb[0].mxu0 %v216
    %v297 = vpop.f32.mrb[0].mxu0
    %v298 = vadd.f32 %v206, %v297
    %v299 = vpop.f32.mrb[0].mxu0
    %300 = vmatprep.mubr.f32.mxu0 0.0
    %301 = vmatmul.mubr.f32.gmra.mrb[0].mxu0 %v219
    %v302 = vpop.f32.mrb[0].mxu0
    %v303 = vadd.f32 %v206, %v302
    %v304 = vpop.f32.mrb[0].mxu0
    %305 = vdwg.mxu0
    %v306 = vld [vmem:[#allocation10] sm:$0xff]
    %v307 = vld [vmem:[#allocation10 + $0x8] sm:$0xff]
    %v308 = vld [vmem:[#allocation10 + $0x10] sm:$0xff]
    %v309 = vld [vmem:[#allocation10 + $0x18] sm:$0xff]
    %v310 = vld [vmem:[%s6] sm:$0x1]
    %v312 = vlaneseq
    %v313 = vshrl.u32 %v312, 7
    %v314 = vsub.s32 0, %v313
    %v315 = vrot.slane %v310, %v314
    %v318 = vsel %vm208, 0.0, 0
    %320 = vmatprep.subr.mxu0 0.0
    %321 = vmatpush1.msra.mxu0 %v306
    %322 = vmatprep.subr.mxu0 0.0
    %323 = vmatpush1.msra.mxu0 %v307
    %324 = vmatprep.subr.mxu0 0.0
    %325 = vmatpush1.msra.mxu0 %v308
    %326 = vmatprep.subr.mxu0 0.0
    %327 = vmatpush1.msra.mxu0 %v309
    %328 = vmatprep.subr.mxu0 0.0
    %329 = vmatpush1.msra.mxu0 0.0
    %330 = vmatprep.subr.mxu0 0.0
    %331 = vmatpush1.msra.mxu0 0.0
    %332 = vmatprep.subr.mxu0 0.0
    %333 = vmatpush1.msra.mxu0 0.0
    %334 = vmatprep.subr.mxu0 0.0
    %335 = vmatpush1.msra.mxu0 0.0
    %336 = vmatprep.subr.mxu0 0.0
    %337 = vmatpush1.msra.mxu0 0.0
    %338 = vmatprep.subr.mxu0 0.0
    %339 = vmatpush1.msra.mxu0 0.0
    %340 = vmatprep.subr.mxu0 0.0
    %341 = vmatpush1.msra.mxu0 0.0
    %342 = vmatprep.subr.mxu0 0.0
    %343 = vmatpush1.msra.mxu0 0.0
    %344 = vmatprep.subr.mxu0 0.0
    %345 = vmatpush1.msra.mxu0 0.0
    %346 = vmatprep.subr.mxu0 0.0
    %347 = vmatpush1.msra.mxu0 0.0
    %348 = vmatprep.subr.mxu0 0.0
    %349 = vmatpush1.msra.mxu0 0.0
    %350 = vmatprep.subr.mxu0 0.0
    %351 = vmatpush1.msra.mxu0 0.0
    %352 = vmatprep.subr.mxu0 0.0
    %353 = vmatpush1.msra.mxu0 0.0
    %354 = vmatprep.subr.mxu0 0.0
    %355 = vmatpush1.msra.mxu0 0.0
    %356 = vmatprep.subr.mxu0 0.0
    %357 = vmatpush1.msra.mxu0 0.0
    %358 = vmatprep.subr.mxu0 0.0
    %359 = vmatpush1.msra.mxu0 0.0
    %360 = vmatprep.subr.mxu0 0.0
    %361 = vmatpush1.msra.mxu0 0.0
    %362 = vmatprep.subr.mxu0 0.0
    %363 = vmatpush1.msra.mxu0 0.0
    %364 = vmatprep.subr.mxu0 0.0
    %365 = vmatpush1.msra.mxu0 0.0
    %366 = vmatprep.subr.mxu0 0.0
    %367 = vmatpush1.msra.mxu0 0.0
    %368 = vmatprep.subr.mxu0 0.0
    %369 = vmatpush1.msra.mxu0 0.0
    %370 = vmatprep.subr.mxu0 0.0
    %371 = vmatpush1.msra.mxu0 0.0
    %372 = vmatprep.subr.mxu0 0.0
    %373 = vmatpush1.msra.mxu0 0.0
    %374 = vmatprep.subr.mxu0 0.0
    %375 = vmatpush1.msra.mxu0 0.0
    %376 = vmatprep.subr.mxu0 0.0
    %377 = vmatpush1.msra.mxu0 0.0
    %378 = vmatprep.subr.mxu0 0.0
    %379 = vmatpush1.msra.mxu0 0.0
    %380 = vmatprep.subr.mxu0 0.0
    %381 = vmatpush1.msra.mxu0 0.0
    %382 = vmatprep.subr.mxu0 0.0
    %383 = vmatpush1.msra.mxu0 0.0
    %384 = vmatprep.mubr.f32.mxu0 0.0
    %385 = vmatmul.mubr.f32.gmra.mrb[0].mxu0 %v318
    %v386 = vpop.f32.mrb[0].mxu0
    %v387 = vadd.f32 %v315, %v386
    %v388 = vpop.f32.mrb[0].mxu0
    %389 = vdwg.mxu0
    %v390 = vadd.f32 %v288, %v387
    %v391 = vxor.u32 %v390, 2147483648
    %v392 = vmul.f32 %v391, 1.442695
    %v393 = vpow.pop %v392
    %v394 = vadd.f32 %v393, 1.0
    %v395 = vrcp.pop %v394
    %v396 = vmul.f32 1.0, %v395
    %398 = vrot.lane.b32.xlu0 %v387, 64
    %v399 = vpop.permute.xlu0 %398
    %v401 = vmul.f32 %v396, %v399
    %403 = vrot.lane.b32.xlu0 %v401, 64
    %v404 = vpop.permute.xlu0 %403
    %v406 = vadd.f32 %v288, %v404
    %v407 = vtanh.pop %v406
    %v408 = vsub.f32 1.0, %v396
    %410 = vrot.lane.b32.xlu0 %v407, 96
    %v411 = vpop.permute.xlu0 %410
    %v413 = vmul.f32 %v408, %v411
    %v414 = vmul.f32 %v396, 0.0
    %v415 = vadd.f32 %v413, %v414
    %417 = vrot.lane.b32.xlu0 %v415, 96
    %v418 = vpop.permute.xlu0 %417
    %vm420 = vcmask 254976
    %421 = vst.msk [vmem:[#allocation2] sm:$0x3] %vm420, %v418
    %vm422 = vcmask 257026
    %423 = vst.msk [vmem:[#allocation3 - $0x2] sm:$0xc] %vm422, %v418
    %v424 = vsel %vm208, %v418, 0
    %426 = vmatprep.subr.mxu0 0.0
    %427 = vmatpush1.msra.mxu0 %v306
    %428 = vmatprep.subr.mxu0 0.0
    %429 = vmatpush1.msra.mxu0 %v307
    %430 = vmatprep.subr.mxu0 0.0
    %431 = vmatpush1.msra.mxu0 %v308
    %432 = vmatprep.subr.mxu0 0.0
    %433 = vmatpush1.msra.mxu0 %v309
    %434 = vmatprep.subr.mxu0 0.0
    %435 = vmatpush1.msra.mxu0 0.0
    %436 = vmatprep.subr.mxu0 0.0
    %437 = vmatpush1.msra.mxu0 0.0
    %438 = vmatprep.subr.mxu0 0.0
    %439 = vmatpush1.msra.mxu0 0.0
    %440 = vmatprep.subr.mxu0 0.0
    %441 = vmatpush1.msra.mxu0 0.0
    %442 = vmatprep.subr.mxu0 0.0
    %443 = vmatpush1.msra.mxu0 0.0
    %444 = vmatprep.subr.mxu0 0.0
    %445 = vmatpush1.msra.mxu0 0.0
    %446 = vmatprep.subr.mxu0 0.0
    %447 = vmatpush1.msra.mxu0 0.0
    %448 = vmatprep.subr.mxu0 0.0
    %449 = vmatpush1.msra.mxu0 0.0
    %450 = vmatprep.subr.mxu0 0.0
    %451 = vmatpush1.msra.mxu0 0.0
    %452 = vmatprep.subr.mxu0 0.0
    %453 = vmatpush1.msra.mxu0 0.0
    %454 = vmatprep.subr.mxu0 0.0
    %455 = vmatpush1.msra.mxu0 0.0
    %456 = vmatprep.subr.mxu0 0.0
    %457 = vmatpush1.msra.mxu0 0.0
    %458 = vmatprep.subr.mxu0 0.0
    %459 = vmatpush1.msra.mxu0 0.0
    %460 = vmatprep.subr.mxu0 0.0
    %461 = vmatpush1.msra.mxu0 0.0
    %462 = vmatprep.subr.mxu0 0.0
    %463 = vmatpush1.msra.mxu0 0.0
    %464 = vmatprep.subr.mxu0 0.0
    %465 = vmatpush1.msra.mxu0 0.0
    %466 = vmatprep.subr.mxu0 0.0
    %467 = vmatpush1.msra.mxu0 0.0
    %468 = vmatprep.subr.mxu0 0.0
    %469 = vmatpush1.msra.mxu0 0.0
    %470 = vmatprep.subr.mxu0 0.0
    %471 = vmatpush1.msra.mxu0 0.0
    %472 = vmatprep.subr.mxu0 0.0
    %473 = vmatpush1.msra.mxu0 0.0
    %474 = vmatprep.subr.mxu0 0.0
    %475 = vmatpush1.msra.mxu0 0.0
    %476 = vmatprep.subr.mxu0 0.0
    %477 = vmatpush1.msra.mxu0 0.0
    %478 = vmatprep.subr.mxu0 0.0
    %479 = vmatpush1.msra.mxu0 0.0
    %480 = vmatprep.subr.mxu0 0.0
    %481 = vmatpush1.msra.mxu0 0.0
    %482 = vmatprep.subr.mxu0 0.0
    %483 = vmatpush1.msra.mxu0 0.0
    %484 = vmatprep.subr.mxu0 0.0
    %485 = vmatpush1.msra.mxu0 0.0
    %486 = vmatprep.subr.mxu0 0.0
    %487 = vmatpush1.msra.mxu0 0.0
    %488 = vmatprep.subr.mxu0 0.0
    %489 = vmatpush1.msra.mxu0 0.0
    %490 = vmatprep.mubr.f32.mxu0 0.0
    %491 = vmatmul.mubr.f32.gmra.mrb[0].mxu0 %v424
    %v492 = vpop.f32.mrb[0].mxu0
    %v493 = vadd.f32 %v315, %v492
    %v494 = vpop.f32.mrb[0].mxu0
    %495 = vdwg.mxu0
    %v497 = vrot.slane %v493, 4
    %v499 = vadd.f32 %v288, %v497
    %v500 = vxor.u32 %v499, 2147483648
    %v501 = vmul.f32 %v500, 1.442695
    %v502 = vpow.pop %v501
    %v503 = vadd.f32 %v502, 1.0
    %v504 = vrcp.pop %v503
    %v505 = vmul.f32 1.0, %v504
    %506 = vrot.lane.b32.xlu0 %v497, 64
    %v507 = vpop.permute.xlu0 %506
    %v509 = vmul.f32 %v505, %v507
    %511 = vrot.lane.b32.xlu0 %v509, 64
    %v512 = vpop.permute.xlu0 %511
    %v514 = vadd.f32 %v288, %v512
    %v515 = vtanh.pop %v514
    %v516 = vsub.f32 1.0, %v505
    %518 = vrot.lane.b32.xlu0 %v515, 96
    %v519 = vpop.permute.xlu0 %518
    %v521 = vmul.f32 %v516, %v519
    %v522 = vrot.slane %v415, 4
    %v524 = vmul.f32 %v505, %v522
    %v525 = vadd.f32 %v521, %v524
    %527 = vrot.lane.b32.xlu0 %v525, 96
    %v528 = vpop.permute.xlu0 %527
    %vm530 = vcmask 259076
    %531 = vst.msk [vmem:[#allocation2 - $0x2] sm:$0x30] %vm530, %v528
    %vm532 = vcmask 261126
    %533 = vst.msk [vmem:[#allocation3 - $0x4] sm:$0xc0] %vm532, %v528
    %v534 = vrot.slane %v525, 4
    %535 = vrot.lane.b32.xlu0 %v534, 96
    %v536 = vpop.permute.xlu0 %535
    %v537 = vsel %vm208, %v536, 0
    %539 = vmatprep.subr.mxu0 0.0
    %540 = vmatpush1.msra.mxu0 %v306
    %541 = vmatprep.subr.mxu0 0.0
    %542 = vmatpush1.msra.mxu0 %v307
    %543 = vmatprep.subr.mxu0 0.0
    %544 = vmatpush1.msra.mxu0 %v308
    %545 = vmatprep.subr.mxu0 0.0
    %546 = vmatpush1.msra.mxu0 %v309
    %547 = vmatprep.subr.mxu0 0.0
    %548 = vmatpush1.msra.mxu0 0.0
    %549 = vmatprep.subr.mxu0 0.0
    %550 = vmatpush1.msra.mxu0 0.0
    %551 = vmatprep.subr.mxu0 0.0
    %552 = vmatpush1.msra.mxu0 0.0
    %553 = vmatprep.subr.mxu0 0.0
    %554 = vmatpush1.msra.mxu0 0.0
    %555 = vmatprep.subr.mxu0 0.0
    %556 = vmatpush1.msra.mxu0 0.0
    %557 = vmatprep.subr.mxu0 0.0
    %558 = vmatpush1.msra.mxu0 0.0
    %559 = vmatprep.subr.mxu0 0.0
    %560 = vmatpush1.msra.mxu0 0.0
    %561 = vmatprep.subr.mxu0 0.0
    %562 = vmatpush1.msra.mxu0 0.0
    %563 = vmatprep.subr.mxu0 0.0
    %564 = vmatpush1.msra.mxu0 0.0
    %565 = vmatprep.subr.mxu0 0.0
    %566 = vmatpush1.msra.mxu0 0.0
    %567 = vmatprep.subr.mxu0 0.0
    %568 = vmatpush1.msra.mxu0 0.0
    %569 = vmatprep.subr.mxu0 0.0
    %570 = vmatpush1.msra.mxu0 0.0
    %571 = vmatprep.subr.mxu0 0.0
    %572 = vmatpush1.msra.mxu0 0.0
    %573 = vmatprep.subr.mxu0 0.0
    %574 = vmatpush1.msra.mxu0 0.0
    %575 = vmatprep.subr.mxu0 0.0
    %576 = vmatpush1.msra.mxu0 0.0
    %577 = vmatprep.subr.mxu0 0.0
    %578 = vmatpush1.msra.mxu0 0.0
    %579 = vmatprep.subr.mxu0 0.0
    %580 = vmatpush1.msra.mxu0 0.0
    %581 = vmatprep.subr.mxu0 0.0
    %582 = vmatpush1.msra.mxu0 0.0
    %583 = vmatprep.subr.mxu0 0.0
    %584 = vmatpush1.msra.mxu0 0.0
    %585 = vmatprep.subr.mxu0 0.0
    %586 = vmatpush1.msra.mxu0 0.0
    %587 = vmatprep.subr.mxu0 0.0
    %588 = vmatpush1.msra.mxu0 0.0
    %589 = vmatprep.subr.mxu0 0.0
    %590 = vmatpush1.msra.mxu0 0.0
    %591 = vmatprep.subr.mxu0 0.0
    %592 = vmatpush1.msra.mxu0 0.0
    %593 = vmatprep.subr.mxu0 0.0
    %594 = vmatpush1.msra.mxu0 0.0
    %595 = vmatprep.subr.mxu0 0.0
    %596 = vmatpush1.msra.mxu0 0.0
    %597 = vmatprep.subr.mxu0 0.0
    %598 = vmatpush1.msra.mxu0 0.0
    %599 = vmatprep.subr.mxu0 0.0
    %600 = vmatpush1.msra.mxu0 0.0
    %601 = vmatprep.subr.mxu0 0.0
    %602 = vmatpush1.msra.mxu0 0.0
    %603 = vmatprep.mubr.f32.mxu0 0.0
    %604 = vmatmul.mubr.f32.gmra.mrb[0].mxu0 %v537
    %v605 = vpop.f32.mrb[0].mxu0
    %v606 = vadd.f32 %v315, %v605
    %v607 = vpop.f32.mrb[0].mxu0
    %608 = vdwg.mxu0
    %v609 = vadd.f32 %v293, %v606
    %v610 = vxor.u32 %v609, 2147483648
    %v611 = vmul.f32 %v610, 1.442695
    %v612 = vpow.pop %v611
    %v613 = vadd.f32 %v612, 1.0
    %v614 = vrcp.pop %v613
    %v615 = vmul.f32 1.0, %v614
    %617 = vrot.lane.b32.xlu0 %v606, 64
    %v618 = vpop.permute.xlu0 %617
    %v620 = vmul.f32 %v615, %v618
    %622 = vrot.lane.b32.xlu0 %v620, 64
    %v623 = vpop.permute.xlu0 %622
    %v625 = vadd.f32 %v293, %v623
    %v626 = vtanh.pop %v625
    %v627 = vsub.f32 1.0, %v615
    %629 = vrot.lane.b32.xlu0 %v626, 96
    %v630 = vpop.permute.xlu0 %629
    %v632 = vmul.f32 %v627, %v630
    %v634 = vmul.f32 %v615, %v534
    %v635 = vadd.f32 %v632, %v634
    %637 = vrot.lane.b32.xlu0 %v635, 96
    %v638 = vpop.permute.xlu0 %637
    %640 = vst.msk [vmem:[#allocation2 + $0x4] sm:$0x3] %vm420, %v638
    %641 = vst.msk [vmem:[#allocation3 + $0x2] sm:$0xc] %vm422, %v638
    %v642 = vsel %vm208, %v638, 0
    %644 = vmatprep.subr.mxu0 0.0
    %645 = vmatpush1.msra.mxu0 %v306
    %646 = vmatprep.subr.mxu0 0.0
    %647 = vmatpush1.msra.mxu0 %v307
    %648 = vmatprep.subr.mxu0 0.0
    %649 = vmatpush1.msra.mxu0 %v308
    %650 = vmatprep.subr.mxu0 0.0
    %651 = vmatpush1.msra.mxu0 %v309
    %652 = vmatprep.subr.mxu0 0.0
    %653 = vmatpush1.msra.mxu0 0.0
    %654 = vmatprep.subr.mxu0 0.0
    %655 = vmatpush1.msra.mxu0 0.0
    %656 = vmatprep.subr.mxu0 0.0
    %657 = vmatpush1.msra.mxu0 0.0
    %658 = vmatprep.subr.mxu0 0.0
    %659 = vmatpush1.msra.mxu0 0.0
    %660 = vmatprep.subr.mxu0 0.0
    %661 = vmatpush1.msra.mxu0 0.0
    %662 = vmatprep.subr.mxu0 0.0
    %663 = vmatpush1.msra.mxu0 0.0
    %664 = vmatprep.subr.mxu0 0.0
    %665 = vmatpush1.msra.mxu0 0.0
    %666 = vmatprep.subr.mxu0 0.0
    %667 = vmatpush1.msra.mxu0 0.0
    %668 = vmatprep.subr.mxu0 0.0
    %669 = vmatpush1.msra.mxu0 0.0
    %670 = vmatprep.subr.mxu0 0.0
    %671 = vmatpush1.msra.mxu0 0.0
    %672 = vmatprep.subr.mxu0 0.0
    %673 = vmatpush1.msra.mxu0 0.0
    %674 = vmatprep.subr.mxu0 0.0
    %675 = vmatpush1.msra.mxu0 0.0
    %676 = vmatprep.subr.mxu0 0.0
    %677 = vmatpush1.msra.mxu0 0.0
    %678 = vmatprep.subr.mxu0 0.0
    %679 = vmatpush1.msra.mxu0 0.0
    %680 = vmatprep.subr.mxu0 0.0
    %681 = vmatpush1.msra.mxu0 0.0
    %682 = vmatprep.subr.mxu0 0.0
    %683 = vmatpush1.msra.mxu0 0.0
    %684 = vmatprep.subr.mxu0 0.0
    %685 = vmatpush1.msra.mxu0 0.0
    %686 = vmatprep.subr.mxu0 0.0
    %687 = vmatpush1.msra.mxu0 0.0
    %688 = vmatprep.subr.mxu0 0.0
    %689 = vmatpush1.msra.mxu0 0.0
    %690 = vmatprep.subr.mxu0 0.0
    %691 = vmatpush1.msra.mxu0 0.0
    %692 = vmatprep.subr.mxu0 0.0
    %693 = vmatpush1.msra.mxu0 0.0
    %694 = vmatprep.subr.mxu0 0.0
    %695 = vmatpush1.msra.mxu0 0.0
    %696 = vmatprep.subr.mxu0 0.0
    %697 = vmatpush1.msra.mxu0 0.0
    %698 = vmatprep.subr.mxu0 0.0
    %699 = vmatpush1.msra.mxu0 0.0
    %700 = vmatprep.subr.mxu0 0.0
    %701 = vmatpush1.msra.mxu0 0.0
    %702 = vmatprep.subr.mxu0 0.0
    %703 = vmatpush1.msra.mxu0 0.0
    %704 = vmatprep.subr.mxu0 0.0
    %705 = vmatpush1.msra.mxu0 0.0
    %706 = vmatprep.subr.mxu0 0.0
    %707 = vmatpush1.msra.mxu0 0.0
    %708 = vmatprep.mubr.f32.mxu0 0.0
    %709 = vmatmul.mubr.f32.gmra.mrb[0].mxu0 %v642
    %v710 = vpop.f32.mrb[0].mxu0
    %v711 = vadd.f32 %v315, %v710
    %v712 = vpop.f32.mrb[0].mxu0
    %713 = vdwg.mxu0
    %v715 = vrot.slane %v711, 4
    %v717 = vadd.f32 %v293, %v715
    %v718 = vxor.u32 %v717, 2147483648
    %v719 = vmul.f32 %v718, 1.442695
    %v720 = vpow.pop %v719
    %v721 = vadd.f32 %v720, 1.0
    %v722 = vrcp.pop %v721
    %v723 = vmul.f32 1.0, %v722
    %724 = vrot.lane.b32.xlu0 %v715, 64
    %v725 = vpop.permute.xlu0 %724
    %v727 = vmul.f32 %v723, %v725
    %729 = vrot.lane.b32.xlu0 %v727, 64
    %v730 = vpop.permute.xlu0 %729
    %v732 = vadd.f32 %v293, %v730
    %v733 = vtanh.pop %v732
    %v734 = vsub.f32 1.0, %v723
    %736 = vrot.lane.b32.xlu0 %v733, 96
    %v737 = vpop.permute.xlu0 %736
    %v739 = vmul.f32 %v734, %v737
    %v740 = vrot.slane %v635, 4
    %v742 = vmul.f32 %v723, %v740
    %v743 = vadd.f32 %v739, %v742
    %745 = vrot.lane.b32.xlu0 %v743, 96
    %v746 = vpop.permute.xlu0 %745
    %748 = vst.msk [vmem:[#allocation2 + $0x2] sm:$0x30] %vm530, %v746
    %749 = vst.msk [vmem:[#allocation3] sm:$0xc0] %vm532, %v746
    %v750 = vrot.slane %v743, 4
    %751 = vrot.lane.b32.xlu0 %v750, 96
    %v752 = vpop.permute.xlu0 %751
    %v753 = vsel %vm208, %v752, 0
    %755 = vmatprep.subr.mxu0 0.0
    %756 = vmatpush1.msra.mxu0 %v306
    %757 = vmatprep.subr.mxu0 0.0
    %758 = vmatpush1.msra.mxu0 %v307
    %759 = vmatprep.subr.mxu0 0.0
    %760 = vmatpush1.msra.mxu0 %v308
    %761 = vmatprep.subr.mxu0 0.0
    %762 = vmatpush1.msra.mxu0 %v309
    %763 = vmatprep.subr.mxu0 0.0
    %764 = vmatpush1.msra.mxu0 0.0
    %765 = vmatprep.subr.mxu0 0.0
    %766 = vmatpush1.msra.mxu0 0.0
    %767 = vmatprep.subr.mxu0 0.0
    %768 = vmatpush1.msra.mxu0 0.0
    %769 = vmatprep.subr.mxu0 0.0
    %770 = vmatpush1.msra.mxu0 0.0
    %771 = vmatprep.subr.mxu0 0.0
    %772 = vmatpush1.msra.mxu0 0.0
    %773 = vmatprep.subr.mxu0 0.0
    %774 = vmatpush1.msra.mxu0 0.0
    %775 = vmatprep.subr.mxu0 0.0
    %776 = vmatpush1.msra.mxu0 0.0
    %777 = vmatprep.subr.mxu0 0.0
    %778 = vmatpush1.msra.mxu0 0.0
    %779 = vmatprep.subr.mxu0 0.0
    %780 = vmatpush1.msra.mxu0 0.0
    %781 = vmatprep.subr.mxu0 0.0
    %782 = vmatpush1.msra.mxu0 0.0
    %783 = vmatprep.subr.mxu0 0.0
    %784 = vmatpush1.msra.mxu0 0.0
    %785 = vmatprep.subr.mxu0 0.0
    %786 = vmatpush1.msra.mxu0 0.0
    %787 = vmatprep.subr.mxu0 0.0
    %788 = vmatpush1.msra.mxu0 0.0
    %789 = vmatprep.subr.mxu0 0.0
    %790 = vmatpush1.msra.mxu0 0.0
    %791 = vmatprep.subr.mxu0 0.0
    %792 = vmatpush1.msra.mxu0 0.0
    %793 = vmatprep.subr.mxu0 0.0
    %794 = vmatpush1.msra.mxu0 0.0
    %795 = vmatprep.subr.mxu0 0.0
    %796 = vmatpush1.msra.mxu0 0.0
    %797 = vmatprep.subr.mxu0 0.0
    %798 = vmatpush1.msra.mxu0 0.0
    %799 = vmatprep.subr.mxu0 0.0
    %800 = vmatpush1.msra.mxu0 0.0
    %801 = vmatprep.subr.mxu0 0.0
    %802 = vmatpush1.msra.mxu0 0.0
    %803 = vmatprep.subr.mxu0 0.0
    %804 = vmatpush1.msra.mxu0 0.0
    %805 = vmatprep.subr.mxu0 0.0
    %806 = vmatpush1.msra.mxu0 0.0
    %807 = vmatprep.subr.mxu0 0.0
    %808 = vmatpush1.msra.mxu0 0.0
    %809 = vmatprep.subr.mxu0 0.0
    %810 = vmatpush1.msra.mxu0 0.0
    %811 = vmatprep.subr.mxu0 0.0
    %812 = vmatpush1.msra.mxu0 0.0
    %813 = vmatprep.subr.mxu0 0.0
    %814 = vmatpush1.msra.mxu0 0.0
    %815 = vmatprep.subr.mxu0 0.0
    %816 = vmatpush1.msra.mxu0 0.0
    %817 = vmatprep.subr.mxu0 0.0
    %818 = vmatpush1.msra.mxu0 0.0
    %819 = vmatprep.mubr.f32.mxu0 0.0
    %820 = vmatmul.mubr.f32.gmra.mrb[0].mxu0 %v753
    %v821 = vpop.f32.mrb[0].mxu0
    %v822 = vadd.f32 %v315, %v821
    %v823 = vpop.f32.mrb[0].mxu0
    %824 = vdwg.mxu0
    %v825 = vadd.f32 %v298, %v822
    %v826 = vxor.u32 %v825, 2147483648
    %v827 = vmul.f32 %v826, 1.442695
    %v828 = vpow.pop %v827
    %v829 = vadd.f32 %v828, 1.0
    %v830 = vrcp.pop %v829
    %v831 = vmul.f32 1.0, %v830
    %833 = vrot.lane.b32.xlu0 %v822, 64
    %v834 = vpop.permute.xlu0 %833
    %v836 = vmul.f32 %v831, %v834
    %838 = vrot.lane.b32.xlu0 %v836, 64
    %v839 = vpop.permute.xlu0 %838
    %v841 = vadd.f32 %v298, %v839
    %v842 = vtanh.pop %v841
    %v843 = vsub.f32 1.0, %v831
    %845 = vrot.lane.b32.xlu0 %v842, 96
    %v846 = vpop.permute.xlu0 %845
    %v848 = vmul.f32 %v843, %v846
    %v850 = vmul.f32 %v831, %v750
    %v851 = vadd.f32 %v848, %v850
    %853 = vrot.lane.b32.xlu0 %v851, 96
    %v854 = vpop.permute.xlu0 %853
    %856 = vst.msk [vmem:[#allocation2 + $0x8] sm:$0x3] %vm420, %v854
    %857 = vst.msk [vmem:[#allocation3 + $0x6] sm:$0xc] %vm422, %v854
    %v858 = vsel %vm208, %v854, 0
    %860 = vmatprep.subr.mxu0 0.0
    %861 = vmatpush1.msra.mxu0 %v306
    %862 = vmatprep.subr.mxu0 0.0
    %863 = vmatpush1.msra.mxu0 %v307
    %864 = vmatprep.subr.mxu0 0.0
    %865 = vmatpush1.msra.mxu0 %v308
    %866 = vmatprep.subr.mxu0 0.0
    %867 = vmatpush1.msra.mxu0 %v309
    %868 = vmatprep.subr.mxu0 0.0
    %869 = vmatpush1.msra.mxu0 0.0
    %870 = vmatprep.subr.mxu0 0.0
    %871 = vmatpush1.msra.mxu0 0.0
    %872 = vmatprep.subr.mxu0 0.0
    %873 = vmatpush1.msra.mxu0 0.0
    %874 = vmatprep.subr.mxu0 0.0
    %875 = vmatpush1.msra.mxu0 0.0
    %876 = vmatprep.subr.mxu0 0.0
    %877 = vmatpush1.msra.mxu0 0.0
    %878 = vmatprep.subr.mxu0 0.0
    %879 = vmatpush1.msra.mxu0 0.0
    %880 = vmatprep.subr.mxu0 0.0
    %881 = vmatpush1.msra.mxu0 0.0
    %882 = vmatprep.subr.mxu0 0.0
    %883 = vmatpush1.msra.mxu0 0.0
    %884 = vmatprep.subr.mxu0 0.0
    %885 = vmatpush1.msra.mxu0 0.0
    %886 = vmatprep.subr.mxu0 0.0
    %887 = vmatpush1.msra.mxu0 0.0
    %888 = vmatprep.subr.mxu0 0.0
    %889 = vmatpush1.msra.mxu0 0.0
    %890 = vmatprep.subr.mxu0 0.0
    %891 = vmatpush1.msra.mxu0 0.0
    %892 = vmatprep.subr.mxu0 0.0
    %893 = vmatpush1.msra.mxu0 0.0
    %894 = vmatprep.subr.mxu0 0.0
    %895 = vmatpush1.msra.mxu0 0.0
    %896 = vmatprep.subr.mxu0 0.0
    %897 = vmatpush1.msra.mxu0 0.0
    %898 = vmatprep.subr.mxu0 0.0
    %899 = vmatpush1.msra.mxu0 0.0
    %900 = vmatprep.subr.mxu0 0.0
    %901 = vmatpush1.msra.mxu0 0.0
    %902 = vmatprep.subr.mxu0 0.0
    %903 = vmatpush1.msra.mxu0 0.0
    %904 = vmatprep.subr.mxu0 0.0
    %905 = vmatpush1.msra.mxu0 0.0
    %906 = vmatprep.subr.mxu0 0.0
    %907 = vmatpush1.msra.mxu0 0.0
    %908 = vmatprep.subr.mxu0 0.0
    %909 = vmatpush1.msra.mxu0 0.0
    %910 = vmatprep.subr.mxu0 0.0
    %911 = vmatpush1.msra.mxu0 0.0
    %912 = vmatprep.subr.mxu0 0.0
    %913 = vmatpush1.msra.mxu0 0.0
    %914 = vmatprep.subr.mxu0 0.0
    %915 = vmatpush1.msra.mxu0 0.0
    %916 = vmatprep.subr.mxu0 0.0
    %917 = vmatpush1.msra.mxu0 0.0
    %918 = vmatprep.subr.mxu0 0.0
    %919 = vmatpush1.msra.mxu0 0.0
    %920 = vmatprep.subr.mxu0 0.0
    %921 = vmatpush1.msra.mxu0 0.0
    %922 = vmatprep.subr.mxu0 0.0
    %923 = vmatpush1.msra.mxu0 0.0
    %924 = vmatprep.mubr.f32.mxu0 0.0
    %925 = vmatmul.mubr.f32.gmra.mrb[0].mxu0 %v858
    %v926 = vpop.f32.mrb[0].mxu0
    %v927 = vadd.f32 %v315, %v926
    %v928 = vpop.f32.mrb[0].mxu0
    %929 = vdwg.mxu0
    %v931 = vrot.slane %v927, 4
    %v933 = vadd.f32 %v298, %v931
    %v934 = vxor.u32 %v933, 2147483648
    %v935 = vmul.f32 %v934, 1.442695
    %v936 = vpow.pop %v935
    %v937 = vadd.f32 %v936, 1.0
    %v938 = vrcp.pop %v937
    %v939 = vmul.f32 1.0, %v938
    %940 = vrot.lane.b32.xlu0 %v931, 64
    %v941 = vpop.permute.xlu0 %940
    %v943 = vmul.f32 %v939, %v941
    %945 = vrot.lane.b32.xlu0 %v943, 64
    %v946 = vpop.permute.xlu0 %945
    %v948 = vadd.f32 %v298, %v946
    %v949 = vtanh.pop %v948
    %v950 = vsub.f32 1.0, %v939
    %952 = vrot.lane.b32.xlu0 %v949, 96
    %v953 = vpop.permute.xlu0 %952
    %v955 = vmul.f32 %v950, %v953
    %v956 = vrot.slane %v851, 4
    %v958 = vmul.f32 %v939, %v956
    %v959 = vadd.f32 %v955, %v958
    %961 = vrot.lane.b32.xlu0 %v959, 96
    %v962 = vpop.permute.xlu0 %961
    %964 = vst.msk [vmem:[#allocation2 + $0x6] sm:$0x30] %vm530, %v962
    %965 = vst.msk [vmem:[#allocation3 + $0x4] sm:$0xc0] %vm532, %v962
    %v966 = vrot.slane %v959, 4
    %967 = vrot.lane.b32.xlu0 %v966, 96
    %v968 = vpop.permute.xlu0 %967
    %v969 = vsel %vm208, %v968, 0
    %971 = vmatprep.subr.mxu0 0.0
    %972 = vmatpush1.msra.mxu0 %v306
    %973 = vmatprep.subr.mxu0 0.0
    %974 = vmatpush1.msra.mxu0 %v307
    %975 = vmatprep.subr.mxu0 0.0
    %976 = vmatpush1.msra.mxu0 %v308
    %977 = vmatprep.subr.mxu0 0.0
    %978 = vmatpush1.msra.mxu0 %v309
    %979 = vmatprep.subr.mxu0 0.0
    %980 = vmatpush1.msra.mxu0 0.0
    %981 = vmatprep.subr.mxu0 0.0
    %982 = vmatpush1.msra.mxu0 0.0
    %983 = vmatprep.subr.mxu0 0.0
    %984 = vmatpush1.msra.mxu0 0.0
    %985 = vmatprep.subr.mxu0 0.0
    %986 = vmatpush1.msra.mxu0 0.0
    %987 = vmatprep.subr.mxu0 0.0
    %988 = vmatpush1.msra.mxu0 0.0
    %989 = vmatprep.subr.mxu0 0.0
    %990 = vmatpush1.msra.mxu0 0.0
    %991 = vmatprep.subr.mxu0 0.0
    %992 = vmatpush1.msra.mxu0 0.0
    %993 = vmatprep.subr.mxu0 0.0
    %994 = vmatpush1.msra.mxu0 0.0
    %995 = vmatprep.subr.mxu0 0.0
    %996 = vmatpush1.msra.mxu0 0.0
    %997 = vmatprep.subr.mxu0 0.0
    %998 = vmatpush1.msra.mxu0 0.0
    %999 = vmatprep.subr.mxu0 0.0
    %1000 = vmatpush1.msra.mxu0 0.0
    %1001 = vmatprep.subr.mxu0 0.0
    %1002 = vmatpush1.msra.mxu0 0.0
    %1003 = vmatprep.subr.mxu0 0.0
    %1004 = vmatpush1.msra.mxu0 0.0
    %1005 = vmatprep.subr.mxu0 0.0
    %1006 = vmatpush1.msra.mxu0 0.0
    %1007 = vmatprep.subr.mxu0 0.0
    %1008 = vmatpush1.msra.mxu0 0.0
    %1009 = vmatprep.subr.mxu0 0.0
    %1010 = vmatpush1.msra.mxu0 0.0
    %1011 = vmatprep.subr.mxu0 0.0
    %1012 = vmatpush1.msra.mxu0 0.0
    %1013 = vmatprep.subr.mxu0 0.0
    %1014 = vmatpush1.msra.mxu0 0.0
    %1015 = vmatprep.subr.mxu0 0.0
    %1016 = vmatpush1.msra.mxu0 0.0
    %1017 = vmatprep.subr.mxu0 0.0
    %1018 = vmatpush1.msra.mxu0 0.0
    %1019 = vmatprep.subr.mxu0 0.0
    %1020 = vmatpush1.msra.mxu0 0.0
    %1021 = vmatprep.subr.mxu0 0.0
    %1022 = vmatpush1.msra.mxu0 0.0
    %1023 = vmatprep.subr.mxu0 0.0
    %1024 = vmatpush1.msra.mxu0 0.0
    %1025 = vmatprep.subr.mxu0 0.0
    %1026 = vmatpush1.msra.mxu0 0.0
    %1027 = vmatprep.subr.mxu0 0.0
    %1028 = vmatpush1.msra.mxu0 0.0
    %1029 = vmatprep.subr.mxu0 0.0
    %1030 = vmatpush1.msra.mxu0 0.0
    %1031 = vmatprep.subr.mxu0 0.0
    %1032 = vmatpush1.msra.mxu0 0.0
    %1033 = vmatprep.subr.mxu0 0.0
    %1034 = vmatpush1.msra.mxu0 0.0
    %1035 = vmatprep.mubr.f32.mxu0 0.0
    %1036 = vmatmul.mubr.f32.gmra.mrb[0].mxu0 %v969
    %v1037 = vpop.f32.mrb[0].mxu0
    %v1038 = vadd.f32 %v315, %v1037
    %v1039 = vpop.f32.mrb[0].mxu0
    %1040 = vdwg.mxu0
    %v1041 = vadd.f32 %v303, %v1038
    %v1042 = vxor.u32 %v1041, 2147483648
    %v1043 = vmul.f32 %v1042, 1.442695
    %v1044 = vpow.pop %v1043
    %v1045 = vadd.f32 %v1044, 1.0
    %v1046 = vrcp.pop %v1045
    %v1047 = vmul.f32 1.0, %v1046
    %1049 = vrot.lane.b32.xlu0 %v1038, 64
    %v1050 = vpop.permute.xlu0 %1049
    %v1052 = vmul.f32 %v1047, %v1050
    %1054 = vrot.lane.b32.xlu0 %v1052, 64
    %v1055 = vpop.permute.xlu0 %1054
    %v1057 = vadd.f32 %v303, %v1055
    %v1058 = vtanh.pop %v1057
    %v1059 = vsub.f32 1.0, %v1047
    %1061 = vrot.lane.b32.xlu0 %v1058, 96
    %v1062 = vpop.permute.xlu0 %1061
    %v1064 = vmul.f32 %v1059, %v1062
    %v1066 = vmul.f32 %v1047, %v966
    %v1067 = vadd.f32 %v1064, %v1066
    %1069 = vrot.lane.b32.xlu0 %v1067, 96
    %v1070 = vpop.permute.xlu0 %1069
    %1072 = vst.msk [vmem:[#allocation2 + $0xc] sm:$0x3] %vm420, %v1070
    %1073 = vst.msk [vmem:[#allocation3 + $0xa] sm:$0xc] %vm422, %v1070
    %v1074 = vsel %vm208, %v1070, 0
    %1076 = vmatprep.subr.mxu0 0.0
    %1077 = vmatpush1.msra.mxu0 %v306
    %1078 = vmatprep.subr.mxu0 0.0
    %1079 = vmatpush1.msra.mxu0 %v307
    %1080 = vmatprep.subr.mxu0 0.0
    %1081 = vmatpush1.msra.mxu0 %v308
    %1082 = vmatprep.subr.mxu0 0.0
    %1083 = vmatpush1.msra.mxu0 %v309
    %1084 = vmatprep.subr.mxu0 0.0
    %1085 = vmatpush1.msra.mxu0 0.0
    %1086 = vmatprep.subr.mxu0 0.0
    %1087 = vmatpush1.msra.mxu0 0.0
    %1088 = vmatprep.subr.mxu0 0.0
    %1089 = vmatpush1.msra.mxu0 0.0
    %1090 = vmatprep.subr.mxu0 0.0
    %1091 = vmatpush1.msra.mxu0 0.0
    %1092 = vmatprep.subr.mxu0 0.0
    %1093 = vmatpush1.msra.mxu0 0.0
    %1094 = vmatprep.subr.mxu0 0.0
    %1095 = vmatpush1.msra.mxu0 0.0
    %1096 = vmatprep.subr.mxu0 0.0
    %1097 = vmatpush1.msra.mxu0 0.0
    %1098 = vmatprep.subr.mxu0 0.0
    %1099 = vmatpush1.msra.mxu0 0.0
    %1100 = vmatprep.subr.mxu0 0.0
    %1101 = vmatpush1.msra.mxu0 0.0
    %1102 = vmatprep.subr.mxu0 0.0
    %1103 = vmatpush1.msra.mxu0 0.0
    %1104 = vmatprep.subr.mxu0 0.0
    %1105 = vmatpush1.msra.mxu0 0.0
    %1106 = vmatprep.subr.mxu0 0.0
    %1107 = vmatpush1.msra.mxu0 0.0
    %1108 = vmatprep.subr.mxu0 0.0
    %1109 = vmatpush1.msra.mxu0 0.0
    %1110 = vmatprep.subr.mxu0 0.0
    %1111 = vmatpush1.msra.mxu0 0.0
    %1112 = vmatprep.subr.mxu0 0.0
    %1113 = vmatpush1.msra.mxu0 0.0
    %1114 = vmatprep.subr.mxu0 0.0
    %1115 = vmatpush1.msra.mxu0 0.0
    %1116 = vmatprep.subr.mxu0 0.0
    %1117 = vmatpush1.msra.mxu0 0.0
    %1118 = vmatprep.subr.mxu0 0.0
    %1119 = vmatpush1.msra.mxu0 0.0
    %1120 = vmatprep.subr.mxu0 0.0
    %1121 = vmatpush1.msra.mxu0 0.0
    %1122 = vmatprep.subr.mxu0 0.0
    %1123 = vmatpush1.msra.mxu0 0.0
    %1124 = vmatprep.subr.mxu0 0.0
    %1125 = vmatpush1.msra.mxu0 0.0
    %1126 = vmatprep.subr.mxu0 0.0
    %1127 = vmatpush1.msra.mxu0 0.0
    %1128 = vmatprep.subr.mxu0 0.0
    %1129 = vmatpush1.msra.mxu0 0.0
    %1130 = vmatprep.subr.mxu0 0.0
    %1131 = vmatpush1.msra.mxu0 0.0
    %1132 = vmatprep.subr.mxu0 0.0
    %1133 = vmatpush1.msra.mxu0 0.0
    %1134 = vmatprep.subr.mxu0 0.0
    %1135 = vmatpush1.msra.mxu0 0.0
    %1136 = vmatprep.subr.mxu0 0.0
    %1137 = vmatpush1.msra.mxu0 0.0
    %1138 = vmatprep.subr.mxu0 0.0
    %1139 = vmatpush1.msra.mxu0 0.0
    %1140 = vmatprep.mubr.f32.mxu0 0.0
    %1141 = vmatmul.mubr.f32.gmra.mrb[0].mxu0 %v1074
    %v1142 = vpop.f32.mrb[0].mxu0
    %v1143 = vadd.f32 %v315, %v1142
    %v1144 = vpop.f32.mrb[0].mxu0
    %1145 = vdwg.mxu0
    %v1147 = vrot.slane %v1143, 4
    %v1149 = vadd.f32 %v303, %v1147
    %v1150 = vxor.u32 %v1149, 2147483648
    %v1151 = vmul.f32 %v1150, 1.442695
    %v1152 = vpow.pop %v1151
    %v1153 = vadd.f32 %v1152, 1.0
    %v1154 = vrcp.pop %v1153
    %v1155 = vmul.f32 1.0, %v1154
    %1156 = vrot.lane.b32.xlu0 %v1147, 64
    %v1157 = vpop.permute.xlu0 %1156
    %v1159 = vmul.f32 %v1155, %v1157
    %1161 = vrot.lane.b32.xlu0 %v1159, 64
    %v1162 = vpop.permute.xlu0 %1161
    %v1164 = vadd.f32 %v303, %v1162
    %v1165 = vtanh.pop %v1164
    %v1166 = vsub.f32 1.0, %v1155
    %1168 = vrot.lane.b32.xlu0 %v1165, 96
    %v1169 = vpop.permute.xlu0 %1168
    %v1171 = vmul.f32 %v1166, %v1169
    %v1172 = vrot.slane %v1067, 4
    %v1174 = vmul.f32 %v1155, %v1172
    %v1175 = vadd.f32 %v1171, %v1174
    %1177 = vrot.lane.b32.xlu0 %v1175, 96
    %v1178 = vpop.permute.xlu0 %1177
    %1180 = vst.msk [vmem:[#allocation2 + $0xa] sm:$0x30] %vm530, %v1178
    %1181 = vst.msk [vmem:[#allocation3 + $0x8] sm:$0xc0] %vm532, %v1178
    %v1182 = vld [vmem:[#allocation2] sm:$0xff]
    %v1183 = vld [vmem:[#allocation2 + $0x8] sm:$0xff]
    %v1184 = vld [vmem:[#allocation3] sm:$0xff]
    %v1185 = vld [vmem:[#allocation3 + $0x8] sm:$0xff]
    %v1186 = vld [vmem:[%s1] sm:$0xff]
    %v1187 = vld [vmem:[%s1 + $0x8] sm:$0xff]
    %v1188 = vld [vmem:[#allocation7] sm:$0xff]
    %v1189 = vld [vmem:[#allocation7 + $0x8] sm:$0xff]
    %v1190 = vlaneseq
    %v1191 = vshrl.u32 %v1190, 7
    %v1192 = vadd.s32 %v1191, 8
    %v1193 = vlaneseq
    %v1194 = vand.u32 %v1193, 127
    %vm1195 = vcmp.lt.s32.totalorder %v1191, 0
    %v1196 = vsub.s32 0, %v1191
    %v1197 = vsel %vm1195, %v1196, %v1191
    %v1198 = vshrl.u32 %v1197, 1
    %v1199 = vand.u32 %v1197, 1
    %v1200 = vsub.s32 0, %v1199
    %v1201 = vsel %vm1195, %v1200, %v1199
    %vm1202 = vcmp.lt.s32.totalorder %v1192, 0
    %v1203 = vsub.s32 0, %v1192
    %v1204 = vsel %vm1202, %v1203, %v1192
    %v1205 = vshrl.u32 %v1204, 1
    %v1206 = vand.u32 %v1204, 1
    %v1207 = vsub.s32 0, %v1206
    %v1208 = vsel %vm1202, %v1207, %v1206
    %vm1209 = vcmp.ne.s32.totalorder %v1201, 0
    %vm1210 = vcmp.ne.s32.totalorder %v1208, 0
    %vm1211 = vcmp.lt.s32.totalorder %v1201, 0
    %vm1212 = vcmp.lt.s32.totalorder %v1208, 0
    %vm1213 = vmand %vm1211, %vm1209
    %vm1214 = vmand %vm1212, %vm1210
    %v1215 = vadd.s32 %v1201, 2
    %v1216 = vadd.s32 %v1208, 2
    %v1217 = vsel %vm1213, %v1215, %v1201
    %v1218 = vsel %vm1214, %v1216, %v1208
    %vm1219 = vcmp.lt.s32.totalorder %v1194, 0
    %v1220 = vsub.s32 0, %v1194
    %v1221 = vsel %vm1219, %v1220, %v1194
    %v1222 = vshrl.u32 %v1221, 1
    %v1223 = vand.u32 %v1221, 1
    %v1224 = vsub.s32 0, %v1223
    %v1225 = vsel %vm1219, %v1224, %v1223
    %vm1226 = vcmp.ne.s32.totalorder %v1225, 0
    %vm1227 = vcmp.lt.s32.totalorder %v1225, 0
    %vm1228 = vmand %vm1227, %vm1226
    %v1229 = vadd.s32 %v1225, 2
    %v1230 = vsel %vm1228, %v1229, %v1225
    %vm1231 = vcmp.eq.s32.totalorder %v1217, %v1230
    %vm1232 = vcmp.eq.s32.totalorder %v1218, %v1230
    %v1233 = vsel %vm1231, 1.0, 0.0
    %v1234 = vsel %vm1232, 1.0, 0.0
    %vm1235 = vcmask 130048
    %v1237 = vsel %vm1235, %v1233, 0
    %v1240 = vsel %vm1235, %v1234, 0
    %1242 = vmatprep.subr.mxu0 0.0
    %1243 = vmatpush1.msra.mxu0 %v1186
    %1244 = vmatprep.subr.mxu0 0.0
    %1245 = vmatpush1.msra.mxu0 %v1187
    %1246 = vmatprep.subr.mxu0 0.0
    %1247 = vmatpush1.msra.mxu0 0.0
    %1248 = vmatprep.subr.mxu0 0.0
    %1249 = vmatpush1.msra.mxu0 0.0
    %1250 = vmatprep.subr.mxu0 0.0
    %1251 = vmatpush1.msra.mxu0 0.0
    %1252 = vmatprep.subr.mxu0 0.0
    %1253 = vmatpush1.msra.mxu0 0.0
    %1254 = vmatprep.subr.mxu0 0.0
    %1255 = vmatpush1.msra.mxu0 0.0
    %1256 = vmatprep.subr.mxu0 0.0
    %1257 = vmatpush1.msra.mxu0 0.0
    %1258 = vmatprep.subr.mxu0 0.0
    %1259 = vmatpush1.msra.mxu0 0.0
    %1260 = vmatprep.subr.mxu0 0.0
    %1261 = vmatpush1.msra.mxu0 0.0
    %1262 = vmatprep.subr.mxu0 0.0
    %1263 = vmatpush1.msra.mxu0 0.0
    %1264 = vmatprep.subr.mxu0 0.0
    %1265 = vmatpush1.msra.mxu0 0.0
    %1266 = vmatprep.subr.mxu0 0.0
    %1267 = vmatpush1.msra.mxu0 0.0
    %1268 = vmatprep.subr.mxu0 0.0
    %1269 = vmatpush1.msra.mxu0 0.0
    %1270 = vmatprep.subr.mxu0 0.0
    %1271 = vmatpush1.msra.mxu0 0.0
    %1272 = vmatprep.subr.mxu0 0.0
    %1273 = vmatpush1.msra.mxu0 0.0
    %1274 = vmatprep.subr.mxu0 0.0
    %1275 = vmatpush1.msra.mxu0 0.0
    %1276 = vmatprep.subr.mxu0 0.0
    %1277 = vmatpush1.msra.mxu0 0.0
    %1278 = vmatprep.subr.mxu0 0.0
    %1279 = vmatpush1.msra.mxu0 0.0
    %1280 = vmatprep.subr.mxu0 0.0
    %1281 = vmatpush1.msra.mxu0 0.0
    %1282 = vmatprep.subr.mxu0 0.0
    %1283 = vmatpush1.msra.mxu0 0.0
    %1284 = vmatprep.subr.mxu0 0.0
    %1285 = vmatpush1.msra.mxu0 0.0
    %1286 = vmatprep.subr.mxu0 0.0
    %1287 = vmatpush1.msra.mxu0 0.0
    %1288 = vmatprep.subr.mxu0 0.0
    %1289 = vmatpush1.msra.mxu0 0.0
    %1290 = vmatprep.subr.mxu0 0.0
    %1291 = vmatpush1.msra.mxu0 0.0
    %1292 = vmatprep.subr.mxu0 0.0
    %1293 = vmatpush1.msra.mxu0 0.0
    %1294 = vmatprep.subr.mxu0 0.0
    %1295 = vmatpush1.msra.mxu0 0.0
    %1296 = vmatprep.subr.mxu0 0.0
    %1297 = vmatpush1.msra.mxu0 0.0
    %1298 = vmatprep.subr.mxu0 0.0
    %1299 = vmatpush1.msra.mxu0 0.0
    %1300 = vmatprep.subr.mxu0 0.0
    %1301 = vmatpush1.msra.mxu0 0.0
    %1302 = vmatprep.subr.mxu0 0.0
    %1303 = vmatpush1.msra.mxu0 0.0
    %1304 = vmatprep.subr.mxu0 0.0
    %1305 = vmatpush1.msra.mxu0 0.0
    %1306 = vmatprep.mubr.f32.mxu0 0.0
    %1307 = vmatmul.mubr.f32.gmra.mrb[0].mxu0 %v1237
    %v1308 = vpop.f32.mrb[0].mxu0
    %v1309 = vadd.f32 0.0, %v1308
    %v1310 = vpop.f32.mrb[0].mxu0
    %1311 = vmatprep.mubr.f32.mxu0 0.0
    %1312 = vmatmul.mubr.f32.gmra.mrb[0].mxu0 %v1240
    %v1313 = vpop.f32.mrb[0].mxu0
    %v1314 = vadd.f32 0.0, %v1313
    %v1315 = vpop.f32.mrb[0].mxu0
    %1316 = vdwg.mxu0
    %1317 = vmatprep.subr.mxu0 0.0
    %1318 = vmatpush1.msra.mxu0 %v1182
    %1319 = vmatprep.subr.mxu0 0.0
    %1320 = vmatpush1.msra.mxu0 %v1183
    %1321 = vmatprep.subr.mxu0 0.0
    %1322 = vmatpush1.msra.mxu0 0.0
    %1323 = vmatprep.subr.mxu0 0.0
    %1324 = vmatpush1.msra.mxu0 0.0
    %1325 = vmatprep.subr.mxu0 0.0
    %1326 = vmatpush1.msra.mxu0 0.0
    %1327 = vmatprep.subr.mxu0 0.0
    %1328 = vmatpush1.msra.mxu0 0.0
    %1329 = vmatprep.subr.mxu0 0.0
    %1330 = vmatpush1.msra.mxu0 0.0
    %1331 = vmatprep.subr.mxu0 0.0
    %1332 = vmatpush1.msra.mxu0 0.0
    %1333 = vmatprep.subr.mxu0 0.0
    %1334 = vmatpush1.msra.mxu0 0.0
    %1335 = vmatprep.subr.mxu0 0.0
    %1336 = vmatpush1.msra.mxu0 0.0
    %1337 = vmatprep.subr.mxu0 0.0
    %1338 = vmatpush1.msra.mxu0 0.0
    %1339 = vmatprep.subr.mxu0 0.0
    %1340 = vmatpush1.msra.mxu0 0.0
    %1341 = vmatprep.subr.mxu0 0.0
    %1342 = vmatpush1.msra.mxu0 0.0
    %1343 = vmatprep.subr.mxu0 0.0
    %1344 = vmatpush1.msra.mxu0 0.0
    %1345 = vmatprep.subr.mxu0 0.0
    %1346 = vmatpush1.msra.mxu0 0.0
    %1347 = vmatprep.subr.mxu0 0.0
    %1348 = vmatpush1.msra.mxu0 0.0
    %1349 = vmatprep.subr.mxu0 0.0
    %1350 = vmatpush1.msra.mxu0 0.0
    %1351 = vmatprep.subr.mxu0 0.0
    %1352 = vmatpush1.msra.mxu0 0.0
    %1353 = vmatprep.subr.mxu0 0.0
    %1354 = vmatpush1.msra.mxu0 0.0
    %1355 = vmatprep.subr.mxu0 0.0
    %1356 = vmatpush1.msra.mxu0 0.0
    %1357 = vmatprep.subr.mxu0 0.0
    %1358 = vmatpush1.msra.mxu0 0.0
    %1359 = vmatprep.subr.mxu0 0.0
    %1360 = vmatpush1.msra.mxu0 0.0
    %1361 = vmatprep.subr.mxu0 0.0
    %1362 = vmatpush1.msra.mxu0 0.0
    %1363 = vmatprep.subr.mxu0 0.0
    %1364 = vmatpush1.msra.mxu0 0.0
    %1365 = vmatprep.subr.mxu0 0.0
    %1366 = vmatpush1.msra.mxu0 0.0
    %1367 = vmatprep.subr.mxu0 0.0
    %1368 = vmatpush1.msra.mxu0 0.0
    %1369 = vmatprep.subr.mxu0 0.0
    %1370 = vmatpush1.msra.mxu0 0.0
    %1371 = vmatprep.subr.mxu0 0.0
    %1372 = vmatpush1.msra.mxu0 0.0
    %1373 = vmatprep.subr.mxu0 0.0
    %1374 = vmatpush1.msra.mxu0 0.0
    %1375 = vmatprep.subr.mxu0 0.0
    %1376 = vmatpush1.msra.mxu0 0.0
    %1377 = vmatprep.subr.mxu0 0.0
    %1378 = vmatpush1.msra.mxu0 0.0
    %1379 = vmatprep.subr.mxu0 0.0
    %1380 = vmatpush1.msra.mxu0 0.0
    %1381 = vmatprep.mubr.f32.mxu0 0.0
    %1382 = vmatmul.mubr.f32.gmra.mrb[0].mxu0 %v1237
    %v1383 = vpop.f32.mrb[0].mxu0
    %v1384 = vadd.f32 0.0, %v1383
    %v1385 = vpop.f32.mrb[0].mxu0
    %1386 = vmatprep.mubr.f32.mxu0 0.0
    %1387 = vmatmul.mubr.f32.gmra.mrb[0].mxu0 %v1240
    %v1388 = vpop.f32.mrb[0].mxu0
    %v1389 = vadd.f32 0.0, %v1388
    %v1390 = vpop.f32.mrb[0].mxu0
    %1391 = vdwg.mxu0
    %v1392 = vld [vmem:[#allocation12] sm:$0xff]
    %v1393 = vld [vmem:[#allocation12 + $0x8] sm:$0xff]
    %v1394 = vld [vmem:[#allocation12 + $0x10] sm:$0xff]
    %v1395 = vld [vmem:[#allocation12 + $0x18] sm:$0xff]
    %v1396 = vld [vmem:[%s8] sm:$0x1]
    %v1398 = vlaneseq
    %v1399 = vshrl.u32 %v1398, 7
    %v1400 = vsub.s32 0, %v1399
    %v1401 = vrot.slane %v1396, %v1400
    %v1404 = vsel %vm208, %v1186, 0
    %v1407 = vsel %vm208, %v1187, 0
    %1409 = vmatprep.subr.mxu0 0.0
    %1410 = vmatpush1.msra.mxu0 %v1392
    %1411 = vmatprep.subr.mxu0 0.0
    %1412 = vmatpush1.msra.mxu0 %v1393
    %1413 = vmatprep.subr.mxu0 0.0
    %1414 = vmatpush1.msra.mxu0 %v1394
    %1415 = vmatprep.subr.mxu0 0.0
    %1416 = vmatpush1.msra.mxu0 %v1395
    %1417 = vmatprep.subr.mxu0 0.0
    %1418 = vmatpush1.msra.mxu0 0.0
    %1419 = vmatprep.subr.mxu0 0.0
    %1420 = vmatpush1.msra.mxu0 0.0
    %1421 = vmatprep.subr.mxu0 0.0
    %1422 = vmatpush1.msra.mxu0 0.0
    %1423 = vmatprep.subr.mxu0 0.0
    %1424 = vmatpush1.msra.mxu0 0.0
    %1425 = vmatprep.subr.mxu0 0.0
    %1426 = vmatpush1.msra.mxu0 0.0
    %1427 = vmatprep.subr.mxu0 0.0
    %1428 = vmatpush1.msra.mxu0 0.0
    %1429 = vmatprep.subr.mxu0 0.0
    %1430 = vmatpush1.msra.mxu0 0.0
    %1431 = vmatprep.subr.mxu0 0.0
    %1432 = vmatpush1.msra.mxu0 0.0
    %1433 = vmatprep.subr.mxu0 0.0
    %1434 = vmatpush1.msra.mxu0 0.0
    %1435 = vmatprep.subr.mxu0 0.0
    %1436 = vmatpush1.msra.mxu0 0.0
    %1437 = vmatprep.subr.mxu0 0.0
    %1438 = vmatpush1.msra.mxu0 0.0
    %1439 = vmatprep.subr.mxu0 0.0
    %1440 = vmatpush1.msra.mxu0 0.0
    %1441 = vmatprep.subr.mxu0 0.0
    %1442 = vmatpush1.msra.mxu0 0.0
    %1443 = vmatprep.subr.mxu0 0.0
    %1444 = vmatpush1.msra.mxu0 0.0
    %1445 = vmatprep.subr.mxu0 0.0
    %1446 = vmatpush1.msra.mxu0 0.0
    %1447 = vmatprep.subr.mxu0 0.0
    %1448 = vmatpush1.msra.mxu0 0.0
    %1449 = vmatprep.subr.mxu0 0.0
    %1450 = vmatpush1.msra.mxu0 0.0
    %1451 = vmatprep.subr.mxu0 0.0
    %1452 = vmatpush1.msra.mxu0 0.0
    %1453 = vmatprep.subr.mxu0 0.0
    %1454 = vmatpush1.msra.mxu0 0.0
    %1455 = vmatprep.subr.mxu0 0.0
    %1456 = vmatpush1.msra.mxu0 0.0
    %1457 = vmatprep.subr.mxu0 0.0
    %1458 = vmatpush1.msra.mxu0 0.0
    %1459 = vmatprep.subr.mxu0 0.0
    %1460 = vmatpush1.msra.mxu0 0.0
    %1461 = vmatprep.subr.mxu0 0.0
    %1462 = vmatpush1.msra.mxu0 0.0
    %1463 = vmatprep.subr.mxu0 0.0
    %1464 = vmatpush1.msra.mxu0 0.0
    %1465 = vmatprep.subr.mxu0 0.0
    %1466 = vmatpush1.msra.mxu0 0.0
    %1467 = vmatprep.subr.mxu0 0.0
    %1468 = vmatpush1.msra.mxu0 0.0
    %1469 = vmatprep.subr.mxu0 0.0
    %1470 = vmatpush1.msra.mxu0 0.0
    %1471 = vmatprep.subr.mxu0 0.0
    %1472 = vmatpush1.msra.mxu0 0.0
    %1473 = vmatprep.mubr.f32.mxu0 0.0
    %1474 = vmatmul.mubr.f32.gmra.mrb[0].mxu0 %v1404
    %v1475 = vpop.f32.mrb[0].mxu0
    %v1476 = vadd.f32 %v1401, %v1475
    %v1477 = vpop.f32.mrb[0].mxu0
    %1478 = vmatprep.mubr.f32.mxu0 0.0
    %1479 = vmatmul.mubr.f32.gmra.mrb[0].mxu0 %v1407
    %v1480 = vpop.f32.mrb[0].mxu0
    %v1481 = vadd.f32 %v1401, %v1480
    %v1482 = vpop.f32.mrb[0].mxu0
    %1483 = vdwg.mxu0
    %v1484 = vmul.f32 %v1476, %v1188
    %v1485 = vmul.f32 %v1481, %v1189
    %v1486 = vsel %vm208, %v1484, 0.0
    %1487 = vadd.xlane.f32.xlu0 %v1486
    %v1488 = vpop.xlane.xlu0 %1487
    %v1489 = vsel %vm208, %v1485, 0.0
    %1490 = vadd.xlane.f32.xlu0 %v1489
    %v1491 = vpop.xlane.xlu0 %1490
    %v1492 = vtanh.pop %v1488
    %v1493 = vtanh.pop %v1491
    %v1494 = vld [vmem:[#allocation13] sm:$0x1]
    %v1496 = vlaneseq
    %v1497 = vshrl.u32 %v1496, 7
    %v1498 = vsub.s32 0, %v1497
    %v1499 = vrot.slane %v1494, %v1498
    %v1501 = vmul.f32 %v1492, %v1499
    %v1502 = vmul.f32 %v1493, %v1499
    %v1503 = vsel %vm208, %v1501, -inf
    %1504 = vmax.xlane.f32.xlu0 %v1503
    %v1505 = vpop.xlane.xlu0 %1504
    %v1506 = vsel %vm208, %v1502, -inf
    %1507 = vmax.xlane.f32.xlu0 %v1506
    %v1508 = vpop.xlane.xlu0 %1507
    %v1509 = vsub.f32 %v1501, %v1505
    %v1510 = vsub.f32 %v1502, %v1508
    %v1511 = vmul.f32 %v1509, 1.442695
    %v1512 = vpow.pop %v1511
    %v1513 = vmul.f32 %v1510, 1.442695
    %v1514 = vpow.pop %v1513
    %v1515 = vsel %vm208, %v1512, 0.0
    %1516 = vadd.xlane.f32.xlu0 %v1515
    %v1517 = vpop.xlane.xlu0 %1516
    %v1518 = vsel %vm208, %v1514, 0.0
    %1519 = vadd.xlane.f32.xlu0 %v1518
    %v1520 = vpop.xlane.xlu0 %1519
    %v1521 = vrcp.pop %v1517
    %v1522 = vrcp.pop %v1520
    %v1523 = vmul.f32 %v1517, %v1521
    %v1524 = vmul.f32 %v1520, %v1522
    %v1525 = vsub.f32 2.0, %v1523
    %v1526 = vsub.f32 2.0, %v1524
    %v1527 = vmul.f32 %v1521, %v1525
    %v1528 = vmul.f32 %v1522, %v1526
    %v1529 = vmul.f32 %v1512, %v1527
    %v1530 = vmul.f32 %v1514, %v1528
    %v1531 = vmul.f32 %v1309, %v1529
    %v1532 = vmul.f32 %v1314, %v1530
    %v1533 = vmul.f32 %v1531, %v1188
    %v1534 = vmul.f32 %v1532, %v1189
    %v1535 = vld [vmem:[#allocation15] sm:$0xff]
    %v1536 = vld [vmem:[#allocation15 + $0x8] sm:$0xff]
    %v1537 = vld [vmem:[#allocation15 + $0x10] sm:$0xff]
    %v1538 = vld [vmem:[#allocation15 + $0x18] sm:$0xff]
    %v1539 = vld [vmem:[#allocation16] sm:$0x1]
    %v1541 = vlaneseq
    %v1542 = vshrl.u32 %v1541, 7
    %v1543 = vsub.s32 0, %v1542
    %v1544 = vrot.slane %v1539, %v1543
    %v1547 = vsel %vm208, %v1182, 0
    %v1550 = vsel %vm208, %v1183, 0
    %1552 = vmatprep.subr.mxu0 0.0
    %1553 = vmatpush1.msra.mxu0 %v1535
    %1554 = vmatprep.subr.mxu0 0.0
    %1555 = vmatpush1.msra.mxu0 %v1536
    %1556 = vmatprep.subr.mxu0 0.0
    %1557 = vmatpush1.msra.mxu0 %v1537
    %1558 = vmatprep.subr.mxu0 0.0
    %1559 = vmatpush1.msra.mxu0 %v1538
    %1560 = vmatprep.subr.mxu0 0.0
    %1561 = vmatpush1.msra.mxu0 0.0
    %1562 = vmatprep.subr.mxu0 0.0
    %1563 = vmatpush1.msra.mxu0 0.0
    %1564 = vmatprep.subr.mxu0 0.0
    %1565 = vmatpush1.msra.mxu0 0.0
    %1566 = vmatprep.subr.mxu0 0.0
    %1567 = vmatpush1.msra.mxu0 0.0
    %1568 = vmatprep.subr.mxu0 0.0
    %1569 = vmatpush1.msra.mxu0 0.0
    %1570 = vmatprep.subr.mxu0 0.0
    %1571 = vmatpush1.msra.mxu0 0.0
    %1572 = vmatprep.subr.mxu0 0.0
    %1573 = vmatpush1.msra.mxu0 0.0
    %1574 = vmatprep.subr.mxu0 0.0
    %1575 = vmatpush1.msra.mxu0 0.0
    %1576 = vmatprep.subr.mxu0 0.0
    %1577 = vmatpush1.msra.mxu0 0.0
    %1578 = vmatprep.subr.mxu0 0.0
    %1579 = vmatpush1.msra.mxu0 0.0
    %1580 = vmatprep.subr.mxu0 0.0
    %1581 = vmatpush1.msra.mxu0 0.0
    %1582 = vmatprep.subr.mxu0 0.0
    %1583 = vmatpush1.msra.mxu0 0.0
    %1584 = vmatprep.subr.mxu0 0.0
    %1585 = vmatpush1.msra.mxu0 0.0
    %1586 = vmatprep.subr.mxu0 0.0
    %1587 = vmatpush1.msra.mxu0 0.0
    %1588 = vmatprep.subr.mxu0 0.0
    %1589 = vmatpush1.msra.mxu0 0.0
    %1590 = vmatprep.subr.mxu0 0.0
    %1591 = vmatpush1.msra.mxu0 0.0
    %1592 = vmatprep.subr.mxu0 0.0
    %1593 = vmatpush1.msra.mxu0 0.0
    %1594 = vmatprep.subr.mxu0 0.0
    %1595 = vmatpush1.msra.mxu0 0.0
    %1596 = vmatprep.subr.mxu0 0.0
    %1597 = vmatpush1.msra.mxu0 0.0
    %1598 = vmatprep.subr.mxu0 0.0
    %1599 = vmatpush1.msra.mxu0 0.0
    %1600 = vmatprep.subr.mxu0 0.0
    %1601 = vmatpush1.msra.mxu0 0.0
    %1602 = vmatprep.subr.mxu0 0.0
    %1603 = vmatpush1.msra.mxu0 0.0
    %1604 = vmatprep.subr.mxu0 0.0
    %1605 = vmatpush1.msra.mxu0 0.0
    %1606 = vmatprep.subr.mxu0 0.0
    %1607 = vmatpush1.msra.mxu0 0.0
    %1608 = vmatprep.subr.mxu0 0.0
    %1609 = vmatpush1.msra.mxu0 0.0
    %1610 = vmatprep.subr.mxu0 0.0
    %1611 = vmatpush1.msra.mxu0 0.0
    %1612 = vmatprep.subr.mxu0 0.0
    %1613 = vmatpush1.msra.mxu0 0.0
    %1614 = vmatprep.subr.mxu0 0.0
    %1615 = vmatpush1.msra.mxu0 0.0
    %1616 = vmatprep.mubr.f32.mxu0 0.0
    %1617 = vmatmul.mubr.f32.gmra.mrb[0].mxu0 %v1547
    %v1618 = vpop.f32.mrb[0].mxu0
    %v1619 = vadd.f32 %v1544, %v1618
    %v1620 = vpop.f32.mrb[0].mxu0
    %1621 = vmatprep.mubr.f32.mxu0 0.0
    %1622 = vmatmul.mubr.f32.gmra.mrb[0].mxu0 %v1550
    %v1623 = vpop.f32.mrb[0].mxu0
    %v1624 = vadd.f32 %v1544, %v1623
    %v1625 = vpop.f32.mrb[0].mxu0
    %1626 = vdwg.mxu0
    %v1627 = vmul.f32 %v1619, %v1184
    %v1628 = vmul.f32 %v1624, %v1185
    %v1629 = vsel %vm208, %v1627, 0.0
    %1630 = vadd.xlane.f32.xlu0 %v1629
    %v1631 = vpop.xlane.xlu0 %1630
    %v1632 = vsel %vm208, %v1628, 0.0
    %1633 = vadd.xlane.f32.xlu0 %v1632
    %v1634 = vpop.xlane.xlu0 %1633
    %v1635 = vtanh.pop %v1631
    %v1636 = vtanh.pop %v1634
    %v1637 = vld [vmem:[#allocation18] sm:$0x1]
    %v1639 = vlaneseq
    %v1640 = vshrl.u32 %v1639, 7
    %v1641 = vsub.s32 0, %v1640
    %v1642 = vrot.slane %v1637, %v1641
    %v1644 = vmul.f32 %v1635, %v1642
    %v1645 = vmul.f32 %v1636, %v1642
    %v1646 = vsel %vm208, %v1644, -inf
    %1647 = vmax.xlane.f32.xlu0 %v1646
    %v1648 = vpop.xlane.xlu0 %1647
    %v1649 = vsel %vm208, %v1645, -inf
    %1650 = vmax.xlane.f32.xlu0 %v1649
    %v1651 = vpop.xlane.xlu0 %1650
    %v1652 = vsub.f32 %v1644, %v1648
    %v1653 = vsub.f32 %v1645, %v1651
    %v1654 = vmul.f32 %v1652, 1.442695
    %v1655 = vpow.pop %v1654
    %v1656 = vmul.f32 %v1653, 1.442695
    %v1657 = vpow.pop %v1656
    %v1658 = vsel %vm208, %v1655, 0.0
    %1659 = vadd.xlane.f32.xlu0 %v1658
    %v1660 = vpop.xlane.xlu0 %1659
    %v1661 = vsel %vm208, %v1657, 0.0
    %1662 = vadd.xlane.f32.xlu0 %v1661
    %v1663 = vpop.xlane.xlu0 %1662
    %v1664 = vrcp.pop %v1660
    %v1665 = vrcp.pop %v1663
    %v1666 = vmul.f32 %v1660, %v1664
    %v1667 = vmul.f32 %v1663, %v1665
    %v1668 = vsub.f32 2.0, %v1666
    %v1669 = vsub.f32 2.0, %v1667
    %v1670 = vmul.f32 %v1664, %v1668
    %v1671 = vmul.f32 %v1665, %v1669
    %v1672 = vmul.f32 %v1655, %v1670
    %v1673 = vmul.f32 %v1657, %v1671
    %v1674 = vmul.f32 %v1384, %v1672
    %v1675 = vmul.f32 %v1389, %v1673
    %v1676 = vmul.f32 %v1674, %v1184
    %v1677 = vmul.f32 %v1675, %v1185
    %1680 = vrot.lane.b32.xlu0 %v1676, 32
    %v1681 = vpop.permute.xlu0 %1680
    %1682 = vrot.lane.b32.xlu0 %v1677, 32
    %v1683 = vpop.permute.xlu0 %1682
    %v1686 = vsel %vm208, %v1533, %v1681
    %v1687 = vsel %vm208, %v1534, %v1683
    %v1688 = vld [vmem:[%s13] sm:$0xff]
    %v1689 = vld [vmem:[%s13 + $0x8] sm:$0xff]
    %v1690 = vld [vmem:[%s13 + $0x10] sm:$0xff]
    %v1691 = vld [vmem:[%s13 + $0x18] sm:$0xff]
    %v1692 = vld [vmem:[%s13 + $0x20] sm:$0xff]
    %v1693 = vld [vmem:[%s13 + $0x28] sm:$0xff]
    %v1694 = vld [vmem:[%s13 + $0x30] sm:$0xff]
    %v1695 = vld [vmem:[%s13 + $0x38] sm:$0xff]
    %v1696 = vld [vmem:[%s15] sm:$0x1]
    %v1698 = vlaneseq
    %v1699 = vshrl.u32 %v1698, 7
    %v1700 = vsub.s32 0, %v1699
    %v1701 = vrot.slane %v1696, %v1700
    %vm1703 = vcmask 523264
    %v1705 = vsel %vm1703, %v1686, 0
    %v1708 = vsel %vm1703, %v1687, 0
    %1710 = vmatprep.subr.mxu0 0.0
    %1711 = vmatpush1.msra.mxu0 %v1688
    %1712 = vmatprep.subr.mxu0 0.0
    %1713 = vmatpush1.msra.mxu0 %v1689
    %1714 = vmatprep.subr.mxu0 0.0
    %1715 = vmatpush1.msra.mxu0 %v1690
    %1716 = vmatprep.subr.mxu0 0.0
    %1717 = vmatpush1.msra.mxu0 %v1691
    %1718 = vmatprep.subr.mxu0 0.0
    %1719 = vmatpush1.msra.mxu0 %v1692
    %1720 = vmatprep.subr.mxu0 0.0
    %1721 = vmatpush1.msra.mxu0 %v1693
    %1722 = vmatprep.subr.mxu0 0.0
    %1723 = vmatpush1.msra.mxu0 %v1694
    %1724 = vmatprep.subr.mxu0 0.0
    %1725 = vmatpush1.msra.mxu0 %v1695
    %1726 = vmatprep.subr.mxu0 0.0
    %1727 = vmatpush1.msra.mxu0 0.0
    %1728 = vmatprep.subr.mxu0 0.0
    %1729 = vmatpush1.msra.mxu0 0.0
    %1730 = vmatprep.subr.mxu0 0.0
    %1731 = vmatpush1.msra.mxu0 0.0
    %1732 = vmatprep.subr.mxu0 0.0
    %1733 = vmatpush1.msra.mxu0 0.0
    %1734 = vmatprep.subr.mxu0 0.0
    %1735 = vmatpush1.msra.mxu0 0.0
    %1736 = vmatprep.subr.mxu0 0.0
    %1737 = vmatpush1.msra.mxu0 0.0
    %1738 = vmatprep.subr.mxu0 0.0
    %1739 = vmatpush1.msra.mxu0 0.0
    %1740 = vmatprep.subr.mxu0 0.0
    %1741 = vmatpush1.msra.mxu0 0.0
    %1742 = vmatprep.subr.mxu0 0.0
    %1743 = vmatpush1.msra.mxu0 0.0
    %1744 = vmatprep.subr.mxu0 0.0
    %1745 = vmatpush1.msra.mxu0 0.0
    %1746 = vmatprep.subr.mxu0 0.0
    %1747 = vmatpush1.msra.mxu0 0.0
    %1748 = vmatprep.subr.mxu0 0.0
    %1749 = vmatpush1.msra.mxu0 0.0
    %1750 = vmatprep.subr.mxu0 0.0
    %1751 = vmatpush1.msra.mxu0 0.0
    %1752 = vmatprep.subr.mxu0 0.0
    %1753 = vmatpush1.msra.mxu0 0.0
    %1754 = vmatprep.subr.mxu0 0.0
    %1755 = vmatpush1.msra.mxu0 0.0
    %1756 = vmatprep.subr.mxu0 0.0
    %1757 = vmatpush1.msra.mxu0 0.0
    %1758 = vmatprep.subr.mxu0 0.0
    %1759 = vmatpush1.msra.mxu0 0.0
    %1760 = vmatprep.subr.mxu0 0.0
    %1761 = vmatpush1.msra.mxu0 0.0
    %1762 = vmatprep.subr.mxu0 0.0
    %1763 = vmatpush1.msra.mxu0 0.0
    %1764 = vmatprep.subr.mxu0 0.0
    %1765 = vmatpush1.msra.mxu0 0.0
    %1766 = vmatprep.subr.mxu0 0.0
    %1767 = vmatpush1.msra.mxu0 0.0
    %1768 = vmatprep.subr.mxu0 0.0
    %1769 = vmatpush1.msra.mxu0 0.0
    %1770 = vmatprep.subr.mxu0 0.0
    %1771 = vmatpush1.msra.mxu0 0.0
    %1772 = vmatprep.subr.mxu0 0.0
    %1773 = vmatpush1.msra.mxu0 0.0
    %1774 = vmatprep.mubr.f32.mxu0 0.0
    %1775 = vmatmul.mubr.f32.gmra.mrb[0].mxu0 %v1705
    %v1776 = vpop.f32.mrb[0].mxu0
    %v1777 = vadd.f32 %v1701, %v1776
    %v1778 = vpop.f32.mrb[0].mxu0
    %1779 = vmatprep.mubr.f32.mxu0 0.0
    %1780 = vmatmul.mubr.f32.gmra.mrb[0].mxu0 %v1708
    %v1781 = vpop.f32.mrb[0].mxu0
    %v1782 = vadd.f32 %v1701, %v1781
    %v1783 = vpop.f32.mrb[0].mxu0
    %1784 = vdwg.mxu0
    %v1785 = vld [vmem:[#allocation19] sm:$0xff]
    %v1786 = vld [vmem:[#allocation19 + $0x8] sm:$0xff]
    %v1787 = vld [vmem:[#allocation19 + $0x10] sm:$0xff]
    %v1788 = vld [vmem:[#allocation19 + $0x18] sm:$0xff]
    %v1789 = vld [vmem:[%s16] sm:$0x1]
    %v1791 = vlaneseq
    %v1792 = vshrl.u32 %v1791, 7
    %v1793 = vsub.s32 0, %v1792
    %v1794 = vrot.slane %v1789, %v1793
    %1796 = vmatprep.subr.mxu0 0.0
    %1797 = vmatpush1.msra.mxu0 %v1785
    %1798 = vmatprep.subr.mxu0 0.0
    %1799 = vmatpush1.msra.mxu0 %v1786
    %1800 = vmatprep.subr.mxu0 0.0
    %1801 = vmatpush1.msra.mxu0 %v1787
    %1802 = vmatprep.subr.mxu0 0.0
    %1803 = vmatpush1.msra.mxu0 %v1788
    %1804 = vmatprep.subr.mxu0 0.0
    %1805 = vmatpush1.msra.mxu0 0.0
    %1806 = vmatprep.subr.mxu0 0.0
    %1807 = vmatpush1.msra.mxu0 0.0
    %1808 = vmatprep.subr.mxu0 0.0
    %1809 = vmatpush1.msra.mxu0 0.0
    %1810 = vmatprep.subr.mxu0 0.0
    %1811 = vmatpush1.msra.mxu0 0.0
    %1812 = vmatprep.subr.mxu0 0.0
    %1813 = vmatpush1.msra.mxu0 0.0
    %1814 = vmatprep.subr.mxu0 0.0
    %1815 = vmatpush1.msra.mxu0 0.0
    %1816 = vmatprep.subr.mxu0 0.0
    %1817 = vmatpush1.msra.mxu0 0.0
    %1818 = vmatprep.subr.mxu0 0.0
    %1819 = vmatpush1.msra.mxu0 0.0
    %1820 = vmatprep.subr.mxu0 0.0
    %1821 = vmatpush1.msra.mxu0 0.0
    %1822 = vmatprep.subr.mxu0 0.0
    %1823 = vmatpush1.msra.mxu0 0.0
    %1824 = vmatprep.subr.mxu0 0.0
    %1825 = vmatpush1.msra.mxu0 0.0
    %1826 = vmatprep.subr.mxu0 0.0
    %1827 = vmatpush1.msra.mxu0 0.0
    %1828 = vmatprep.subr.mxu0 0.0
    %1829 = vmatpush1.msra.mxu0 0.0
    %1830 = vmatprep.subr.mxu0 0.0
    %1831 = vmatpush1.msra.mxu0 0.0
    %1832 = vmatprep.subr.mxu0 0.0
    %1833 = vmatpush1.msra.mxu0 0.0
    %1834 = vmatprep.subr.mxu0 0.0
    %1835 = vmatpush1.msra.mxu0 0.0
    %1836 = vmatprep.subr.mxu0 0.0
    %1837 = vmatpush1.msra.mxu0 0.0
    %1838 = vmatprep.subr.mxu0 0.0
    %1839 = vmatpush1.msra.mxu0 0.0
    %1840 = vmatprep.subr.mxu0 0.0
    %1841 = vmatpush1.msra.mxu0 0.0
    %1842 = vmatprep.subr.mxu0 0.0
    %1843 = vmatpush1.msra.mxu0 0.0
    %1844 = vmatprep.subr.mxu0 0.0
    %1845 = vmatpush1.msra.mxu0 0.0
    %1846 = vmatprep.subr.mxu0 0.0
    %1847 = vmatpush1.msra.mxu0 0.0
    %1848 = vmatprep.subr.mxu0 0.0
    %1849 = vmatpush1.msra.mxu0 0.0
    %1850 = vmatprep.subr.mxu0 0.0
    %1851 = vmatpush1.msra.mxu0 0.0
    %1852 = vmatprep.subr.mxu0 0.0
    %1853 = vmatpush1.msra.mxu0 0.0
    %1854 = vmatprep.subr.mxu0 0.0
    %1855 = vmatpush1.msra.mxu0 0.0
    %1856 = vmatprep.subr.mxu0 0.0
    %1857 = vmatpush1.msra.mxu0 0.0
    %1858 = vmatprep.subr.mxu0 0.0
    %1859 = vmatpush1.msra.mxu0 0.0
    %1860 = vmatprep.mubr.f32.mxu0 0.0
    %1861 = vmatmul.mubr.f32.gmra.mrb[0].mxu0 %v318
    %v1862 = vpop.f32.mrb[0].mxu0
    %v1863 = vadd.f32 %v1794, %v1862
    %v1864 = vpop.f32.mrb[0].mxu0
    %1865 = vdwg.mxu0
    %v1866 = vadd.f32 %v1777, %v1863
    %v1867 = vxor.u32 %v1866, 2147483648
    %v1868 = vmul.f32 %v1867, 1.442695
    %v1869 = vpow.pop %v1868
    %v1870 = vadd.f32 %v1869, 1.0
    %v1871 = vrcp.pop %v1870
    %v1872 = vmul.f32 1.0, %v1871
    %1874 = vrot.lane.b32.xlu0 %v1863, 64
    %v1875 = vpop.permute.xlu0 %1874
    %v1877 = vmul.f32 %v1872, %v1875
    %1879 = vrot.lane.b32.xlu0 %v1877, 64
    %v1880 = vpop.permute.xlu0 %1879
    %v1882 = vadd.f32 %v1777, %v1880
    %v1883 = vtanh.pop %v1882
    %v1884 = vsub.f32 1.0, %v1872
    %1886 = vrot.lane.b32.xlu0 %v1883, 96
    %v1887 = vpop.permute.xlu0 %1886
    %v1889 = vmul.f32 %v1884, %v1887
    %v1890 = vmul.f32 %v1872, 0.0
    %v1891 = vadd.f32 %v1889, %v1890
    %1893 = vrot.lane.b32.xlu0 %v1891, 96
    %v1894 = vpop.permute.xlu0 %1893
    %v1895 = vsel %vm208, %v1894, 0
    %1897 = vmatprep.subr.mxu0 0.0
    %1898 = vmatpush1.msra.mxu0 %v1785
    %1899 = vmatprep.subr.mxu0 0.0
    %1900 = vmatpush1.msra.mxu0 %v1786
    %1901 = vmatprep.subr.mxu0 0.0
    %1902 = vmatpush1.msra.mxu0 %v1787
    %1903 = vmatprep.subr.mxu0 0.0
    %1904 = vmatpush1.msra.mxu0 %v1788
    %1905 = vmatprep.subr.mxu0 0.0
    %1906 = vmatpush1.msra.mxu0 0.0
    %1907 = vmatprep.subr.mxu0 0.0
    %1908 = vmatpush1.msra.mxu0 0.0
    %1909 = vmatprep.subr.mxu0 0.0
    %1910 = vmatpush1.msra.mxu0 0.0
    %1911 = vmatprep.subr.mxu0 0.0
    %1912 = vmatpush1.msra.mxu0 0.0
    %1913 = vmatprep.subr.mxu0 0.0
    %1914 = vmatpush1.msra.mxu0 0.0
    %1915 = vmatprep.subr.mxu0 0.0
    %1916 = vmatpush1.msra.mxu0 0.0
    %1917 = vmatprep.subr.mxu0 0.0
    %1918 = vmatpush1.msra.mxu0 0.0
    %1919 = vmatprep.subr.mxu0 0.0
    %1920 = vmatpush1.msra.mxu0 0.0
    %1921 = vmatprep.subr.mxu0 0.0
    %1922 = vmatpush1.msra.mxu0 0.0
    %1923 = vmatprep.subr.mxu0 0.0
    %1924 = vmatpush1.msra.mxu0 0.0
    %1925 = vmatprep.subr.mxu0 0.0
    %1926 = vmatpush1.msra.mxu0 0.0
    %1927 = vmatprep.subr.mxu0 0.0
    %1928 = vmatpush1.msra.mxu0 0.0
    %1929 = vmatprep.subr.mxu0 0.0
    %1930 = vmatpush1.msra.mxu0 0.0
    %1931 = vmatprep.subr.mxu0 0.0
    %1932 = vmatpush1.msra.mxu0 0.0
    %1933 = vmatprep.subr.mxu0 0.0
    %1934 = vmatpush1.msra.mxu0 0.0
    %1935 = vmatprep.subr.mxu0 0.0
    %1936 = vmatpush1.msra.mxu0 0.0
    %1937 = vmatprep.subr.mxu0 0.0
    %1938 = vmatpush1.msra.mxu0 0.0
    %1939 = vmatprep.subr.mxu0 0.0
    %1940 = vmatpush1.msra.mxu0 0.0
    %1941 = vmatprep.subr.mxu0 0.0
    %1942 = vmatpush1.msra.mxu0 0.0
    %1943 = vmatprep.subr.mxu0 0.0
    %1944 = vmatpush1.msra.mxu0 0.0
    %1945 = vmatprep.subr.mxu0 0.0
    %1946 = vmatpush1.msra.mxu0 0.0
    %1947 = vmatprep.subr.mxu0 0.0
    %1948 = vmatpush1.msra.mxu0 0.0
    %1949 = vmatprep.subr.mxu0 0.0
    %1950 = vmatpush1.msra.mxu0 0.0
    %1951 = vmatprep.subr.mxu0 0.0
    %1952 = vmatpush1.msra.mxu0 0.0
    %1953 = vmatprep.subr.mxu0 0.0
    %1954 = vmatpush1.msra.mxu0 0.0
    %1955 = vmatprep.subr.mxu0 0.0
    %1956 = vmatpush1.msra.mxu0 0.0
    %1957 = vmatprep.subr.mxu0 0.0
    %1958 = vmatpush1.msra.mxu0 0.0
    %1959 = vmatprep.subr.mxu0 0.0
    %1960 = vmatpush1.msra.mxu0 0.0
    %1961 = vmatprep.mubr.f32.mxu0 0.0
    %1962 = vmatmul.mubr.f32.gmra.mrb[0].mxu0 %v1895
    %v1963 = vpop.f32.mrb[0].mxu0
    %v1964 = vadd.f32 %v1794, %v1963
    %v1965 = vpop.f32.mrb[0].mxu0
    %1966 = vdwg.mxu0
    %v1968 = vrot.slane %v1964, 6
    %v1970 = vadd.f32 %v1777, %v1968
    %v1971 = vxor.u32 %v1970, 2147483648
    %v1972 = vmul.f32 %v1971, 1.442695
    %v1973 = vpow.pop %v1972
    %v1974 = vadd.f32 %v1973, 1.0
    %v1975 = vrcp.pop %v1974
    %v1976 = vmul.f32 1.0, %v1975
    %1977 = vrot.lane.b32.xlu0 %v1968, 64
    %v1978 = vpop.permute.xlu0 %1977
    %v1980 = vmul.f32 %v1976, %v1978
    %1982 = vrot.lane.b32.xlu0 %v1980, 64
    %v1983 = vpop.permute.xlu0 %1982
    %v1985 = vadd.f32 %v1777, %v1983
    %v1986 = vtanh.pop %v1985
    %v1987 = vsub.f32 1.0, %v1976
    %1989 = vrot.lane.b32.xlu0 %v1986, 96
    %v1990 = vpop.permute.xlu0 %1989
    %v1992 = vmul.f32 %v1987, %v1990
    %v1993 = vrot.slane %v1891, 6
    %v1995 = vmul.f32 %v1976, %v1993
    %v1996 = vadd.f32 %v1992, %v1995
    %v1998 = vrot.slane %v1996, 2
    %1999 = vrot.lane.b32.xlu0 %v1998, 96
    %v2000 = vpop.permute.xlu0 %1999
    %v2001 = vsel %vm208, %v2000, 0
    %2003 = vmatprep.subr.mxu0 0.0
    %2004 = vmatpush1.msra.mxu0 %v1785
    %2005 = vmatprep.subr.mxu0 0.0
    %2006 = vmatpush1.msra.mxu0 %v1786
    %2007 = vmatprep.subr.mxu0 0.0
    %2008 = vmatpush1.msra.mxu0 %v1787
    %2009 = vmatprep.subr.mxu0 0.0
    %2010 = vmatpush1.msra.mxu0 %v1788
    %2011 = vmatprep.subr.mxu0 0.0
    %2012 = vmatpush1.msra.mxu0 0.0
    %2013 = vmatprep.subr.mxu0 0.0
    %2014 = vmatpush1.msra.mxu0 0.0
    %2015 = vmatprep.subr.mxu0 0.0
    %2016 = vmatpush1.msra.mxu0 0.0
    %2017 = vmatprep.subr.mxu0 0.0
    %2018 = vmatpush1.msra.mxu0 0.0
    %2019 = vmatprep.subr.mxu0 0.0
    %2020 = vmatpush1.msra.mxu0 0.0
    %2021 = vmatprep.subr.mxu0 0.0
    %2022 = vmatpush1.msra.mxu0 0.0
    %2023 = vmatprep.subr.mxu0 0.0
    %2024 = vmatpush1.msra.mxu0 0.0
    %2025 = vmatprep.subr.mxu0 0.0
    %2026 = vmatpush1.msra.mxu0 0.0
    %2027 = vmatprep.subr.mxu0 0.0
    %2028 = vmatpush1.msra.mxu0 0.0
    %2029 = vmatprep.subr.mxu0 0.0
    %2030 = vmatpush1.msra.mxu0 0.0
    %2031 = vmatprep.subr.mxu0 0.0
    %2032 = vmatpush1.msra.mxu0 0.0
    %2033 = vmatprep.subr.mxu0 0.0
    %2034 = vmatpush1.msra.mxu0 0.0
    %2035 = vmatprep.subr.mxu0 0.0
    %2036 = vmatpush1.msra.mxu0 0.0
    %2037 = vmatprep.subr.mxu0 0.0
    %2038 = vmatpush1.msra.mxu0 0.0
    %2039 = vmatprep.subr.mxu0 0.0
    %2040 = vmatpush1.msra.mxu0 0.0
    %2041 = vmatprep.subr.mxu0 0.0
    %2042 = vmatpush1.msra.mxu0 0.0
    %2043 = vmatprep.subr.mxu0 0.0
    %2044 = vmatpush1.msra.mxu0 0.0
    %2045 = vmatprep.subr.mxu0 0.0
    %2046 = vmatpush1.msra.mxu0 0.0
    %2047 = vmatprep.subr.mxu0 0.0
    %2048 = vmatpush1.msra.mxu0 0.0
    %2049 = vmatprep.subr.mxu0 0.0
    %2050 = vmatpush1.msra.mxu0 0.0
    %2051 = vmatprep.subr.mxu0 0.0
    %2052 = vmatpush1.msra.mxu0 0.0
    %2053 = vmatprep.subr.mxu0 0.0
    %2054 = vmatpush1.msra.mxu0 0.0
    %2055 = vmatprep.subr.mxu0 0.0
    %2056 = vmatpush1.msra.mxu0 0.0
    %2057 = vmatprep.subr.mxu0 0.0
    %2058 = vmatpush1.msra.mxu0 0.0
    %2059 = vmatprep.subr.mxu0 0.0
    %2060 = vmatpush1.msra.mxu0 0.0
    %2061 = vmatprep.subr.mxu0 0.0
    %2062 = vmatpush1.msra.mxu0 0.0
    %2063 = vmatprep.subr.mxu0 0.0
    %2064 = vmatpush1.msra.mxu0 0.0
    %2065 = vmatprep.subr.mxu0 0.0
    %2066 = vmatpush1.msra.mxu0 0.0
    %2067 = vmatprep.mubr.f32.mxu0 0.0
    %2068 = vmatmul.mubr.f32.gmra.mrb[0].mxu0 %v2001
    %v2069 = vpop.f32.mrb[0].mxu0
    %v2070 = vadd.f32 %v1794, %v2069
    %v2071 = vpop.f32.mrb[0].mxu0
    %2072 = vdwg.mxu0
    %v2074 = vrot.slane %v2070, 4
    %v2076 = vadd.f32 %v1777, %v2074
    %v2077 = vxor.u32 %v2076, 2147483648
    %v2078 = vmul.f32 %v2077, 1.442695
    %v2079 = vpow.pop %v2078
    %v2080 = vadd.f32 %v2079, 1.0
    %v2081 = vrcp.pop %v2080
    %v2082 = vmul.f32 1.0, %v2081
    %2083 = vrot.lane.b32.xlu0 %v2074, 64
    %v2084 = vpop.permute.xlu0 %2083
    %v2086 = vmul.f32 %v2082, %v2084
    %2088 = vrot.lane.b32.xlu0 %v2086, 64
    %v2089 = vpop.permute.xlu0 %2088
    %v2091 = vadd.f32 %v1777, %v2089
    %v2092 = vtanh.pop %v2091
    %v2093 = vsub.f32 1.0, %v2082
    %2095 = vrot.lane.b32.xlu0 %v2092, 96
    %v2096 = vpop.permute.xlu0 %2095
    %v2098 = vmul.f32 %v2093, %v2096
    %v2099 = vrot.slane %v1996, 6
    %v2101 = vmul.f32 %v2082, %v2099
    %v2102 = vadd.f32 %v2098, %v2101
    %v2104 = vrot.slane %v2102, 4
    %2105 = vrot.lane.b32.xlu0 %v2104, 96
    %v2106 = vpop.permute.xlu0 %2105
    %v2107 = vsel %vm208, %v2106, 0
    %2109 = vmatprep.subr.mxu0 0.0
    %2110 = vmatpush1.msra.mxu0 %v1785
    %2111 = vmatprep.subr.mxu0 0.0
    %2112 = vmatpush1.msra.mxu0 %v1786
    %2113 = vmatprep.subr.mxu0 0.0
    %2114 = vmatpush1.msra.mxu0 %v1787
    %2115 = vmatprep.subr.mxu0 0.0
    %2116 = vmatpush1.msra.mxu0 %v1788
    %2117 = vmatprep.subr.mxu0 0.0
    %2118 = vmatpush1.msra.mxu0 0.0
    %2119 = vmatprep.subr.mxu0 0.0
    %2120 = vmatpush1.msra.mxu0 0.0
    %2121 = vmatprep.subr.mxu0 0.0
    %2122 = vmatpush1.msra.mxu0 0.0
    %2123 = vmatprep.subr.mxu0 0.0
    %2124 = vmatpush1.msra.mxu0 0.0
    %2125 = vmatprep.subr.mxu0 0.0
    %2126 = vmatpush1.msra.mxu0 0.0
    %2127 = vmatprep.subr.mxu0 0.0
    %2128 = vmatpush1.msra.mxu0 0.0
    %2129 = vmatprep.subr.mxu0 0.0
    %2130 = vmatpush1.msra.mxu0 0.0
    %2131 = vmatprep.subr.mxu0 0.0
    %2132 = vmatpush1.msra.mxu0 0.0
    %2133 = vmatprep.subr.mxu0 0.0
    %2134 = vmatpush1.msra.mxu0 0.0
    %2135 = vmatprep.subr.mxu0 0.0
    %2136 = vmatpush1.msra.mxu0 0.0
    %2137 = vmatprep.subr.mxu0 0.0
    %2138 = vmatpush1.msra.mxu0 0.0
    %2139 = vmatprep.subr.mxu0 0.0
    %2140 = vmatpush1.msra.mxu0 0.0
    %2141 = vmatprep.subr.mxu0 0.0
    %2142 = vmatpush1.msra.mxu0 0.0
    %2143 = vmatprep.subr.mxu0 0.0
    %2144 = vmatpush1.msra.mxu0 0.0
    %2145 = vmatprep.subr.mxu0 0.0
    %2146 = vmatpush1.msra.mxu0 0.0
    %2147 = vmatprep.subr.mxu0 0.0
    %2148 = vmatpush1.msra.mxu0 0.0
    %2149 = vmatprep.subr.mxu0 0.0
    %2150 = vmatpush1.msra.mxu0 0.0
    %2151 = vmatprep.subr.mxu0 0.0
    %2152 = vmatpush1.msra.mxu0 0.0
    %2153 = vmatprep.subr.mxu0 0.0
    %2154 = vmatpush1.msra.mxu0 0.0
    %2155 = vmatprep.subr.mxu0 0.0
    %2156 = vmatpush1.msra.mxu0 0.0
    %2157 = vmatprep.subr.mxu0 0.0
    %2158 = vmatpush1.msra.mxu0 0.0
    %2159 = vmatprep.subr.mxu0 0.0
    %2160 = vmatpush1.msra.mxu0 0.0
    %2161 = vmatprep.subr.mxu0 0.0
    %2162 = vmatpush1.msra.mxu0 0.0
    %2163 = vmatprep.subr.mxu0 0.0
    %2164 = vmatpush1.msra.mxu0 0.0
    %2165 = vmatprep.subr.mxu0 0.0
    %2166 = vmatpush1.msra.mxu0 0.0
    %2167 = vmatprep.subr.mxu0 0.0
    %2168 = vmatpush1.msra.mxu0 0.0
    %2169 = vmatprep.subr.mxu0 0.0
    %2170 = vmatpush1.msra.mxu0 0.0
    %2171 = vmatprep.subr.mxu0 0.0
    %2172 = vmatpush1.msra.mxu0 0.0
    %2173 = vmatprep.mubr.f32.mxu0 0.0
    %2174 = vmatmul.mubr.f32.gmra.mrb[0].mxu0 %v2107
    %v2175 = vpop.f32.mrb[0].mxu0
    %v2176 = vadd.f32 %v1794, %v2175
    %v2177 = vpop.f32.mrb[0].mxu0
    %2178 = vdwg.mxu0
    %v2180 = vrot.slane %v2176, 2
    %v2182 = vadd.f32 %v1777, %v2180
    %v2183 = vxor.u32 %v2182, 2147483648
    %v2184 = vmul.f32 %v2183, 1.442695
    %v2185 = vpow.pop %v2184
    %v2186 = vadd.f32 %v2185, 1.0
    %v2187 = vrcp.pop %v2186
    %v2188 = vmul.f32 1.0, %v2187
    %2189 = vrot.lane.b32.xlu0 %v2180, 64
    %v2190 = vpop.permute.xlu0 %2189
    %v2192 = vmul.f32 %v2188, %v2190
    %2194 = vrot.lane.b32.xlu0 %v2192, 64
    %v2195 = vpop.permute.xlu0 %2194
    %v2197 = vadd.f32 %v1777, %v2195
    %v2198 = vtanh.pop %v2197
    %v2199 = vsub.f32 1.0, %v2188
    %2201 = vrot.lane.b32.xlu0 %v2198, 96
    %v2202 = vpop.permute.xlu0 %2201
    %v2204 = vmul.f32 %v2199, %v2202
    %v2205 = vrot.slane %v2102, 6
    %v2207 = vmul.f32 %v2188, %v2205
    %v2208 = vadd.f32 %v2204, %v2207
    %v2210 = vrot.slane %v2208, 6
    %2211 = vrot.lane.b32.xlu0 %v2210, 96
    %v2212 = vpop.permute.xlu0 %2211
    %v2213 = vsel %vm208, %v2212, 0
    %2215 = vmatprep.subr.mxu0 0.0
    %2216 = vmatpush1.msra.mxu0 %v1785
    %2217 = vmatprep.subr.mxu0 0.0
    %2218 = vmatpush1.msra.mxu0 %v1786
    %2219 = vmatprep.subr.mxu0 0.0
    %2220 = vmatpush1.msra.mxu0 %v1787
    %2221 = vmatprep.subr.mxu0 0.0
    %2222 = vmatpush1.msra.mxu0 %v1788
    %2223 = vmatprep.subr.mxu0 0.0
    %2224 = vmatpush1.msra.mxu0 0.0
    %2225 = vmatprep.subr.mxu0 0.0
    %2226 = vmatpush1.msra.mxu0 0.0
    %2227 = vmatprep.subr.mxu0 0.0
    %2228 = vmatpush1.msra.mxu0 0.0
    %2229 = vmatprep.subr.mxu0 0.0
    %2230 = vmatpush1.msra.mxu0 0.0
    %2231 = vmatprep.subr.mxu0 0.0
    %2232 = vmatpush1.msra.mxu0 0.0
    %2233 = vmatprep.subr.mxu0 0.0
    %2234 = vmatpush1.msra.mxu0 0.0
    %2235 = vmatprep.subr.mxu0 0.0
    %2236 = vmatpush1.msra.mxu0 0.0
    %2237 = vmatprep.subr.mxu0 0.0
    %2238 = vmatpush1.msra.mxu0 0.0
    %2239 = vmatprep.subr.mxu0 0.0
    %2240 = vmatpush1.msra.mxu0 0.0
    %2241 = vmatprep.subr.mxu0 0.0
    %2242 = vmatpush1.msra.mxu0 0.0
    %2243 = vmatprep.subr.mxu0 0.0
    %2244 = vmatpush1.msra.mxu0 0.0
    %2245 = vmatprep.subr.mxu0 0.0
    %2246 = vmatpush1.msra.mxu0 0.0
    %2247 = vmatprep.subr.mxu0 0.0
    %2248 = vmatpush1.msra.mxu0 0.0
    %2249 = vmatprep.subr.mxu0 0.0
    %2250 = vmatpush1.msra.mxu0 0.0
    %2251 = vmatprep.subr.mxu0 0.0
    %2252 = vmatpush1.msra.mxu0 0.0
    %2253 = vmatprep.subr.mxu0 0.0
    %2254 = vmatpush1.msra.mxu0 0.0
    %2255 = vmatprep.subr.mxu0 0.0
    %2256 = vmatpush1.msra.mxu0 0.0
    %2257 = vmatprep.subr.mxu0 0.0
    %2258 = vmatpush1.msra.mxu0 0.0
    %2259 = vmatprep.subr.mxu0 0.0
    %2260 = vmatpush1.msra.mxu0 0.0
    %2261 = vmatprep.subr.mxu0 0.0
    %2262 = vmatpush1.msra.mxu0 0.0
    %2263 = vmatprep.subr.mxu0 0.0
    %2264 = vmatpush1.msra.mxu0 0.0
    %2265 = vmatprep.subr.mxu0 0.0
    %2266 = vmatpush1.msra.mxu0 0.0
    %2267 = vmatprep.subr.mxu0 0.0
    %2268 = vmatpush1.msra.mxu0 0.0
    %2269 = vmatprep.subr.mxu0 0.0
    %2270 = vmatpush1.msra.mxu0 0.0
    %2271 = vmatprep.subr.mxu0 0.0
    %2272 = vmatpush1.msra.mxu0 0.0
    %2273 = vmatprep.subr.mxu0 0.0
    %2274 = vmatpush1.msra.mxu0 0.0
    %2275 = vmatprep.subr.mxu0 0.0
    %2276 = vmatpush1.msra.mxu0 0.0
    %2277 = vmatprep.subr.mxu0 0.0
    %2278 = vmatpush1.msra.mxu0 0.0
    %2279 = vmatprep.mubr.f32.mxu0 0.0
    %2280 = vmatmul.mubr.f32.gmra.mrb[0].mxu0 %v2213
    %v2281 = vpop.f32.mrb[0].mxu0
    %v2282 = vadd.f32 %v1794, %v2281
    %v2283 = vpop.f32.mrb[0].mxu0
    %2284 = vdwg.mxu0
    %v2285 = vadd.f32 %v1782, %v2282
    %v2286 = vxor.u32 %v2285, 2147483648
    %v2287 = vmul.f32 %v2286, 1.442695
    %v2288 = vpow.pop %v2287
    %v2289 = vadd.f32 %v2288, 1.0
    %v2290 = vrcp.pop %v2289
    %v2291 = vmul.f32 1.0, %v2290
    %2293 = vrot.lane.b32.xlu0 %v2282, 64
    %v2294 = vpop.permute.xlu0 %2293
    %v2296 = vmul.f32 %v2291, %v2294
    %2298 = vrot.lane.b32.xlu0 %v2296, 64
    %v2299 = vpop.permute.xlu0 %2298
    %v2301 = vadd.f32 %v1782, %v2299
    %v2302 = vtanh.pop %v2301
    %v2303 = vsub.f32 1.0, %v2291
    %2305 = vrot.lane.b32.xlu0 %v2302, 96
    %v2306 = vpop.permute.xlu0 %2305
    %v2308 = vmul.f32 %v2303, %v2306
    %v2310 = vmul.f32 %v2291, %v2210
    %v2311 = vadd.f32 %v2308, %v2310
    %2313 = vrot.lane.b32.xlu0 %v2311, 96
    %v2314 = vpop.permute.xlu0 %2313
    %v2315 = vsel %vm208, %v2314, 0
    %2317 = vmatprep.subr.mxu0 0.0
    %2318 = vmatpush1.msra.mxu0 %v1785
    %2319 = vmatprep.subr.mxu0 0.0
    %2320 = vmatpush1.msra.mxu0 %v1786
    %2321 = vmatprep.subr.mxu0 0.0
    %2322 = vmatpush1.msra.mxu0 %v1787
    %2323 = vmatprep.subr.mxu0 0.0
    %2324 = vmatpush1.msra.mxu0 %v1788
    %2325 = vmatprep.subr.mxu0 0.0
    %2326 = vmatpush1.msra.mxu0 0.0
    %2327 = vmatprep.subr.mxu0 0.0
    %2328 = vmatpush1.msra.mxu0 0.0
    %2329 = vmatprep.subr.mxu0 0.0
    %2330 = vmatpush1.msra.mxu0 0.0
    %2331 = vmatprep.subr.mxu0 0.0
    %2332 = vmatpush1.msra.mxu0 0.0
    %2333 = vmatprep.subr.mxu0 0.0
    %2334 = vmatpush1.msra.mxu0 0.0
    %2335 = vmatprep.subr.mxu0 0.0
    %2336 = vmatpush1.msra.mxu0 0.0
    %2337 = vmatprep.subr.mxu0 0.0
    %2338 = vmatpush1.msra.mxu0 0.0
    %2339 = vmatprep.subr.mxu0 0.0
    %2340 = vmatpush1.msra.mxu0 0.0
    %2341 = vmatprep.subr.mxu0 0.0
    %2342 = vmatpush1.msra.mxu0 0.0
    %2343 = vmatprep.subr.mxu0 0.0
    %2344 = vmatpush1.msra.mxu0 0.0
    %2345 = vmatprep.subr.mxu0 0.0
    %2346 = vmatpush1.msra.mxu0 0.0
    %2347 = vmatprep.subr.mxu0 0.0
    %2348 = vmatpush1.msra.mxu0 0.0
    %2349 = vmatprep.subr.mxu0 0.0
    %2350 = vmatpush1.msra.mxu0 0.0
    %2351 = vmatprep.subr.mxu0 0.0
    %2352 = vmatpush1.msra.mxu0 0.0
    %2353 = vmatprep.subr.mxu0 0.0
    %2354 = vmatpush1.msra.mxu0 0.0
    %2355 = vmatprep.subr.mxu0 0.0
    %2356 = vmatpush1.msra.mxu0 0.0
    %2357 = vmatprep.subr.mxu0 0.0
    %2358 = vmatpush1.msra.mxu0 0.0
    %2359 = vmatprep.subr.mxu0 0.0
    %2360 = vmatpush1.msra.mxu0 0.0
    %2361 = vmatprep.subr.mxu0 0.0
    %2362 = vmatpush1.msra.mxu0 0.0
    %2363 = vmatprep.subr.mxu0 0.0
    %2364 = vmatpush1.msra.mxu0 0.0
    %2365 = vmatprep.subr.mxu0 0.0
    %2366 = vmatpush1.msra.mxu0 0.0
    %2367 = vmatprep.subr.mxu0 0.0
    %2368 = vmatpush1.msra.mxu0 0.0
    %2369 = vmatprep.subr.mxu0 0.0
    %2370 = vmatpush1.msra.mxu0 0.0
    %2371 = vmatprep.subr.mxu0 0.0
    %2372 = vmatpush1.msra.mxu0 0.0
    %2373 = vmatprep.subr.mxu0 0.0
    %2374 = vmatpush1.msra.mxu0 0.0
    %2375 = vmatprep.subr.mxu0 0.0
    %2376 = vmatpush1.msra.mxu0 0.0
    %2377 = vmatprep.subr.mxu0 0.0
    %2378 = vmatpush1.msra.mxu0 0.0
    %2379 = vmatprep.subr.mxu0 0.0
    %2380 = vmatpush1.msra.mxu0 0.0
    %2381 = vmatprep.mubr.f32.mxu0 0.0
    %2382 = vmatmul.mubr.f32.gmra.mrb[0].mxu0 %v2315
    %v2383 = vpop.f32.mrb[0].mxu0
    %v2384 = vadd.f32 %v1794, %v2383
    %v2385 = vpop.f32.mrb[0].mxu0
    %2386 = vdwg.mxu0
    %v2388 = vrot.slane %v2384, 6
    %v2390 = vadd.f32 %v1782, %v2388
    %v2391 = vxor.u32 %v2390, 2147483648
    %v2392 = vmul.f32 %v2391, 1.442695
    %v2393 = vpow.pop %v2392
    %v2394 = vadd.f32 %v2393, 1.0
    %v2395 = vrcp.pop %v2394
    %v2396 = vmul.f32 1.0, %v2395
    %2397 = vrot.lane.b32.xlu0 %v2388, 64
    %v2398 = vpop.permute.xlu0 %2397
    %v2400 = vmul.f32 %v2396, %v2398
    %2402 = vrot.lane.b32.xlu0 %v2400, 64
    %v2403 = vpop.permute.xlu0 %2402
    %v2405 = vadd.f32 %v1782, %v2403
    %v2406 = vtanh.pop %v2405
    %v2407 = vsub.f32 1.0, %v2396
    %2409 = vrot.lane.b32.xlu0 %v2406, 96
    %v2410 = vpop.permute.xlu0 %2409
    %v2412 = vmul.f32 %v2407, %v2410
    %v2413 = vrot.slane %v2311, 6
    %v2415 = vmul.f32 %v2396, %v2413
    %v2416 = vadd.f32 %v2412, %v2415
    %v2418 = vrot.slane %v2416, 2
    %2419 = vrot.lane.b32.xlu0 %v2418, 96
    %v2420 = vpop.permute.xlu0 %2419
    %v2421 = vsel %vm208, %v2420, 0
    %2423 = vmatprep.subr.mxu0 0.0
    %2424 = vmatpush1.msra.mxu0 %v1785
    %2425 = vmatprep.subr.mxu0 0.0
    %2426 = vmatpush1.msra.mxu0 %v1786
    %2427 = vmatprep.subr.mxu0 0.0
    %2428 = vmatpush1.msra.mxu0 %v1787
    %2429 = vmatprep.subr.mxu0 0.0
    %2430 = vmatpush1.msra.mxu0 %v1788
    %2431 = vmatprep.subr.mxu0 0.0
    %2432 = vmatpush1.msra.mxu0 0.0
    %2433 = vmatprep.subr.mxu0 0.0
    %2434 = vmatpush1.msra.mxu0 0.0
    %2435 = vmatprep.subr.mxu0 0.0
    %2436 = vmatpush1.msra.mxu0 0.0
    %2437 = vmatprep.subr.mxu0 0.0
    %2438 = vmatpush1.msra.mxu0 0.0
    %2439 = vmatprep.subr.mxu0 0.0
    %2440 = vmatpush1.msra.mxu0 0.0
    %2441 = vmatprep.subr.mxu0 0.0
    %2442 = vmatpush1.msra.mxu0 0.0
    %2443 = vmatprep.subr.mxu0 0.0
    %2444 = vmatpush1.msra.mxu0 0.0
    %2445 = vmatprep.subr.mxu0 0.0
    %2446 = vmatpush1.msra.mxu0 0.0
    %2447 = vmatprep.subr.mxu0 0.0
    %2448 = vmatpush1.msra.mxu0 0.0
    %2449 = vmatprep.subr.mxu0 0.0
    %2450 = vmatpush1.msra.mxu0 0.0
    %2451 = vmatprep.subr.mxu0 0.0
    %2452 = vmatpush1.msra.mxu0 0.0
    %2453 = vmatprep.subr.mxu0 0.0
    %2454 = vmatpush1.msra.mxu0 0.0
    %2455 = vmatprep.subr.mxu0 0.0
    %2456 = vmatpush1.msra.mxu0 0.0
    %2457 = vmatprep.subr.mxu0 0.0
    %2458 = vmatpush1.msra.mxu0 0.0
    %2459 = vmatprep.subr.mxu0 0.0
    %2460 = vmatpush1.msra.mxu0 0.0
    %2461 = vmatprep.subr.mxu0 0.0
    %2462 = vmatpush1.msra.mxu0 0.0
    %2463 = vmatprep.subr.mxu0 0.0
    %2464 = vmatpush1.msra.mxu0 0.0
    %2465 = vmatprep.subr.mxu0 0.0
    %2466 = vmatpush1.msra.mxu0 0.0
    %2467 = vmatprep.subr.mxu0 0.0
    %2468 = vmatpush1.msra.mxu0 0.0
    %2469 = vmatprep.subr.mxu0 0.0
    %2470 = vmatpush1.msra.mxu0 0.0
    %2471 = vmatprep.subr.mxu0 0.0
    %2472 = vmatpush1.msra.mxu0 0.0
    %2473 = vmatprep.subr.mxu0 0.0
    %2474 = vmatpush1.msra.mxu0 0.0
    %2475 = vmatprep.subr.mxu0 0.0
    %2476 = vmatpush1.msra.mxu0 0.0
    %2477 = vmatprep.subr.mxu0 0.0
    %2478 = vmatpush1.msra.mxu0 0.0
    %2479 = vmatprep.subr.mxu0 0.0
    %2480 = vmatpush1.msra.mxu0 0.0
    %2481 = vmatprep.subr.mxu0 0.0
    %2482 = vmatpush1.msra.mxu0 0.0
    %2483 = vmatprep.subr.mxu0 0.0
    %2484 = vmatpush1.msra.mxu0 0.0
    %2485 = vmatprep.subr.mxu0 0.0
    %2486 = vmatpush1.msra.mxu0 0.0
    %2487 = vmatprep.mubr.f32.mxu0 0.0
    %2488 = vmatmul.mubr.f32.gmra.mrb[0].mxu0 %v2421
    %v2489 = vpop.f32.mrb[0].mxu0
    %v2490 = vadd.f32 %v1794, %v2489
    %v2491 = vpop.f32.mrb[0].mxu0
    %2492 = vdwg.mxu0
    %v2494 = vrot.slane %v2490, 4
    %v2496 = vadd.f32 %v1782, %v2494
    %v2497 = vxor.u32 %v2496, 2147483648
    %v2498 = vmul.f32 %v2497, 1.442695
    %v2499 = vpow.pop %v2498
    %v2500 = vadd.f32 %v2499, 1.0
    %v2501 = vrcp.pop %v2500
    %v2502 = vmul.f32 1.0, %v2501
    %2503 = vrot.lane.b32.xlu0 %v2494, 64
    %v2504 = vpop.permute.xlu0 %2503
    %v2506 = vmul.f32 %v2502, %v2504
    %2508 = vrot.lane.b32.xlu0 %v2506, 64
    %v2509 = vpop.permute.xlu0 %2508
    %v2511 = vadd.f32 %v1782, %v2509
    %v2512 = vtanh.pop %v2511
    %v2513 = vsub.f32 1.0, %v2502
    %2515 = vrot.lane.b32.xlu0 %v2512, 96
    %v2516 = vpop.permute.xlu0 %2515
    %v2518 = vmul.f32 %v2513, %v2516
    %v2519 = vrot.slane %v2416, 6
    %v2521 = vmul.f32 %v2502, %v2519
    %v2522 = vadd.f32 %v2518, %v2521
    %v2524 = vrot.slane %v2522, 4
    %2525 = vrot.lane.b32.xlu0 %v2524, 96
    %v2526 = vpop.permute.xlu0 %2525
    %v2527 = vsel %vm208, %v2526, 0
    %2529 = vmatprep.subr.mxu0 0.0
    %2530 = vmatpush1.msra.mxu0 %v1785
    %2531 = vmatprep.subr.mxu0 0.0
    %2532 = vmatpush1.msra.mxu0 %v1786
    %2533 = vmatprep.subr.mxu0 0.0
    %2534 = vmatpush1.msra.mxu0 %v1787
    %2535 = vmatprep.subr.mxu0 0.0
    %2536 = vmatpush1.msra.mxu0 %v1788
    %2537 = vmatprep.subr.mxu0 0.0
    %2538 = vmatpush1.msra.mxu0 0.0
    %2539 = vmatprep.subr.mxu0 0.0
    %2540 = vmatpush1.msra.mxu0 0.0
    %2541 = vmatprep.subr.mxu0 0.0
    %2542 = vmatpush1.msra.mxu0 0.0
    %2543 = vmatprep.subr.mxu0 0.0
    %2544 = vmatpush1.msra.mxu0 0.0
    %2545 = vmatprep.subr.mxu0 0.0
    %2546 = vmatpush1.msra.mxu0 0.0
    %2547 = vmatprep.subr.mxu0 0.0
    %2548 = vmatpush1.msra.mxu0 0.0
    %2549 = vmatprep.subr.mxu0 0.0
    %2550 = vmatpush1.msra.mxu0 0.0
    %2551 = vmatprep.subr.mxu0 0.0
    %2552 = vmatpush1.msra.mxu0 0.0
    %2553 = vmatprep.subr.mxu0 0.0
    %2554 = vmatpush1.msra.mxu0 0.0
    %2555 = vmatprep.subr.mxu0 0.0
    %2556 = vmatpush1.msra.mxu0 0.0
    %2557 = vmatprep.subr.mxu0 0.0
    %2558 = vmatpush1.msra.mxu0 0.0
    %2559 = vmatprep.subr.mxu0 0.0
    %2560 = vmatpush1.msra.mxu0 0.0
    %2561 = vmatprep.subr.mxu0 0.0
    %2562 = vmatpush1.msra.mxu0 0.0
    %2563 = vmatprep.subr.mxu0 0.0
    %2564 = vmatpush1.msra.mxu0 0.0
    %2565 = vmatprep.subr.mxu0 0.0
    %2566 = vmatpush1.msra.mxu0 0.0
    %2567 = vmatprep.subr.mxu0 0.0
    %2568 = vmatpush1.msra.mxu0 0.0
    %2569 = vmatprep.subr.mxu0 0.0
    %2570 = vmatpush1.msra.mxu0 0.0
    %2571 = vmatprep.subr.mxu0 0.0
    %2572 = vmatpush1.msra.mxu0 0.0
    %2573 = vmatprep.subr.mxu0 0.0
    %2574 = vmatpush1.msra.mxu0 0.0
    %2575 = vmatprep.subr.mxu0 0.0
    %2576 = vmatpush1.msra.mxu0 0.0
    %2577 = vmatprep.subr.mxu0 0.0
    %2578 = vmatpush1.msra.mxu0 0.0
    %2579 = vmatprep.subr.mxu0 0.0
    %2580 = vmatpush1.msra.mxu0 0.0
    %2581 = vmatprep.subr.mxu0 0.0
    %2582 = vmatpush1.msra.mxu0 0.0
    %2583 = vmatprep.subr.mxu0 0.0
    %2584 = vmatpush1.msra.mxu0 0.0
    %2585 = vmatprep.subr.mxu0 0.0
    %2586 = vmatpush1.msra.mxu0 0.0
    %2587 = vmatprep.subr.mxu0 0.0
    %2588 = vmatpush1.msra.mxu0 0.0
    %2589 = vmatprep.subr.mxu0 0.0
    %2590 = vmatpush1.msra.mxu0 0.0
    %2591 = vmatprep.subr.mxu0 0.0
    %2592 = vmatpush1.msra.mxu0 0.0
    %2593 = vmatprep.mubr.f32.mxu0 0.0
    %2594 = vmatmul.mubr.f32.gmra.mrb[0].mxu0 %v2527
    %v2595 = vpop.f32.mrb[0].mxu0
    %v2596 = vadd.f32 %v1794, %v2595
    %v2597 = vpop.f32.mrb[0].mxu0
    %2598 = vdwg.mxu0
    %v2600 = vrot.slane %v2596, 2
    %v2602 = vadd.f32 %v1782, %v2600
    %v2603 = vxor.u32 %v2602, 2147483648
    %v2604 = vmul.f32 %v2603, 1.442695
    %v2605 = vpow.pop %v2604
    %v2606 = vadd.f32 %v2605, 1.0
    %v2607 = vrcp.pop %v2606
    %v2608 = vmul.f32 1.0, %v2607
    %2609 = vrot.lane.b32.xlu0 %v2600, 64
    %v2610 = vpop.permute.xlu0 %2609
    %v2612 = vmul.f32 %v2608, %v2610
    %2614 = vrot.lane.b32.xlu0 %v2612, 64
    %v2615 = vpop.permute.xlu0 %2614
    %v2617 = vadd.f32 %v1782, %v2615
    %v2618 = vtanh.pop %v2617
    %v2619 = vsub.f32 1.0, %v2608
    %2621 = vrot.lane.b32.xlu0 %v2618, 96
    %v2622 = vpop.permute.xlu0 %2621
    %v2624 = vmul.f32 %v2619, %v2622
    %v2625 = vrot.slane %v2522, 6
    %v2627 = vmul.f32 %v2608, %v2625
    %v2628 = vadd.f32 %v2624, %v2627
    %v2629 = vld [vmem:[%s17] sm:$0xff]
    %v2630 = vld [vmem:[%s17 + $0x8] sm:$0xff]
    %v2631 = vld [vmem:[%s17 + $0x10] sm:$0xff]
    %v2632 = vld [vmem:[%s17 + $0x18] sm:$0xff]
    %v2633 = vld [vmem:[%s18] sm:$0x1]
    %v2635 = vlaneseq
    %v2636 = vshrl.u32 %v2635, 7
    %v2637 = vsub.s32 0, %v2636
    %v2638 = vrot.slane %v2633, %v2637
    %v2641 = vrot.slane %v2628, 6
    %2642 = vrot.lane.b32.xlu0 %v2641, 96
    %v2643 = vpop.permute.xlu0 %2642
    %v2644 = vsel %vm208, %v2643, 0
    %2646 = vmatprep.subr.mxu0 0.0
    %2647 = vmatpush1.msra.mxu0 %v2629
    %2648 = vmatprep.subr.mxu0 0.0
    %2649 = vmatpush1.msra.mxu0 %v2630
    %2650 = vmatprep.subr.mxu0 0.0
    %2651 = vmatpush1.msra.mxu0 %v2631
    %2652 = vmatprep.subr.mxu0 0.0
    %2653 = vmatpush1.msra.mxu0 %v2632
    %2654 = vmatprep.subr.mxu0 0.0
    %2655 = vmatpush1.msra.mxu0 0.0
    %2656 = vmatprep.subr.mxu0 0.0
    %2657 = vmatpush1.msra.mxu0 0.0
    %2658 = vmatprep.subr.mxu0 0.0
    %2659 = vmatpush1.msra.mxu0 0.0
    %2660 = vmatprep.subr.mxu0 0.0
    %2661 = vmatpush1.msra.mxu0 0.0
    %2662 = vmatprep.subr.mxu0 0.0
    %2663 = vmatpush1.msra.mxu0 0.0
    %2664 = vmatprep.subr.mxu0 0.0
    %2665 = vmatpush1.msra.mxu0 0.0
    %2666 = vmatprep.subr.mxu0 0.0
    %2667 = vmatpush1.msra.mxu0 0.0
    %2668 = vmatprep.subr.mxu0 0.0
    %2669 = vmatpush1.msra.mxu0 0.0
    %2670 = vmatprep.subr.mxu0 0.0
    %2671 = vmatpush1.msra.mxu0 0.0
    %2672 = vmatprep.subr.mxu0 0.0
    %2673 = vmatpush1.msra.mxu0 0.0
    %2674 = vmatprep.subr.mxu0 0.0
    %2675 = vmatpush1.msra.mxu0 0.0
    %2676 = vmatprep.subr.mxu0 0.0
    %2677 = vmatpush1.msra.mxu0 0.0
    %2678 = vmatprep.subr.mxu0 0.0
    %2679 = vmatpush1.msra.mxu0 0.0
    %2680 = vmatprep.subr.mxu0 0.0
    %2681 = vmatpush1.msra.mxu0 0.0
    %2682 = vmatprep.subr.mxu0 0.0
    %2683 = vmatpush1.msra.mxu0 0.0
    %2684 = vmatprep.subr.mxu0 0.0
    %2685 = vmatpush1.msra.mxu0 0.0
    %2686 = vmatprep.subr.mxu0 0.0
    %2687 = vmatpush1.msra.mxu0 0.0
    %2688 = vmatprep.subr.mxu0 0.0
    %2689 = vmatpush1.msra.mxu0 0.0
    %2690 = vmatprep.subr.mxu0 0.0
    %2691 = vmatpush1.msra.mxu0 0.0
    %2692 = vmatprep.subr.mxu0 0.0
    %2693 = vmatpush1.msra.mxu0 0.0
    %2694 = vmatprep.subr.mxu0 0.0
    %2695 = vmatpush1.msra.mxu0 0.0
    %2696 = vmatprep.subr.mxu0 0.0
    %2697 = vmatpush1.msra.mxu0 0.0
    %2698 = vmatprep.subr.mxu0 0.0
    %2699 = vmatpush1.msra.mxu0 0.0
    %2700 = vmatprep.subr.mxu0 0.0
    %2701 = vmatpush1.msra.mxu0 0.0
    %2702 = vmatprep.subr.mxu0 0.0
    %2703 = vmatpush1.msra.mxu0 0.0
    %2704 = vmatprep.subr.mxu0 0.0
    %2705 = vmatpush1.msra.mxu0 0.0
    %2706 = vmatprep.subr.mxu0 0.0
    %2707 = vmatpush1.msra.mxu0 0.0
    %2708 = vmatprep.subr.mxu0 0.0
    %2709 = vmatpush1.msra.mxu0 0.0
    %2710 = vmatprep.mubr.f32.mxu0 0.0
    %2711 = vmatmul.mubr.f32.gmra.mrb[0].mxu0 %v2644
    %v2712 = vpop.f32.mrb[0].mxu0
    %v2713 = vadd.f32 %v2638, %v2712
    %v2714 = vpop.f32.mrb[0].mxu0
    %2715 = vdwg.mxu0
    %vm2716 = vcmask 9216
    %v2717 = vsel %vm2716, %v2713, -inf
    %2718 = vmax.xlane.f32.xlu0 %v2717
    %v2719 = vpop.xlane.xlu0 %2718
    %v2720 = vsub.f32 %v2713, %v2719
    %v2721 = vmul.f32 %v2720, 1.442695
    %v2722 = vpow.pop %v2721
    %v2723 = vsel %vm2716, %v2722, 0.0
    %2724 = vadd.xlane.f32.xlu0 %v2723
    %v2725 = vpop.xlane.xlu0 %2724
    %v2726 = vrcp.pop %v2725
    %v2727 = vmul.f32 %v2725, %v2726
    %v2728 = vsub.f32 2.0, %v2727
    %v2729 = vmul.f32 %v2726, %v2728
    %v2730 = vmul.f32 %v2722, %v2729
    %2731 = vst.msk [vmem:[#allocation21] sm:$0x3] %vm2716, %v2730
    // Predicated region
    $region118: #{tpu_custom_call.1} parent=1 // pred_check
      _
    $region119: #{tpu_custom_call.1} parent=1 // pred_check_branch
      %2733 = sbr.rel (0) target = $region121
    $region120: #{tpu_custom_call.1} parent=1 // pred_region
      %s2735 = ssub.s32 32, 32
      %2736 = vsyncadd [#allocation6], %s2735
      %s2738 = sshll.u32 [#allocation21], 4
      %s2739 = int_to_ptr.vmem [resolvable:$true] %s2738
      %2741 = dma.vmem_to_hbm [thread:$0]  %s2739, 32, %s19, [#allocation6]
    $region121: #{tpu_custom_call.1} parent=1 // pred_fallthru
      _
    // Predicated region
    $region122: #{tpu_custom_call.1} parent=1 // pred_check
      _
    $region123: #{tpu_custom_call.1} parent=1 // pred_check_branch
      %2743 = sbr.rel (0) target = $region125
    $region124: #{tpu_custom_call.1} parent=1 // pred_region
      %2744 = dma.done [#allocation6], 32
    $region125: #{tpu_custom_call.1} parent=1 // pred_fallthru
      _
    %2745 = vsyncpa [#allocation5], 1
    %2746 = vsyncpa [#allocation8], 1
    %2747 = vsyncpa [#allocation11], 1
    %2748 = vsyncpa [#allocation14], 1
    %2749 = vsyncpa [#allocation17], 1
    %2750 = vsyncpa [#allocation20], 1
    %2751 = vsyncpa [#allocation6], 1

</llo_original>
